<compile_context>
chip_gen: v5e
topology: v5e:2x2
jax: 0.10.0
libtpu: 0.0.40
codegen_flags: <defaults>
</compile_context>

<pallas_src>
import functools

import jax
import jax.numpy as jnp
from jax import lax
from jax.experimental import pallas as pl
from jax.experimental.pallas import tpu as pltpu


def _vmem_limit_bytes():
    """Half of physical VMEM, capped at 100 MiB (v5e/v6e ~64 MiB, v7x ~32 MiB)."""
    try:
        cap = int(pltpu.get_tpu_info().vmem_capacity_bytes)
    except Exception:
        cap = 64 * 1024 * 1024
    return int(min(max(cap // 2, 32 * 1024 * 1024), 100 * 1024 * 1024))


VMEM_LIMIT = _vmem_limit_bytes()


def _round_up(x, m):
    return (x + m - 1) // m * m


def _tile(dim, target):
    """Pick `target` when it evenly divides `dim`, else fall back to the whole dim."""
    return target if (dim > target and dim % target == 0) else dim


# -----------------------------------------------------------------------------
# Tiled matmul: y = x @ w [+ b] [+ residual] [-> sigmoid]     (patterns P1 + P3)
# -----------------------------------------------------------------------------
def _matmul_kernel(*refs, act, has_bias, has_res):
    n_in = 2 + int(has_bias) + int(has_res)
    x_ref, w_ref = refs[0], refs[1]
    b_ref = refs[2] if has_bias else None
    r_ref = refs[2 + int(has_bias)] if has_res else None
    o_ref, acc_ref = refs[n_in], refs[n_in + 1]

    @pl.when(pl.program_id(2) == 0)
    def _():
        acc_ref[...] = jnp.zeros_like(acc_ref)

    # operands are stored bf16; the astype is a no-op for bf16 inputs and only
    # down-casts the (tiny) f32 model input on the first projection.
    acc_ref[...] += jnp.dot(x_ref[...].astype(jnp.bfloat16),
                            w_ref[...].astype(jnp.bfloat16),
                            preferred_element_type=jnp.float32)

    @pl.when(pl.program_id(2) == pl.num_programs(2) - 1)
    def _():
        y = acc_ref[...]
        if has_bias:
            y = y + b_ref[...].astype(jnp.float32)
        if has_res:
            y = y + r_ref[...].astype(jnp.float32)
        if act == "sigmoid":
            y = jax.nn.sigmoid(y)
        o_ref[...] = y.astype(o_ref.dtype)


def linear(x, w, b=None, act="none", residual=None, out_dtype=jnp.bfloat16,
           tm=512, tn=512, tk=512):
    """x:(M,K) @ w:(K,N) [+ b], optional fused residual add and sigmoid."""
    M, K = x.shape
    N = w.shape[1]
    tm, tn, tk = _tile(M, tm), _tile(N, tn), _tile(K, tk)
    in_specs = [pl.BlockSpec((tm, tk), lambda i, j, k: (i, k)),
                pl.BlockSpec((tk, tn), lambda i, j, k: (k, j))]
    args = [x, w]
    if b is not None:
        in_specs.append(pl.BlockSpec((1, tn), lambda i, j, k: (0, j)))
        args.append(b.reshape(1, N))
    if residual is not None:
        in_specs.append(pl.BlockSpec((tm, tn), lambda i, j, k: (i, j)))
        args.append(residual)
    return pl.pallas_call(
        functools.partial(_matmul_kernel, act=act, has_bias=b is not None,
                          has_res=residual is not None),
        out_shape=jax.ShapeDtypeStruct((M, N), out_dtype),
        grid=(M // tm, N // tn, K // tk),
        in_specs=in_specs,
        out_specs=pl.BlockSpec((tm, tn), lambda i, j, k: (i, j)),
        scratch_shapes=[pltpu.VMEM((tm, tn), jnp.float32)],
        compiler_params=pltpu.CompilerParams(
            dimension_semantics=("parallel", "parallel", "arbitrary"),
            vmem_limit_bytes=VMEM_LIMIT),
    )(*args)


# -----------------------------------------------------------------------------
# LayerNorm fused as a prologue into a matmul (pre-norm -> up projection).
# The normalized row tile is computed once (at j == 0) into a bf16 scratch.
# -----------------------------------------------------------------------------
def _ln_matmul_kernel(x_ref, lnw_ref, lnb_ref, w_ref, o_ref, xn_ref, *, eps):
    @pl.when(pl.program_id(1) == 0)
    def _():
        x = x_ref[...].astype(jnp.float32)
        mu = jnp.mean(x, axis=-1, keepdims=True)
        xc = x - mu
        var = jnp.mean(xc * xc, axis=-1, keepdims=True)
        xn = xc * lax.rsqrt(var + eps) * lnw_ref[...] + lnb_ref[...]
        xn_ref[...] = xn.astype(jnp.bfloat16)

    o_ref[...] = jnp.dot(xn_ref[...], w_ref[...].astype(jnp.bfloat16),
                         preferred_element_type=jnp.float32).astype(o_ref.dtype)


def ln_matmul(x, lnw, lnb, w, eps=1e-5, out_dtype=jnp.bfloat16, tm=512, tn=512):
    M, K = x.shape
    N = w.shape[1]
    tm, tn = _tile(M, tm), _tile(N, tn)
    return pl.pallas_call(
        functools.partial(_ln_matmul_kernel, eps=eps),
        out_shape=jax.ShapeDtypeStruct((M, N), out_dtype),
        grid=(M // tm, N // tn),
        in_specs=[pl.BlockSpec((tm, K), lambda i, j: (i, 0)),
                  pl.BlockSpec((1, K), lambda i, j: (0, 0)),
                  pl.BlockSpec((1, K), lambda i, j: (0, 0)),
                  pl.BlockSpec((K, tn), lambda i, j: (0, j))],
        out_specs=pl.BlockSpec((tm, tn), lambda i, j: (i, j)),
        scratch_shapes=[pltpu.VMEM((tm, K), jnp.bfloat16)],
        compiler_params=pltpu.CompilerParams(
            dimension_semantics=("parallel", "arbitrary"),
            vmem_limit_bytes=VMEM_LIMIT),
    )(x, lnw.reshape(1, K), lnb.reshape(1, K), w)


# -----------------------------------------------------------------------------
# Post-block LayerNorm fused into the classification head:
#   LN(x[b,t,:]) for every t, then y[b] = sum_t LN(x[b,t]) @ W_t + b -> sigmoid.
# Head output is padded to a 128-lane slab (lane-dense stores); sliced outside.
# -----------------------------------------------------------------------------
def _ln_head_kernel(x_ref, lnw_ref, lnb_ref, w_ref, b_ref, o_ref,
                    *, eps, seq_len, embed):
    x = x_ref[0].astype(jnp.float32)                          # (T, E)
    mu = jnp.mean(x, axis=-1, keepdims=True)
    xc = x - mu
    var = jnp.mean(xc * xc, axis=-1, keepdims=True)
    xn = (xc * lax.rsqrt(var + eps) * lnw_ref[...] + lnb_ref[...]).astype(jnp.bfloat16)

    acc = b_ref[...].astype(jnp.float32)                      # (1, N_pad)
    for t in range(seq_len):                                  # static unroll (GEMV)
        acc = acc + jnp.dot(xn[t:t + 1, :],
                            w_ref[t * embed:(t + 1) * embed, :],
                            preferred_element_type=jnp.float32)
    o_ref[0] = jax.nn.sigmoid(acc)


def ln_head(x3, lnw, lnb, w, b, *, seq_len, embed, eps=1e-5):
    B = x3.shape[0]
    NP = w.shape[1]
    out = pl.pallas_call(
        functools.partial(_ln_head_kernel, eps=eps, seq_len=seq_len, embed=embed),
        out_shape=jax.ShapeDtypeStruct((B, 1, NP), jnp.float32),
        grid=(B,),
        in_specs=[pl.BlockSpec((1, seq_len, embed), lambda bb: (bb, 0, 0)),
                  pl.BlockSpec((1, embed), lambda bb: (0, 0)),
                  pl.BlockSpec((1, embed), lambda bb: (0, 0)),
                  pl.BlockSpec((seq_len * embed, NP), lambda bb: (0, 0)),
                  pl.BlockSpec((1, NP), lambda bb: (0, 0))],
        out_specs=pl.BlockSpec((1, 1, NP), lambda bb: (bb, 0, 0)),
        compiler_params=pltpu.CompilerParams(
            dimension_semantics=("parallel",),
            vmem_limit_bytes=VMEM_LIMIT),
    )(x3, lnw.reshape(1, embed), lnb.reshape(1, embed), w, b.reshape(1, NP))
    return out.reshape(B, NP)


# -----------------------------------------------------------------------------
# Fused mLSTM block kernel (per batch element):
#   causal conv + SiLU  ->  fused q/k/gate projection  ->  stabilized cell
#   ->  per-head norm  ->  learnable skip + output gate
# All fused-projection sections are 128-lane aligned; each head's gated output
# is stored directly into o_ref (no concat), bounding the live set.
# -----------------------------------------------------------------------------
def _mlstm_block_kernel(up_ref, cw_ref, cb_ref, wc_ref, wcb_ref, onw_ref,
                        skip_ref, o_ref, *, nh, dh, inner, inp, gp, conv_k, eps):
    S = o_ref.shape[1]

    up = up_ref[0]                                            # (S, 3*inp+gp) bf16
    x_m = up[:, :inner].astype(jnp.float32)
    z = up[:, inp:inp + inner].astype(jnp.float32)
    v_all = up[:, 2 * inp:2 * inp + inner]                    # bf16, fed to MXU
    g_x = up[:, 3 * inp:3 * inp + gp].astype(jnp.float32)     # (S, gp) = [ig|fg|0]

    t_idx = lax.broadcasted_iota(jnp.int32, (S, 1), 0)

    # --- causal depthwise conv (kernel conv_k) + SiLU, taps via sublane rolls ---
    # tap ordering matches PyTorch causal Conv1d: weight[K-1-j] multiplies lag j.
    cw = cw_ref[...]                                          # (conv_k, inner) f32
    acc = x_m * cw[conv_k - 1:conv_k, :]
    for j in range(1, conv_k):
        shifted = pltpu.roll(x_m, shift=j, axis=0)            # shifted[t] = x_m[t-j]
        shifted = jnp.where(t_idx >= j, shifted, 0.0)
        acc = acc + shifted * cw[conv_k - 1 - j:conv_k - j, :]
    acc = acc + cb_ref[...]
    conv_act = acc * jax.nn.sigmoid(acc)                      # (S, inner) f32

    # --- fused q/k + conv-side gate projection (lane-aligned sections) ---------
    projc = jnp.dot(conv_act.astype(jnp.bfloat16), wc_ref[...],
                    preferred_element_type=jnp.float32) + wcb_ref[...]
    q_all = projc[:, :inner]
    k_all = projc[:, inp:inp + inner]
    g_c = projc[:, 2 * inp:2 * inp + gp]                      # (S, gp)

    # --- stabilized gates: log-sigmoid + inclusive prefix sum over time --------
    gates = g_c + g_x                                         # [ig | fg | pad]
    lf_all = jnp.minimum(gates, 0.0) - jnp.log1p(jnp.exp(-jnp.abs(gates)))
    cum = lf_all
    shift = 1
    while shift < S:                                          # Hillis-Steele scan
        cum = cum + jnp.where(t_idx >= shift,
                              pltpu.roll(cum, shift=shift, axis=0), 0.0)
        shift *= 2
    i_pre = gates[:, :nh]                                     # (S, nh) input gate
    cum_f = cum[:, nh:2 * nh]                                 # (S, nh) cumsum(log fg)

    row = lax.broadcasted_iota(jnp.int32, (S, S), 0)
    col = lax.broadcasted_iota(jnp.int32, (S, S), 1)
    causal = col <= row
    ones_col = jnp.ones((S, 1), jnp.float32)
    scale = jnp.float32(dh ** -0.5)

    onw = onw_ref[...]                                        # (nh, dh) f32
    skip_v = skip_ref[...]                                    # (1, inner) f32
    z_gate = z * jax.nn.sigmoid(z)                            # SiLU(z)

    # TODO(synk): promote this head loop to a (B, NH) grid axis and chunk the
    # (S,S) temporaries along query time for long T (required on v7x VMEM).
    for h in range(nh):                                       # nh small & static
        a, b = h * dh, (h + 1) * dh
        q, k, v = q_all[:, a:b], k_all[:, a:b], v_all[:, a:b]

        cum_h = cum_f[:, h:h + 1]                             # (S, 1)
        # row-broadcast of (i[t] - cum[t]) via a tiny f32 outer product on the
        # MXU (avoids an in-kernel transpose): b_row[s,t] = i[t] - cum[t]
        b_col = i_pre[:, h:h + 1] - cum_h
        b_row = lax.dot_general(ones_col, b_col, (((1,), (1,)), ((), ())),
                                preferred_element_type=jnp.float32)
        # log D[s,t] = cum[s] - cum[t] + i[t]; -1e30 mask is safe in f32 math.
        log_d = jnp.where(causal, cum_h + b_row, -1e30)
        m = jnp.max(log_d, axis=-1, keepdims=True)            # (S, 1)
        d = jnp.exp(log_d - m)

        qk = lax.dot_general(q.astype(jnp.bfloat16), k.astype(jnp.bfloat16),
                             (((1,), (1,)), ((), ())),
                             preferred_element_type=jnp.float32) * scale
        c = qk * d
        # clamp the stabilizer exponent so exp() cannot overflow when m << 0
        stab = jnp.exp(jnp.minimum(-m, 80.0))
        n = jnp.maximum(jnp.abs(jnp.sum(c, axis=-1, keepdims=True)), stab) + 1e-6
        c = c * pl.reciprocal(n, approx=True)
        h_c = jnp.dot(c.astype(jnp.bfloat16), v,
                      preferred_element_type=jnp.float32)     # (S, dh)

        # per-head layer norm over dh (weight only), fused epilogue
        mu = jnp.mean(h_c, axis=-1, keepdims=True)
        xc = h_c - mu
        var = jnp.mean(xc * xc, axis=-1, keepdims=True)
        h_n = xc * lax.rsqrt(var + eps) * onw[h:h + 1, :]

        # learnable skip + output gate; store this head directly (bounds live set)
        out_h = (h_n + skip_v[:, a:b] * conv_act[:, a:b]) * z_gate[:, a:b]
        o_ref[0, :, a:b] = out_h.astype(o_ref.dtype)


def mlstm_block(up_ext, conv_w, conv_b, wc, wc_b, outnorm_w, skip,
                *, B, T, nh, dh, inner, inp, gp, conv_k):
    d_up = up_ext.shape[-1]
    d_c = wc.shape[1]
    up3 = up_ext.reshape(B, T, d_up)
    return pl.pallas_call(
        functools.partial(_mlstm_block_kernel, nh=nh, dh=dh, inner=inner,
                          inp=inp, gp=gp, conv_k=conv_k, eps=1e-5),
        out_shape=jax.ShapeDtypeStruct((B, T, inner), jnp.bfloat16),
        grid=(B,),
        in_specs=[pl.BlockSpec((1, T, d_up), lambda bb: (bb, 0, 0)),
                  pl.BlockSpec((conv_k, inner), lambda bb: (0, 0)),
                  pl.BlockSpec((1, inner), lambda bb: (0, 0)),
                  pl.BlockSpec((inner, d_c), lambda bb: (0, 0)),
                  pl.BlockSpec((1, d_c), lambda bb: (0, 0)),
                  pl.BlockSpec((nh, dh), lambda bb: (0, 0)),
                  pl.BlockSpec((1, inner), lambda bb: (0, 0))],
        out_specs=pl.BlockSpec((1, T, inner), lambda bb: (bb, 0, 0)),
        compiler_params=pltpu.CompilerParams(
            dimension_semantics=("parallel",),
            vmem_limit_bytes=VMEM_LIMIT),
    )(up3, conv_w, conv_b.reshape(1, inner), wc, wc_b.reshape(1, d_c),
      outnorm_w, skip.reshape(1, inner))


# -----------------------------------------------------------------------------
# Parameters (deterministic synthetic init; fused weights folded at init time,
# all large weights stored bf16, fused sections padded to 128-lane boundaries)
# -----------------------------------------------------------------------------
def init_params(key, *, cin, embed, seq_len, pred_len, num_blocks, num_heads,
                proj_factor=2, conv_k=4):
    inner = proj_factor * embed
    assert inner % num_heads == 0
    dh = inner // num_heads
    inp = _round_up(inner, 128)          # lane-aligned section width
    gp = 128                             # padded gate section (ig | fg | 0)
    assert 2 * num_heads <= gp
    np_head = _round_up(pred_len, 128)   # lane-dense head output slab

    keys = iter(jax.random.split(key, 8 + 16 * num_blocks))

    def nrm(shape, scale=0.02):
        return scale * jax.random.normal(next(keys), shape, jnp.float32)

    def pad_cols(w, width):
        return jnp.pad(w, ((0, 0), (0, width - w.shape[1])))

    params = dict(
        proj_w=nrm((cin, embed)).astype(jnp.bfloat16), proj_b=nrm((embed,)),
        post_ln_w=jnp.ones((embed,), jnp.float32),
        post_ln_b=jnp.zeros((embed,), jnp.float32),
        head_w=pad_cols(nrm((embed * seq_len, pred_len)), np_head).astype(jnp.bfloat16),
        head_b=jnp.pad(nrm((pred_len,)), (0, np_head - pred_len)),
        blocks=[],
    )
    for _ in range(num_blocks):
        up_w = nrm((embed, 2 * inner))                        # bias=False
        conv_w, conv_b = nrm((conv_k, inner)), nrm((inner,))
        # TODO(synk): xLSTM's LinearHeadwiseExpand (block-diagonal q/k/v) is
        # modeled as dense per-direction projections here.
        q_w, k_w, v_w = nrm((inner, inner)), nrm((inner, inner)), nrm((inner, inner))
        ig_w, ig_b = nrm((3 * inner, num_heads)), nrm((num_heads,))
        fg_w = nrm((3 * inner, num_heads))
        fg_b = jnp.linspace(3.0, 6.0, num_heads, dtype=jnp.float32)

        # --- trace/init-time weight folding (exact up to fp reassociation) ----
        # conv-path fused projection: conv_act @ wc -> [q |pad| k |pad| ig_c fg_c |pad]
        gate_c_w = jnp.concatenate(
            [q_w @ ig_w[:inner] + k_w @ ig_w[inner:2 * inner],
             q_w @ fg_w[:inner] + k_w @ fg_w[inner:2 * inner]], axis=1)
        wc = jnp.concatenate(
            [pad_cols(q_w, inp), pad_cols(k_w, inp), pad_cols(gate_c_w, gp)], axis=1)
        wc_b = jnp.concatenate(
            [jnp.zeros((2 * inp,), jnp.float32), ig_b, fg_b,
             jnp.zeros((gp - 2 * num_heads,), jnp.float32)])

        # pre-conv (x_m) path folded through the up-projection:
        # LN(x) @ w_up_ext -> [x_m |pad| z |pad| v |pad| ig_x fg_x |pad]
        gate_x_w = jnp.concatenate(
            [v_w @ ig_w[2 * inner:], v_w @ fg_w[2 * inner:]], axis=1)
        xm_w, z_w = up_w[:, :inner], up_w[:, inner:]
        w_up_ext = jnp.concatenate(
            [pad_cols(xm_w, inp), pad_cols(z_w, inp),
             pad_cols(xm_w @ v_w, inp), pad_cols(xm_w @ gate_x_w, gp)], axis=1)

        params["blocks"].append(dict(
            ln_w=jnp.ones((embed,), jnp.float32),
            ln_b=jnp.zeros((embed,), jnp.float32),
            w_up_ext=w_up_ext.astype(jnp.bfloat16),
            conv_w=conv_w, conv_b=conv_b,
            wc=wc.astype(jnp.bfloat16), wc_b=wc_b,
            outnorm_w=jnp.ones((num_heads, dh), jnp.float32),
            skip=nrm((inner,)),
            down_w=nrm((inner, embed)).astype(jnp.bfloat16),  # bias=False
        ))
    meta = dict(cin=cin, embed=embed, seq_len=seq_len, pred_len=pred_len,
                num_blocks=num_blocks, num_heads=num_heads, inner=inner,
                dh=dh, inp=inp, gp=gp, np_head=np_head, conv_k=conv_k)
    return params, meta


# -----------------------------------------------------------------------------
# Forward pass (type_ == 'classification' -> final sigmoid)
# -----------------------------------------------------------------------------
def xlstm_forward(params, meta, x):
    B, T, Cin = x.shape
    E, inner = meta["embed"], meta["inner"]
    NH, DH, CK = meta["num_heads"], meta["dh"], meta["conv_k"]
    INP, GP = meta["inp"], meta["gp"]

    # input projection (f32 input, bf16 weight) -> bf16 activations
    x_seq = linear(x.reshape(B * T, Cin), params["proj_w"], params["proj_b"])

    for blk in params["blocks"]:
        # pre-LN fused into the extended up projection:
        # emits [x_m | z | v | gates] in lane-aligned sections (B*T, 3*INP+GP)
        up_ext = ln_matmul(x_seq, blk["ln_w"], blk["ln_b"], blk["w_up_ext"])

        # fused conv + q/k/gate projection + stabilized cell + head-norm + gate
        h_gated = mlstm_block(up_ext, blk["conv_w"], blk["conv_b"],
                              blk["wc"], blk["wc_b"], blk["outnorm_w"],
                              blk["skip"], B=B, T=T, nh=NH, dh=DH,
                              inner=inner, inp=INP, gp=GP, conv_k=CK)

        # down projection with the residual add fused into the epilogue
        x_seq = linear(h_gated.reshape(B * T, inner), blk["down_w"],
                       residual=x_seq)

    # post-block LayerNorm fused into the classification head (+sigmoid);
    # head output is a 128-lane padded slab, sliced to pred_len outside.
    out_pad = ln_head(x_seq.reshape(B, T, E), params["post_ln_w"],
                      params["post_ln_b"], params["head_w"], params["head_b"],
                      seq_len=T, embed=E)
    return out_pad[:, :meta["pred_len"]]                      # (B, pred_len)


# -----------------------------------------------------------------------------
if __name__ == "__main__":
    B, T, CIN = 2, 8, 4          # batch, context_length, input_channel
    EMBED, PRED = 32, 4
    NUM_BLOCKS, NUM_HEADS = 2, 4

    key = jax.random.PRNGKey(0)
    k_param, k_x = jax.random.split(key)
    params, meta = init_params(k_param, cin=CIN, embed=EMBED, seq_len=T,
                               pred_len=PRED, num_blocks=NUM_BLOCKS,
                               num_heads=NUM_HEADS)
    x = jax.random.normal(k_x, (B, T, CIN), jnp.float32)

    fwd = jax.jit(functools.partial(xlstm_forward, params, meta))
    out = jax.block_until_ready(fwd(x))

    assert out.shape == (B, PRED)
    assert bool(jnp.all(jnp.isfinite(out)))
    assert bool(jnp.all((out >= 0.0) & (out <= 1.0)))  # sigmoid range
    print("KERNEL_OK")
</pallas_src>

<mosaic_0001>
module attributes {stable_mosaic.version = 11 : i64} {
  func.func @_ln_matmul_kernel(%arg0: i32, %arg1: i32, %arg2: memref<16x32xbf16, #tpu.memory_space<vmem>>, %arg3: memref<1x32xf32, #tpu.memory_space<vmem>>, %arg4: memref<1x32xf32, #tpu.memory_space<vmem>>, %arg5: memref<32x512xbf16, #tpu.memory_space<vmem>>, %arg6: memref<16x512xbf16, #tpu.memory_space<vmem>>, %arg7: memref<16x32xbf16, #tpu.memory_space<vmem>>) attributes {dimension_semantics = [#tpu.dimension_semantics<parallel>, #tpu.dimension_semantics<arbitrary>], iteration_bounds = array<i64: 1, 1>, scalar_prefetch = 0 : i64, scratch_operands = 1 : i64, tpu.core_type = #tpu.core_type<tc>, window_params = [{transform_indices = @transform_0, window_bounds = array<i64: 16, 32>}, {pipeline_mode = #tpu.pipeline_mode<synchronous>, transform_indices = @transform_1, window_bounds = array<i64: 1, 32>}, {pipeline_mode = #tpu.pipeline_mode<synchronous>, transform_indices = @transform_2, window_bounds = array<i64: 1, 32>}, {transform_indices = @transform_3, window_bounds = array<i64: 32, 512>}, {transform_indices = @transform_4, window_bounds = array<i64: 16, 512>}]} {
    %c0_i32 = arith.constant 0 : i32
    %0 = arith.cmpi eq, %arg1, %c0_i32 : i32
    %1 = arith.extui %0 : i1 to i32
    %c0_i32_0 = arith.constant 0 : i32
    %2 = arith.cmpi ne, %1, %c0_i32_0 : i32
    scf.if %2 {
      %c0_6 = arith.constant 0 : index
      %c0_7 = arith.constant 0 : index
      %8 = vector.load %arg2[%c0_6, %c0_7] : memref<16x32xbf16, #tpu.memory_space<vmem>>, vector<16x32xbf16>
      %9 = arith.extf %8 : vector<16x32xbf16> to vector<16x32xf32>
      %cst_8 = arith.constant dense<0.000000e+00> : vector<16xf32>
      %10 = vector.multi_reduction <add>, %9, %cst_8 [1] : vector<16x32xf32> to vector<16xf32>
      %11 = vector.shape_cast %10 : vector<16xf32> to vector<16x1xf32>
      %cst_9 = arith.constant 3.200000e+01 : f32
      %12 = vector.broadcast %cst_9 : f32 to vector<16x1xf32>
      %13 = arith.divf %11, %12 : vector<16x1xf32>
      %14 = vector.broadcast %13 : vector<16x1xf32> to vector<16x32xf32>
      %15 = arith.subf %9, %14 : vector<16x32xf32>
      %16 = arith.mulf %15, %15 : vector<16x32xf32>
      %cst_10 = arith.constant dense<0.000000e+00> : vector<16xf32>
      %17 = vector.multi_reduction <add>, %16, %cst_10 [1] : vector<16x32xf32> to vector<16xf32>
      %18 = vector.shape_cast %17 : vector<16xf32> to vector<16x1xf32>
      %cst_11 = arith.constant 3.200000e+01 : f32
      %19 = vector.broadcast %cst_11 : f32 to vector<16x1xf32>
      %20 = arith.divf %18, %19 : vector<16x1xf32>
      %cst_12 = arith.constant 9.99999974E-6 : f32
      %21 = vector.broadcast %cst_12 : f32 to vector<16x1xf32>
      %22 = arith.addf %20, %21 : vector<16x1xf32>
      %23 = math.rsqrt %22 : vector<16x1xf32>
      %24 = vector.broadcast %23 : vector<16x1xf32> to vector<16x32xf32>
      %25 = arith.mulf %15, %24 : vector<16x32xf32>
      %c0_13 = arith.constant 0 : index
      %c0_14 = arith.constant 0 : index
      %26 = vector.load %arg3[%c0_13, %c0_14] : memref<1x32xf32, #tpu.memory_space<vmem>>, vector<1x32xf32>
      %27 = vector.broadcast %26 : vector<1x32xf32> to vector<16x32xf32>
      %28 = arith.mulf %25, %27 : vector<16x32xf32>
      %c0_15 = arith.constant 0 : index
      %c0_16 = arith.constant 0 : index
      %29 = vector.load %arg4[%c0_15, %c0_16] : memref<1x32xf32, #tpu.memory_space<vmem>>, vector<1x32xf32>
      %30 = vector.broadcast %29 : vector<1x32xf32> to vector<16x32xf32>
      %31 = arith.addf %28, %30 : vector<16x32xf32>
      %32 = arith.truncf %31 : vector<16x32xf32> to vector<16x32xbf16>
      %c0_17 = arith.constant 0 : index
      %c0_18 = arith.constant 0 : index
      %33 = vector.load %arg7[%c0_17, %c0_18] : memref<16x32xbf16, #tpu.memory_space<vmem>>, vector<16x32xbf16>
      tpu.vector_store %arg7[%c0_17, %c0_18], %32 {strides = array<i32>} : memref<16x32xbf16, #tpu.memory_space<vmem>>, vector<16x32xbf16>,
    } else {
    }
    %c0 = arith.constant 0 : index
    %c0_1 = arith.constant 0 : index
    %3 = vector.load %arg7[%c0, %c0_1] : memref<16x32xbf16, #tpu.memory_space<vmem>>, vector<16x32xbf16>
    %c0_2 = arith.constant 0 : index
    %c0_3 = arith.constant 0 : index
    %4 = vector.load %arg5[%c0_2, %c0_3] : memref<32x512xbf16, #tpu.memory_space<vmem>>, vector<32x512xbf16>
    %cst = arith.constant dense<0.000000e+00> : vector<16x512xf32>
    %5 = tpu.matmul %3, %4, %cst {dimension_numbers = #tpu.dot_dimension_numbers<[1], [0], [0], [1], [0, 0, 1, 1], [], []>} : vector<16x32xbf16>, vector<32x512xbf16>, vector<16x512xf32> -> vector<16x512xf32>
    %6 = arith.truncf %5 : vector<16x512xf32> to vector<16x512xbf16>
    %c0_4 = arith.constant 0 : index
    %c0_5 = arith.constant 0 : index
    %7 = vector.load %arg6[%c0_4, %c0_5] : memref<16x512xbf16, #tpu.memory_space<vmem>>, vector<16x512xbf16>
    tpu.vector_store %arg6[%c0_4, %c0_5], %6 {strides = array<i32>} : memref<16x512xbf16, #tpu.memory_space<vmem>>, vector<16x512xbf16>,
    return
  }
  func.func @transform_0(%arg0: i32, %arg1: i32) -> (i32, i32) {
    %c0_i32 = arith.constant 0 : i32
    %c0_i32_0 = arith.constant 0 : i32
    return %arg0, %c0_i32 : i32, i32
  }
  func.func @transform_1(%arg0: i32, %arg1: i32) -> (i32, i32) {
    %c0_i32 = arith.constant 0 : i32
    %c0_i32_0 = arith.constant 0 : i32
    %c0_i32_1 = arith.constant 0 : i32
    return %c0_i32, %c0_i32_0 : i32, i32
  }
  func.func @transform_2(%arg0: i32, %arg1: i32) -> (i32, i32) {
    %c0_i32 = arith.constant 0 : i32
    %c0_i32_0 = arith.constant 0 : i32
    %c0_i32_1 = arith.constant 0 : i32
    return %c0_i32, %c0_i32_0 : i32, i32
  }
  func.func @transform_3(%arg0: i32, %arg1: i32) -> (i32, i32) {
    %c0_i32 = arith.constant 0 : i32
    %c0_i32_0 = arith.constant 0 : i32
    return %c0_i32, %arg1 : i32, i32
  }
  func.func @transform_4(%arg0: i32, %arg1: i32) -> (i32, i32) {
    %c0_i32 = arith.constant 0 : i32
    return %arg0, %arg1 : i32, i32
  }
}

module attributes {stable_mosaic.version = 11 : i64} {
  func.func @_matmul_kernel(%arg0: i32, %arg1: i32, %arg2: i32, %arg3: memref<16x4xf32, #tpu.memory_space<vmem>>, %arg4: memref<4x32xbf16, #tpu.memory_space<vmem>>, %arg5: memref<1x32xf32, #tpu.memory_space<vmem>>, %arg6: memref<16x32xbf16, #tpu.memory_space<vmem>>, %arg7: memref<16x32xf32, #tpu.memory_space<vmem>>) attributes {dimension_semantics = [#tpu.dimension_semantics<parallel>, #tpu.dimension_semantics<parallel>, #tpu.dimension_semantics<arbitrary>], iteration_bounds = array<i64: 1, 1, 1>, scalar_prefetch = 0 : i64, scratch_operands = 1 : i64, tpu.core_type = #tpu.core_type<tc>, window_params = [{transform_indices = @transform_0, window_bounds = array<i64: 16, 4>}, {transform_indices = @transform_1, window_bounds = array<i64: 4, 32>}, {transform_indices = @transform_2, window_bounds = array<i64: 1, 32>}, {transform_indices = @transform_3, window_bounds = array<i64: 16, 32>}]} {
    %c0_i32 = arith.constant 0 : i32
    %0 = arith.cmpi eq, %arg2, %c0_i32 : i32
    %1 = arith.extui %0 : i1 to i32
    %c0_i32_0 = arith.constant 0 : i32
    %2 = arith.cmpi ne, %1, %c0_i32_0 : i32
    scf.if %2 {
      %cst_10 = arith.constant 0.000000e+00 : f32
      %13 = vector.broadcast %cst_10 : f32 to vector<16x32xf32>
      %c0_11 = arith.constant 0 : index
      %c0_12 = arith.constant 0 : index
      %14 = vector.load %arg7[%c0_11, %c0_12] : memref<16x32xf32, #tpu.memory_space<vmem>>, vector<16x32xf32>
      tpu.vector_store %arg7[%c0_11, %c0_12], %13 {strides = array<i32>} : memref<16x32xf32, #tpu.memory_space<vmem>>, vector<16x32xf32>,
    } else {
    }
    %c0 = arith.constant 0 : index
    %c0_1 = arith.constant 0 : index
    %3 = vector.load %arg7[%c0, %c0_1] : memref<16x32xf32, #tpu.memory_space<vmem>>, vector<16x32xf32>
    %c0_2 = arith.constant 0 : index
    %c0_3 = arith.constant 0 : index
    %4 = vector.load %arg3[%c0_2, %c0_3] : memref<16x4xf32, #tpu.memory_space<vmem>>, vector<16x4xf32>
    %5 = arith.truncf %4 : vector<16x4xf32> to vector<16x4xbf16>
    %c0_4 = arith.constant 0 : index
    %c0_5 = arith.constant 0 : index
    %6 = vector.load %arg4[%c0_4, %c0_5] : memref<4x32xbf16, #tpu.memory_space<vmem>>, vector<4x32xbf16>
    %cst = arith.constant dense<0.000000e+00> : vector<16x32xf32>
    %7 = tpu.matmul %5, %6, %cst {dimension_numbers = #tpu.dot_dimension_numbers<[1], [0], [0], [1], [0, 0, 1, 1], [], []>} : vector<16x4xbf16>, vector<4x32xbf16>, vector<16x32xf32> -> vector<16x32xf32>
    %8 = arith.addf %3, %7 : vector<16x32xf32>
    %c0_6 = arith.constant 0 : index
    %c0_7 = arith.constant 0 : index
    %9 = vector.load %arg7[%c0_6, %c0_7] : memref<16x32xf32, #tpu.memory_space<vmem>>, vector<16x32xf32>
    tpu.vector_store %arg7[%c0_6, %c0_7], %8 {strides = array<i32>} : memref<16x32xf32, #tpu.memory_space<vmem>>, vector<16x32xf32>,
    %c0_i32_8 = arith.constant 0 : i32
    %10 = arith.cmpi eq, %arg2, %c0_i32_8 : i32
    %11 = arith.extui %10 : i1 to i32
    %c0_i32_9 = arith.constant 0 : i32
    %12 = arith.cmpi ne, %11, %c0_i32_9 : i32
    scf.if %12 {
      %c0_10 = arith.constant 0 : index
      %c0_11 = arith.constant 0 : index
      %13 = vector.load %arg7[%c0_10, %c0_11] : memref<16x32xf32, #tpu.memory_space<vmem>>, vector<16x32xf32>
      %c0_12 = arith.constant 0 : index
      %c0_13 = arith.constant 0 : index
      %14 = vector.load %arg5[%c0_12, %c0_13] : memref<1x32xf32, #tpu.memory_space<vmem>>, vector<1x32xf32>
      %15 = vector.broadcast %14 : vector<1x32xf32> to vector<16x32xf32>
      %16 = arith.addf %13, %15 : vector<16x32xf32>
      %17 = arith.truncf %16 : vector<16x32xf32> to vector<16x32xbf16>
      %c0_14 = arith.constant 0 : index
      %c0_15 = arith.constant 0 : index
      %18 = vector.load %arg6[%c0_14, %c0_15] : memref<16x32xbf16, #tpu.memory_space<vmem>>, vector<16x32xbf16>
      tpu.vector_store %arg6[%c0_14, %c0_15], %17 {strides = array<i32>} : memref<16x32xbf16, #tpu.memory_space<vmem>>, vector<16x32xbf16>,
    } else {
    }
    return
  }
  func.func @transform_0(%arg0: i32, %arg1: i32, %arg2: i32) -> (i32, i32) {
    %c0_i32 = arith.constant 0 : i32
    return %arg0, %arg2 : i32, i32
  }
  func.func @transform_1(%arg0: i32, %arg1: i32, %arg2: i32) -> (i32, i32) {
    %c0_i32 = arith.constant 0 : i32
    return %arg2, %arg1 : i32, i32
  }
  func.func @transform_2(%arg0: i32, %arg1: i32, %arg2: i32) -> (i32, i32) {
    %c0_i32 = arith.constant 0 : i32
    %c0_i32_0 = arith.constant 0 : i32
    return %c0_i32, %arg1 : i32, i32
  }
  func.func @transform_3(%arg0: i32, %arg1: i32, %arg2: i32) -> (i32, i32) {
    %c0_i32 = arith.constant 0 : i32
    return %arg0, %arg1 : i32, i32
  }
}

module attributes {stable_mosaic.version = 11 : i64} {
  func.func @_matmul_kernel(%arg0: i32, %arg1: i32, %arg2: i32, %arg3: memref<16x64xbf16, #tpu.memory_space<vmem>>, %arg4: memref<64x32xbf16, #tpu.memory_space<vmem>>, %arg5: memref<16x32xbf16, #tpu.memory_space<vmem>>, %arg6: memref<16x32xbf16, #tpu.memory_space<vmem>>, %arg7: memref<16x32xf32, #tpu.memory_space<vmem>>) attributes {dimension_semantics = [#tpu.dimension_semantics<parallel>, #tpu.dimension_semantics<parallel>, #tpu.dimension_semantics<arbitrary>], iteration_bounds = array<i64: 1, 1, 1>, scalar_prefetch = 0 : i64, scratch_operands = 1 : i64, tpu.core_type = #tpu.core_type<tc>, window_params = [{transform_indices = @transform_0, window_bounds = array<i64: 16, 64>}, {transform_indices = @transform_1, window_bounds = array<i64: 64, 32>}, {transform_indices = @transform_2, window_bounds = array<i64: 16, 32>}, {transform_indices = @transform_3, window_bounds = array<i64: 16, 32>}]} {
    %c0_i32 = arith.constant 0 : i32
    %0 = arith.cmpi eq, %arg2, %c0_i32 : i32
    %1 = arith.extui %0 : i1 to i32
    %c0_i32_0 = arith.constant 0 : i32
    %2 = arith.cmpi ne, %1, %c0_i32_0 : i32
    scf.if %2 {
      %cst_10 = arith.constant 0.000000e+00 : f32
      %12 = vector.broadcast %cst_10 : f32 to vector<16x32xf32>
      %c0_11 = arith.constant 0 : index
      %c0_12 = arith.constant 0 : index
      %13 = vector.load %arg7[%c0_11, %c0_12] : memref<16x32xf32, #tpu.memory_space<vmem>>, vector<16x32xf32>
      tpu.vector_store %arg7[%c0_11, %c0_12], %12 {strides = array<i32>} : memref<16x32xf32, #tpu.memory_space<vmem>>, vector<16x32xf32>,
    } else {
    }
    %c0 = arith.constant 0 : index
    %c0_1 = arith.constant 0 : index
    %3 = vector.load %arg7[%c0, %c0_1] : memref<16x32xf32, #tpu.memory_space<vmem>>, vector<16x32xf32>
    %c0_2 = arith.constant 0 : index
    %c0_3 = arith.constant 0 : index
    %4 = vector.load %arg3[%c0_2, %c0_3] : memref<16x64xbf16, #tpu.memory_space<vmem>>, vector<16x64xbf16>
    %c0_4 = arith.constant 0 : index
    %c0_5 = arith.constant 0 : index
    %5 = vector.load %arg4[%c0_4, %c0_5] : memref<64x32xbf16, #tpu.memory_space<vmem>>, vector<64x32xbf16>
    %cst = arith.constant dense<0.000000e+00> : vector<16x32xf32>
    %6 = tpu.matmul %4, %5, %cst {dimension_numbers = #tpu.dot_dimension_numbers<[1], [0], [0], [1], [0, 0, 1, 1], [], []>} : vector<16x64xbf16>, vector<64x32xbf16>, vector<16x32xf32> -> vector<16x32xf32>
    %7 = arith.addf %3, %6 : vector<16x32xf32>
    %c0_6 = arith.constant 0 : index
    %c0_7 = arith.constant 0 : index
    %8 = vector.load %arg7[%c0_6, %c0_7] : memref<16x32xf32, #tpu.memory_space<vmem>>, vector<16x32xf32>
    tpu.vector_store %arg7[%c0_6, %c0_7], %7 {strides = array<i32>} : memref<16x32xf32, #tpu.memory_space<vmem>>, vector<16x32xf32>,
    %c0_i32_8 = arith.constant 0 : i32
    %9 = arith.cmpi eq, %arg2, %c0_i32_8 : i32
    %10 = arith.extui %9 : i1 to i32
    %c0_i32_9 = arith.constant 0 : i32
    %11 = arith.cmpi ne, %10, %c0_i32_9 : i32
    scf.if %11 {
      %c0_10 = arith.constant 0 : index
      %c0_11 = arith.constant 0 : index
      %12 = vector.load %arg7[%c0_10, %c0_11] : memref<16x32xf32, #tpu.memory_space<vmem>>, vector<16x32xf32>
      %c0_12 = arith.constant 0 : index
      %c0_13 = arith.constant 0 : index
      %13 = vector.load %arg5[%c0_12, %c0_13] : memref<16x32xbf16, #tpu.memory_space<vmem>>, vector<16x32xbf16>
      %14 = arith.extf %13 : vector<16x32xbf16> to vector<16x32xf32>
      %15 = arith.addf %12, %14 : vector<16x32xf32>
      %16 = arith.truncf %15 : vector<16x32xf32> to vector<16x32xbf16>
      %c0_14 = arith.constant 0 : index
      %c0_15 = arith.constant 0 : index
      %17 = vector.load %arg6[%c0_14, %c0_15] : memref<16x32xbf16, #tpu.memory_space<vmem>>, vector<16x32xbf16>
      tpu.vector_store %arg6[%c0_14, %c0_15], %16 {strides = array<i32>} : memref<16x32xbf16, #tpu.memory_space<vmem>>, vector<16x32xbf16>,
    } else {
    }
    return
  }
  func.func @transform_0(%arg0: i32, %arg1: i32, %arg2: i32) -> (i32, i32) {
    %c0_i32 = arith.constant 0 : i32
    return %arg0, %arg2 : i32, i32
  }
  func.func @transform_1(%arg0: i32, %arg1: i32, %arg2: i32) -> (i32, i32) {
    %c0_i32 = arith.constant 0 : i32
    return %arg2, %arg1 : i32, i32
  }
  func.func @transform_2(%arg0: i32, %arg1: i32, %arg2: i32) -> (i32, i32) {
    %c0_i32 = arith.constant 0 : i32
    return %arg0, %arg1 : i32, i32
  }
  func.func @transform_3(%arg0: i32, %arg1: i32, %arg2: i32) -> (i32, i32) {
    %c0_i32 = arith.constant 0 : i32
    return %arg0, %arg1 : i32, i32
  }
}

module attributes {stable_mosaic.version = 11 : i64} {
  func.func @_mlstm_block_kernel(%arg0: i32, %arg1: memref<1x8x512xbf16, #tpu.memory_space<vmem>>, %arg2: memref<4x64xf32, #tpu.memory_space<vmem>>, %arg3: memref<1x64xf32, #tpu.memory_space<vmem>>, %arg4: memref<64x384xbf16, #tpu.memory_space<vmem>>, %arg5: memref<1x384xf32, #tpu.memory_space<vmem>>, %arg6: memref<4x16xf32, #tpu.memory_space<vmem>>, %arg7: memref<1x64xf32, #tpu.memory_space<vmem>>, %arg8: memref<1x8x64xbf16, #tpu.memory_space<vmem>>) attributes {dimension_semantics = [#tpu.dimension_semantics<parallel>], iteration_bounds = array<i64: 2>, scalar_prefetch = 0 : i64, scratch_operands = 0 : i64, tpu.core_type = #tpu.core_type<tc>, window_params = [{transform_indices = @transform_0, window_bounds = array<i64: 1, 8, 512>}, {pipeline_mode = #tpu.pipeline_mode<synchronous>, transform_indices = @transform_1, window_bounds = array<i64: 4, 64>}, {pipeline_mode = #tpu.pipeline_mode<synchronous>, transform_indices = @transform_2, window_bounds = array<i64: 1, 64>}, {pipeline_mode = #tpu.pipeline_mode<synchronous>, transform_indices = @transform_3, window_bounds = array<i64: 64, 384>}, {pipeline_mode = #tpu.pipeline_mode<synchronous>, transform_indices = @transform_4, window_bounds = array<i64: 1, 384>}, {pipeline_mode = #tpu.pipeline_mode<synchronous>, transform_indices = @transform_5, window_bounds = array<i64: 4, 16>}, {pipeline_mode = #tpu.pipeline_mode<synchronous>, transform_indices = @transform_6, window_bounds = array<i64: 1, 64>}, {transform_indices = @transform_7, window_bounds = array<i64: 1, 8, 64>}]} {
    %c0 = arith.constant 0 : index
    %c0_0 = arith.constant 0 : index
    %c0_1 = arith.constant 0 : index
    %0 = vector.load %arg1[%c0, %c0_0, %c0_1] : memref<1x8x512xbf16, #tpu.memory_space<vmem>>, vector<1x8x512xbf16>
    %1 = vector.shape_cast %0 : vector<1x8x512xbf16> to vector<8x512xbf16>
    %2 = vector.extract_strided_slice %1 {offsets = [0, 0], sizes = [8, 64], strides = [1, 1]} : vector<8x512xbf16> to vector<8x64xbf16>
    %3 = arith.extf %2 : vector<8x64xbf16> to vector<8x64xf32>
    %4 = vector.extract_strided_slice %1 {offsets = [0, 128], sizes = [8, 64], strides = [1, 1]} : vector<8x512xbf16> to vector<8x64xbf16>
    %5 = arith.extf %4 : vector<8x64xbf16> to vector<8x64xf32>
    %6 = vector.extract_strided_slice %1 {offsets = [0, 256], sizes = [8, 64], strides = [1, 1]} : vector<8x512xbf16> to vector<8x64xbf16>
    %7 = vector.extract_strided_slice %1 {offsets = [0, 384], sizes = [8, 128], strides = [1, 1]} : vector<8x512xbf16> to vector<8x128xbf16>
    %8 = arith.extf %7 : vector<8x128xbf16> to vector<8x128xf32>
    %9 = tpu.iota {dimensions = array<i32: 0>} : vector<8x1xi32>
    %c0_2 = arith.constant 0 : index
    %c0_3 = arith.constant 0 : index
    %10 = vector.load %arg2[%c0_2, %c0_3] : memref<4x64xf32, #tpu.memory_space<vmem>>, vector<4x64xf32>
    %11 = vector.extract_strided_slice %10 {offsets = [3, 0], sizes = [1, 64], strides = [1, 1]} : vector<4x64xf32> to vector<1x64xf32>
    %12 = vector.broadcast %11 : vector<1x64xf32> to vector<8x64xf32>
    %13 = arith.mulf %3, %12 : vector<8x64xf32>
    %c1_i32 = arith.constant 1 : i32
    %14 = tpu.dynamic_rotate %3 by %c1_i32 dim 0 : vector<8x64xf32>, i32 -> vector<8x64xf32>
    %c1_i32_4 = arith.constant 1 : i32
    %15 = vector.broadcast %c1_i32_4 : i32 to vector<8x1xi32>
    %16 = arith.cmpi sge, %9, %15 : vector<8x1xi32>
    %cst = arith.constant 0.000000e+00 : f32
    %17 = vector.shape_cast %16 : vector<8x1xi1> to vector<8x1xi1>
    %18 = vector.broadcast %17 : vector<8x1xi1> to vector<8x64xi1>
    %19 = vector.broadcast %cst : f32 to vector<8x64xf32>
    %20 = arith.select %18, %14, %19 : vector<8x64xi1>, vector<8x64xf32>
    %21 = vector.extract_strided_slice %10 {offsets = [2, 0], sizes = [1, 64], strides = [1, 1]} : vector<4x64xf32> to vector<1x64xf32>
    %22 = vector.broadcast %21 : vector<1x64xf32> to vector<8x64xf32>
    %23 = arith.mulf %20, %22 : vector<8x64xf32>
    %24 = arith.addf %13, %23 : vector<8x64xf32>
    %c2_i32 = arith.constant 2 : i32
    %25 = tpu.dynamic_rotate %3 by %c2_i32 dim 0 : vector<8x64xf32>, i32 -> vector<8x64xf32>
    %c2_i32_5 = arith.constant 2 : i32
    %26 = vector.broadcast %c2_i32_5 : i32 to vector<8x1xi32>
    %27 = arith.cmpi sge, %9, %26 : vector<8x1xi32>
    %cst_6 = arith.constant 0.000000e+00 : f32
    %28 = vector.shape_cast %27 : vector<8x1xi1> to vector<8x1xi1>
    %29 = vector.broadcast %28 : vector<8x1xi1> to vector<8x64xi1>
    %30 = vector.broadcast %cst_6 : f32 to vector<8x64xf32>
    %31 = arith.select %29, %25, %30 : vector<8x64xi1>, vector<8x64xf32>
    %32 = vector.extract_strided_slice %10 {offsets = [1, 0], sizes = [1, 64], strides = [1, 1]} : vector<4x64xf32> to vector<1x64xf32>
    %33 = vector.broadcast %32 : vector<1x64xf32> to vector<8x64xf32>
    %34 = arith.mulf %31, %33 : vector<8x64xf32>
    %35 = arith.addf %24, %34 : vector<8x64xf32>
    %c3_i32 = arith.constant 3 : i32
    %36 = tpu.dynamic_rotate %3 by %c3_i32 dim 0 : vector<8x64xf32>, i32 -> vector<8x64xf32>
    %c3_i32_7 = arith.constant 3 : i32
    %37 = vector.broadcast %c3_i32_7 : i32 to vector<8x1xi32>
    %38 = arith.cmpi sge, %9, %37 : vector<8x1xi32>
    %cst_8 = arith.constant 0.000000e+00 : f32
    %39 = vector.shape_cast %38 : vector<8x1xi1> to vector<8x1xi1>
    %40 = vector.broadcast %39 : vector<8x1xi1> to vector<8x64xi1>
    %41 = vector.broadcast %cst_8 : f32 to vector<8x64xf32>
    %42 = arith.select %40, %36, %41 : vector<8x64xi1>, vector<8x64xf32>
    %43 = vector.extract_strided_slice %10 {offsets = [0, 0], sizes = [1, 64], strides = [1, 1]} : vector<4x64xf32> to vector<1x64xf32>
    %44 = vector.broadcast %43 : vector<1x64xf32> to vector<8x64xf32>
    %45 = arith.mulf %42, %44 : vector<8x64xf32>
    %46 = arith.addf %35, %45 : vector<8x64xf32>
    %c0_9 = arith.constant 0 : index
    %c0_10 = arith.constant 0 : index
    %47 = vector.load %arg3[%c0_9, %c0_10] : memref<1x64xf32, #tpu.memory_space<vmem>>, vector<1x64xf32>
    %48 = vector.broadcast %47 : vector<1x64xf32> to vector<8x64xf32>
    %49 = arith.addf %46, %48 : vector<8x64xf32>
    %50 = arith.negf %49 : vector<8x64xf32>
    %51 = math.exp %50 : vector<8x64xf32>
    %cst_11 = arith.constant 1.000000e+00 : f32
    %52 = vector.broadcast %cst_11 : f32 to vector<8x64xf32>
    %53 = arith.addf %52, %51 : vector<8x64xf32>
    %54 = arith.divf %52, %53 : vector<8x64xf32>
    %55 = arith.mulf %49, %54 : vector<8x64xf32>
    %56 = arith.truncf %55 : vector<8x64xf32> to vector<8x64xbf16>
    %c0_12 = arith.constant 0 : index
    %c0_13 = arith.constant 0 : index
    %57 = vector.load %arg4[%c0_12, %c0_13] : memref<64x384xbf16, #tpu.memory_space<vmem>>, vector<64x384xbf16>
    %cst_14 = arith.constant dense<0.000000e+00> : vector<8x384xf32>
    %58 = tpu.matmul %56, %57, %cst_14 {dimension_numbers = #tpu.dot_dimension_numbers<[1], [0], [0], [1], [0, 0, 1, 1], [], []>} : vector<8x64xbf16>, vector<64x384xbf16>, vector<8x384xf32> -> vector<8x384xf32>
    %c0_15 = arith.constant 0 : index
    %c0_16 = arith.constant 0 : index
    %59 = vector.load %arg5[%c0_15, %c0_16] : memref<1x384xf32, #tpu.memory_space<vmem>>, vector<1x384xf32>
    %60 = vector.broadcast %59 : vector<1x384xf32> to vector<8x384xf32>
    %61 = arith.addf %58, %60 : vector<8x384xf32>
    %62 = vector.extract_strided_slice %61 {offsets = [0, 0], sizes = [8, 64], strides = [1, 1]} : vector<8x384xf32> to vector<8x64xf32>
    %63 = vector.extract_strided_slice %61 {offsets = [0, 128], sizes = [8, 64], strides = [1, 1]} : vector<8x384xf32> to vector<8x64xf32>
    %64 = vector.extract_strided_slice %61 {offsets = [0, 256], sizes = [8, 128], strides = [1, 1]} : vector<8x384xf32> to vector<8x128xf32>
    %65 = arith.addf %64, %8 : vector<8x128xf32>
    %cst_17 = arith.constant 0.000000e+00 : f32
    %66 = vector.broadcast %cst_17 : f32 to vector<8x128xf32>
    %67 = arith.minimumf %65, %66 : vector<8x128xf32>
    %68 = math.absf %65 : vector<8x128xf32>
    %cst_18 = arith.constant 0.000000e+00 : f32
    %69 = vector.broadcast %cst_18 : f32 to vector<8x128xf32>
    %70 = arith.subf %69, %68 : vector<8x128xf32>
    %71 = math.exp %70 : vector<8x128xf32>
    %72 = math.log1p %71 : vector<8x128xf32>
    %73 = arith.subf %67, %72 : vector<8x128xf32>
    %c1_i32_19 = arith.constant 1 : i32
    %74 = vector.broadcast %c1_i32_19 : i32 to vector<8x1xi32>
    %75 = arith.cmpi sge, %9, %74 : vector<8x1xi32>
    %c1_i32_20 = arith.constant 1 : i32
    %76 = tpu.dynamic_rotate %73 by %c1_i32_20 dim 0 : vector<8x128xf32>, i32 -> vector<8x128xf32>
    %cst_21 = arith.constant 0.000000e+00 : f32
    %77 = vector.shape_cast %75 : vector<8x1xi1> to vector<8x1xi1>
    %78 = vector.broadcast %77 : vector<8x1xi1> to vector<8x128xi1>
    %79 = vector.broadcast %cst_21 : f32 to vector<8x128xf32>
    %80 = arith.select %78, %76, %79 : vector<8x128xi1>, vector<8x128xf32>
    %81 = arith.addf %73, %80 : vector<8x128xf32>
    %c2_i32_22 = arith.constant 2 : i32
    %82 = vector.broadcast %c2_i32_22 : i32 to vector<8x1xi32>
    %83 = arith.cmpi sge, %9, %82 : vector<8x1xi32>
    %c2_i32_23 = arith.constant 2 : i32
    %84 = tpu.dynamic_rotate %81 by %c2_i32_23 dim 0 : vector<8x128xf32>, i32 -> vector<8x128xf32>
    %cst_24 = arith.constant 0.000000e+00 : f32
    %85 = vector.shape_cast %83 : vector<8x1xi1> to vector<8x1xi1>
    %86 = vector.broadcast %85 : vector<8x1xi1> to vector<8x128xi1>
    %87 = vector.broadcast %cst_24 : f32 to vector<8x128xf32>
    %88 = arith.select %86, %84, %87 : vector<8x128xi1>, vector<8x128xf32>
    %89 = arith.addf %81, %88 : vector<8x128xf32>
    %c4_i32 = arith.constant 4 : i32
    %90 = vector.broadcast %c4_i32 : i32 to vector<8x1xi32>
    %91 = arith.cmpi sge, %9, %90 : vector<8x1xi32>
    %c4_i32_25 = arith.constant 4 : i32
    %92 = tpu.dynamic_rotate %89 by %c4_i32_25 dim 0 : vector<8x128xf32>, i32 -> vector<8x128xf32>
    %cst_26 = arith.constant 0.000000e+00 : f32
    %93 = vector.shape_cast %91 : vector<8x1xi1> to vector<8x1xi1>
    %94 = vector.broadcast %93 : vector<8x1xi1> to vector<8x128xi1>
    %95 = vector.broadcast %cst_26 : f32 to vector<8x128xf32>
    %96 = arith.select %94, %92, %95 : vector<8x128xi1>, vector<8x128xf32>
    %97 = arith.addf %89, %96 : vector<8x128xf32>
    %98 = vector.extract_strided_slice %65 {offsets = [0, 0], sizes = [8, 4], strides = [1, 1]} : vector<8x128xf32> to vector<8x4xf32>
    %99 = vector.extract_strided_slice %97 {offsets = [0, 4], sizes = [8, 4], strides = [1, 1]} : vector<8x128xf32> to vector<8x4xf32>
    %100 = tpu.iota {dimensions = array<i32: 0>} : vector<8x8xi32>
    %101 = tpu.iota {dimensions = array<i32: 1>} : vector<8x8xi32>
    %102 = arith.cmpi sle, %101, %100 : vector<8x8xi32>
    %cst_27 = arith.constant 1.000000e+00 : f32
    %103 = vector.broadcast %cst_27 : f32 to vector<8x1xf32>
    %c0_28 = arith.constant 0 : index
    %c0_29 = arith.constant 0 : index
    %104 = vector.load %arg6[%c0_28, %c0_29] : memref<4x16xf32, #tpu.memory_space<vmem>>, vector<4x16xf32>
    %c0_30 = arith.constant 0 : index
    %c0_31 = arith.constant 0 : index
    %105 = vector.load %arg7[%c0_30, %c0_31] : memref<1x64xf32, #tpu.memory_space<vmem>>, vector<1x64xf32>
    %106 = arith.negf %5 : vector<8x64xf32>
    %107 = math.exp %106 : vector<8x64xf32>
    %cst_32 = arith.constant 1.000000e+00 : f32
    %108 = vector.broadcast %cst_32 : f32 to vector<8x64xf32>
    %109 = arith.addf %108, %107 : vector<8x64xf32>
    %110 = arith.divf %108, %109 : vector<8x64xf32>
    %111 = arith.mulf %5, %110 : vector<8x64xf32>
    %112 = vector.extract_strided_slice %62 {offsets = [0, 0], sizes = [8, 16], strides = [1, 1]} : vector<8x64xf32> to vector<8x16xf32>
    %113 = vector.extract_strided_slice %63 {offsets = [0, 0], sizes = [8, 16], strides = [1, 1]} : vector<8x64xf32> to vector<8x16xf32>
    %114 = vector.extract_strided_slice %6 {offsets = [0, 0], sizes = [8, 16], strides = [1, 1]} : vector<8x64xbf16> to vector<8x16xbf16>
    %115 = vector.extract_strided_slice %99 {offsets = [0, 0], sizes = [8, 1], strides = [1, 1]} : vector<8x4xf32> to vector<8x1xf32>
    %116 = vector.extract_strided_slice %98 {offsets = [0, 0], sizes = [8, 1], strides = [1, 1]} : vector<8x4xf32> to vector<8x1xf32>
    %117 = arith.subf %116, %115 : vector<8x1xf32>
    %cst_33 = arith.constant dense<0.000000e+00> : vector<8x8xf32>
    %118 = tpu.matmul %103, %117, %cst_33 {dimension_numbers = #tpu.dot_dimension_numbers<[1], [1], [0], [0], [0, 0, 1, 0], [], []>} : vector<8x1xf32>, vector<8x1xf32>, vector<8x8xf32> -> vector<8x8xf32>
    %119 = vector.broadcast %115 : vector<8x1xf32> to vector<8x8xf32>
    %120 = arith.addf %119, %118 : vector<8x8xf32>
    %cst_34 = arith.constant -1.000000e+30 : f32
    %121 = vector.broadcast %cst_34 : f32 to vector<8x8xf32>
    %122 = arith.select %102, %120, %121 : vector<8x8xi1>, vector<8x8xf32>
    %cst_35 = arith.constant dense<0xFF800000> : vector<8xf32>
    %123 = vector.multi_reduction <maximumf>, %122, %cst_35 [1] : vector<8x8xf32> to vector<8xf32>
    %124 = vector.shape_cast %123 : vector<8xf32> to vector<8x1xf32>
    %125 = vector.broadcast %124 : vector<8x1xf32> to vector<8x8xf32>
    %126 = arith.subf %122, %125 : vector<8x8xf32>
    %127 = math.exp %126 : vector<8x8xf32>
    %128 = arith.truncf %112 : vector<8x16xf32> to vector<8x16xbf16>
    %129 = arith.truncf %113 : vector<8x16xf32> to vector<8x16xbf16>
    %cst_36 = arith.constant dense<0.000000e+00> : vector<8x8xf32>
    %130 = tpu.matmul %128, %129, %cst_36 {dimension_numbers = #tpu.dot_dimension_numbers<[1], [1], [0], [0], [0, 0, 1, 0], [], []>} : vector<8x16xbf16>, vector<8x16xbf16>, vector<8x8xf32> -> vector<8x8xf32>
    %cst_37 = arith.constant 2.500000e-01 : f32
    %131 = vector.broadcast %cst_37 : f32 to vector<8x8xf32>
    %132 = arith.mulf %130, %131 : vector<8x8xf32>
    %133 = arith.mulf %132, %127 : vector<8x8xf32>
    %cst_38 = arith.constant 0.000000e+00 : f32
    %134 = vector.broadcast %cst_38 : f32 to vector<8x1xf32>
    %135 = arith.subf %134, %124 : vector<8x1xf32>
    %cst_39 = arith.constant 8.000000e+01 : f32
    %136 = vector.broadcast %cst_39 : f32 to vector<8x1xf32>
    %137 = arith.minimumf %135, %136 : vector<8x1xf32>
    %138 = math.exp %137 : vector<8x1xf32>
    %cst_40 = arith.constant dense<0.000000e+00> : vector<8xf32>
    %139 = vector.multi_reduction <add>, %133, %cst_40 [1] : vector<8x8xf32> to vector<8xf32>
    %140 = vector.shape_cast %139 : vector<8xf32> to vector<8x1xf32>
    %141 = math.absf %140 : vector<8x1xf32>
    %142 = arith.maximumf %141, %138 : vector<8x1xf32>
    %cst_41 = arith.constant 9.99999997E-7 : f32
    %143 = vector.broadcast %cst_41 : f32 to vector<8x1xf32>
    %144 = arith.addf %142, %143 : vector<8x1xf32>
    %145 = tpu.reciprocal %144 {approx = true} : vector<8x1xf32> -> vector<8x1xf32>
    %146 = vector.broadcast %145 : vector<8x1xf32> to vector<8x8xf32>
    %147 = arith.mulf %133, %146 : vector<8x8xf32>
    %148 = arith.truncf %147 : vector<8x8xf32> to vector<8x8xbf16>
    %cst_42 = arith.constant dense<0.000000e+00> : vector<8x16xf32>
    %149 = tpu.matmul %148, %114, %cst_42 {dimension_numbers = #tpu.dot_dimension_numbers<[1], [0], [0], [1], [0, 0, 1, 1], [], []>} : vector<8x8xbf16>, vector<8x16xbf16>, vector<8x16xf32> -> vector<8x16xf32>
    %cst_43 = arith.constant dense<0.000000e+00> : vector<8xf32>
    %150 = vector.multi_reduction <add>, %149, %cst_43 [1] : vector<8x16xf32> to vector<8xf32>
    %151 = vector.shape_cast %150 : vector<8xf32> to vector<8x1xf32>
    %cst_44 = arith.constant 1.600000e+01 : f32
    %152 = vector.broadcast %cst_44 : f32 to vector<8x1xf32>
    %153 = arith.divf %151, %152 : vector<8x1xf32>
    %154 = vector.broadcast %153 : vector<8x1xf32> to vector<8x16xf32>
    %155 = arith.subf %149, %154 : vector<8x16xf32>
    %156 = arith.mulf %155, %155 : vector<8x16xf32>
    %cst_45 = arith.constant dense<0.000000e+00> : vector<8xf32>
    %157 = vector.multi_reduction <add>, %156, %cst_45 [1] : vector<8x16xf32> to vector<8xf32>
    %158 = vector.shape_cast %157 : vector<8xf32> to vector<8x1xf32>
    %cst_46 = arith.constant 1.600000e+01 : f32
    %159 = vector.broadcast %cst_46 : f32 to vector<8x1xf32>
    %160 = arith.divf %158, %159 : vector<8x1xf32>
    %cst_47 = arith.constant 9.99999974E-6 : f32
    %161 = vector.broadcast %cst_47 : f32 to vector<8x1xf32>
    %162 = arith.addf %160, %161 : vector<8x1xf32>
    %163 = math.rsqrt %162 : vector<8x1xf32>
    %164 = vector.broadcast %163 : vector<8x1xf32> to vector<8x16xf32>
    %165 = arith.mulf %155, %164 : vector<8x16xf32>
    %166 = vector.extract_strided_slice %104 {offsets = [0, 0], sizes = [1, 16], strides = [1, 1]} : vector<4x16xf32> to vector<1x16xf32>
    %167 = vector.broadcast %166 : vector<1x16xf32> to vector<8x16xf32>
    %168 = arith.mulf %165, %167 : vector<8x16xf32>
    %169 = vector.extract_strided_slice %105 {offsets = [0, 0], sizes = [1, 16], strides = [1, 1]} : vector<1x64xf32> to vector<1x16xf32>
    %170 = vector.extract_strided_slice %55 {offsets = [0, 0], sizes = [8, 16], strides = [1, 1]} : vector<8x64xf32> to vector<8x16xf32>
    %171 = vector.broadcast %169 : vector<1x16xf32> to vector<8x16xf32>
    %172 = arith.mulf %171, %170 : vector<8x16xf32>
    %173 = arith.addf %168, %172 : vector<8x16xf32>
    %174 = vector.extract_strided_slice %111 {offsets = [0, 0], sizes = [8, 16], strides = [1, 1]} : vector<8x64xf32> to vector<8x16xf32>
    %175 = arith.mulf %173, %174 : vector<8x16xf32>
    %176 = arith.truncf %175 : vector<8x16xf32> to vector<8x16xbf16>
    %c0_48 = arith.constant 0 : index
    %c0_49 = arith.constant 0 : index
    %c0_50 = arith.constant 0 : index
    %177 = vector.load %arg8[%c0_48, %c0_49, %c0_50] : memref<1x8x64xbf16, #tpu.memory_space<vmem>>, vector<1x8x16xbf16>
    %178 = vector.shape_cast %177 : vector<1x8x16xbf16> to vector<8x16xbf16>
    %179 = vector.shape_cast %176 : vector<8x16xbf16> to vector<1x8x16xbf16>
    tpu.vector_store %arg8[%c0_48, %c0_49, %c0_50], %179 {strides = array<i32>} : memref<1x8x64xbf16, #tpu.memory_space<vmem>>, vector<1x8x16xbf16>,
    %180 = vector.extract_strided_slice %62 {offsets = [0, 16], sizes = [8, 16], strides = [1, 1]} : vector<8x64xf32> to vector<8x16xf32>
    %181 = vector.extract_strided_slice %63 {offsets = [0, 16], sizes = [8, 16], strides = [1, 1]} : vector<8x64xf32> to vector<8x16xf32>
    %182 = vector.extract_strided_slice %6 {offsets = [0, 16], sizes = [8, 16], strides = [1, 1]} : vector<8x64xbf16> to vector<8x16xbf16>
    %183 = vector.extract_strided_slice %99 {offsets = [0, 1], sizes = [8, 1], strides = [1, 1]} : vector<8x4xf32> to vector<8x1xf32>
    %184 = vector.extract_strided_slice %98 {offsets = [0, 1], sizes = [8, 1], strides = [1, 1]} : vector<8x4xf32> to vector<8x1xf32>
    %185 = arith.subf %184, %183 : vector<8x1xf32>
    %cst_51 = arith.constant dense<0.000000e+00> : vector<8x8xf32>
    %186 = tpu.matmul %103, %185, %cst_51 {dimension_numbers = #tpu.dot_dimension_numbers<[1], [1], [0], [0], [0, 0, 1, 0], [], []>} : vector<8x1xf32>, vector<8x1xf32>, vector<8x8xf32> -> vector<8x8xf32>
    %187 = vector.broadcast %183 : vector<8x1xf32> to vector<8x8xf32>
    %188 = arith.addf %187, %186 : vector<8x8xf32>
    %cst_52 = arith.constant -1.000000e+30 : f32
    %189 = vector.broadcast %cst_52 : f32 to vector<8x8xf32>
    %190 = arith.select %102, %188, %189 : vector<8x8xi1>, vector<8x8xf32>
    %cst_53 = arith.constant dense<0xFF800000> : vector<8xf32>
    %191 = vector.multi_reduction <maximumf>, %190, %cst_53 [1] : vector<8x8xf32> to vector<8xf32>
    %192 = vector.shape_cast %191 : vector<8xf32> to vector<8x1xf32>
    %193 = vector.broadcast %192 : vector<8x1xf32> to vector<8x8xf32>
    %194 = arith.subf %190, %193 : vector<8x8xf32>
    %195 = math.exp %194 : vector<8x8xf32>
    %196 = arith.truncf %180 : vector<8x16xf32> to vector<8x16xbf16>
    %197 = arith.truncf %181 : vector<8x16xf32> to vector<8x16xbf16>
    %cst_54 = arith.constant dense<0.000000e+00> : vector<8x8xf32>
    %198 = tpu.matmul %196, %197, %cst_54 {dimension_numbers = #tpu.dot_dimension_numbers<[1], [1], [0], [0], [0, 0, 1, 0], [], []>} : vector<8x16xbf16>, vector<8x16xbf16>, vector<8x8xf32> -> vector<8x8xf32>
    %cst_55 = arith.constant 2.500000e-01 : f32
    %199 = vector.broadcast %cst_55 : f32 to vector<8x8xf32>
    %200 = arith.mulf %198, %199 : vector<8x8xf32>
    %201 = arith.mulf %200, %195 : vector<8x8xf32>
    %cst_56 = arith.constant 0.000000e+00 : f32
    %202 = vector.broadcast %cst_56 : f32 to vector<8x1xf32>
    %203 = arith.subf %202, %192 : vector<8x1xf32>
    %cst_57 = arith.constant 8.000000e+01 : f32
    %204 = vector.broadcast %cst_57 : f32 to vector<8x1xf32>
    %205 = arith.minimumf %203, %204 : vector<8x1xf32>
    %206 = math.exp %205 : vector<8x1xf32>
    %cst_58 = arith.constant dense<0.000000e+00> : vector<8xf32>
    %207 = vector.multi_reduction <add>, %201, %cst_58 [1] : vector<8x8xf32> to vector<8xf32>
    %208 = vector.shape_cast %207 : vector<8xf32> to vector<8x1xf32>
    %209 = math.absf %208 : vector<8x1xf32>
    %210 = arith.maximumf %209, %206 : vector<8x1xf32>
    %cst_59 = arith.constant 9.99999997E-7 : f32
    %211 = vector.broadcast %cst_59 : f32 to vector<8x1xf32>
    %212 = arith.addf %210, %211 : vector<8x1xf32>
    %213 = tpu.reciprocal %212 {approx = true} : vector<8x1xf32> -> vector<8x1xf32>
    %214 = vector.broadcast %213 : vector<8x1xf32> to vector<8x8xf32>
    %215 = arith.mulf %201, %214 : vector<8x8xf32>
    %216 = arith.truncf %215 : vector<8x8xf32> to vector<8x8xbf16>
    %cst_60 = arith.constant dense<0.000000e+00> : vector<8x16xf32>
    %217 = tpu.matmul %216, %182, %cst_60 {dimension_numbers = #tpu.dot_dimension_numbers<[1], [0], [0], [1], [0, 0, 1, 1], [], []>} : vector<8x8xbf16>, vector<8x16xbf16>, vector<8x16xf32> -> vector<8x16xf32>
    %cst_61 = arith.constant dense<0.000000e+00> : vector<8xf32>
    %218 = vector.multi_reduction <add>, %217, %cst_61 [1] : vector<8x16xf32> to vector<8xf32>
    %219 = vector.shape_cast %218 : vector<8xf32> to vector<8x1xf32>
    %cst_62 = arith.constant 1.600000e+01 : f32
    %220 = vector.broadcast %cst_62 : f32 to vector<8x1xf32>
    %221 = arith.divf %219, %220 : vector<8x1xf32>
    %222 = vector.broadcast %221 : vector<8x1xf32> to vector<8x16xf32>
    %223 = arith.subf %217, %222 : vector<8x16xf32>
    %224 = arith.mulf %223, %223 : vector<8x16xf32>
    %cst_63 = arith.constant dense<0.000000e+00> : vector<8xf32>
    %225 = vector.multi_reduction <add>, %224, %cst_63 [1] : vector<8x16xf32> to vector<8xf32>
    %226 = vector.shape_cast %225 : vector<8xf32> to vector<8x1xf32>
    %cst_64 = arith.constant 1.600000e+01 : f32
    %227 = vector.broadcast %cst_64 : f32 to vector<8x1xf32>
    %228 = arith.divf %226, %227 : vector<8x1xf32>
    %cst_65 = arith.constant 9.99999974E-6 : f32
    %229 = vector.broadcast %cst_65 : f32 to vector<8x1xf32>
    %230 = arith.addf %228, %229 : vector<8x1xf32>
    %231 = math.rsqrt %230 : vector<8x1xf32>
    %232 = vector.broadcast %231 : vector<8x1xf32> to vector<8x16xf32>
    %233 = arith.mulf %223, %232 : vector<8x16xf32>
    %234 = vector.extract_strided_slice %104 {offsets = [1, 0], sizes = [1, 16], strides = [1, 1]} : vector<4x16xf32> to vector<1x16xf32>
    %235 = vector.broadcast %234 : vector<1x16xf32> to vector<8x16xf32>
    %236 = arith.mulf %233, %235 : vector<8x16xf32>
    %237 = vector.extract_strided_slice %105 {offsets = [0, 16], sizes = [1, 16], strides = [1, 1]} : vector<1x64xf32> to vector<1x16xf32>
    %238 = vector.extract_strided_slice %55 {offsets = [0, 16], sizes = [8, 16], strides = [1, 1]} : vector<8x64xf32> to vector<8x16xf32>
    %239 = vector.broadcast %237 : vector<1x16xf32> to vector<8x16xf32>
    %240 = arith.mulf %239, %238 : vector<8x16xf32>
    %241 = arith.addf %236, %240 : vector<8x16xf32>
    %242 = vector.extract_strided_slice %111 {offsets = [0, 16], sizes = [8, 16], strides = [1, 1]} : vector<8x64xf32> to vector<8x16xf32>
    %243 = arith.mulf %241, %242 : vector<8x16xf32>
    %244 = arith.truncf %243 : vector<8x16xf32> to vector<8x16xbf16>
    %c0_66 = arith.constant 0 : index
    %c0_67 = arith.constant 0 : index
    %c16 = arith.constant 16 : index
    %245 = vector.load %arg8[%c0_66, %c0_67, %c16] : memref<1x8x64xbf16, #tpu.memory_space<vmem>>, vector<1x8x16xbf16>
    %246 = vector.shape_cast %245 : vector<1x8x16xbf16> to vector<8x16xbf16>
    %247 = vector.shape_cast %244 : vector<8x16xbf16> to vector<1x8x16xbf16>
    tpu.vector_store %arg8[%c0_66, %c0_67, %c16], %247 {strides = array<i32>} : memref<1x8x64xbf16, #tpu.memory_space<vmem>>, vector<1x8x16xbf16>,
    %248 = vector.extract_strided_slice %62 {offsets = [0, 32], sizes = [8, 16], strides = [1, 1]} : vector<8x64xf32> to vector<8x16xf32>
    %249 = vector.extract_strided_slice %63 {offsets = [0, 32], sizes = [8, 16], strides = [1, 1]} : vector<8x64xf32> to vector<8x16xf32>
    %250 = vector.extract_strided_slice %6 {offsets = [0, 32], sizes = [8, 16], strides = [1, 1]} : vector<8x64xbf16> to vector<8x16xbf16>
    %251 = vector.extract_strided_slice %99 {offsets = [0, 2], sizes = [8, 1], strides = [1, 1]} : vector<8x4xf32> to vector<8x1xf32>
    %252 = vector.extract_strided_slice %98 {offsets = [0, 2], sizes = [8, 1], strides = [1, 1]} : vector<8x4xf32> to vector<8x1xf32>
    %253 = arith.subf %252, %251 : vector<8x1xf32>
    %cst_68 = arith.constant dense<0.000000e+00> : vector<8x8xf32>
    %254 = tpu.matmul %103, %253, %cst_68 {dimension_numbers = #tpu.dot_dimension_numbers<[1], [1], [0], [0], [0, 0, 1, 0], [], []>} : vector<8x1xf32>, vector<8x1xf32>, vector<8x8xf32> -> vector<8x8xf32>
    %255 = vector.broadcast %251 : vector<8x1xf32> to vector<8x8xf32>
    %256 = arith.addf %255, %254 : vector<8x8xf32>
    %cst_69 = arith.constant -1.000000e+30 : f32
    %257 = vector.broadcast %cst_69 : f32 to vector<8x8xf32>
    %258 = arith.select %102, %256, %257 : vector<8x8xi1>, vector<8x8xf32>
    %cst_70 = arith.constant dense<0xFF800000> : vector<8xf32>
    %259 = vector.multi_reduction <maximumf>, %258, %cst_70 [1] : vector<8x8xf32> to vector<8xf32>
    %260 = vector.shape_cast %259 : vector<8xf32> to vector<8x1xf32>
    %261 = vector.broadcast %260 : vector<8x1xf32> to vector<8x8xf32>
    %262 = arith.subf %258, %261 : vector<8x8xf32>
    %263 = math.exp %262 : vector<8x8xf32>
    %264 = arith.truncf %248 : vector<8x16xf32> to vector<8x16xbf16>
    %265 = arith.truncf %249 : vector<8x16xf32> to vector<8x16xbf16>
    %cst_71 = arith.constant dense<0.000000e+00> : vector<8x8xf32>
    %266 = tpu.matmul %264, %265, %cst_71 {dimension_numbers = #tpu.dot_dimension_numbers<[1], [1], [0], [0], [0, 0, 1, 0], [], []>} : vector<8x16xbf16>, vector<8x16xbf16>, vector<8x8xf32> -> vector<8x8xf32>
    %cst_72 = arith.constant 2.500000e-01 : f32
    %267 = vector.broadcast %cst_72 : f32 to vector<8x8xf32>
    %268 = arith.mulf %266, %267 : vector<8x8xf32>
    %269 = arith.mulf %268, %263 : vector<8x8xf32>
    %cst_73 = arith.constant 0.000000e+00 : f32
    %270 = vector.broadcast %cst_73 : f32 to vector<8x1xf32>
    %271 = arith.subf %270, %260 : vector<8x1xf32>
    %cst_74 = arith.constant 8.000000e+01 : f32
    %272 = vector.broadcast %cst_74 : f32 to vector<8x1xf32>
    %273 = arith.minimumf %271, %272 : vector<8x1xf32>
    %274 = math.exp %273 : vector<8x1xf32>
    %cst_75 = arith.constant dense<0.000000e+00> : vector<8xf32>
    %275 = vector.multi_reduction <add>, %269, %cst_75 [1] : vector<8x8xf32> to vector<8xf32>
    %276 = vector.shape_cast %275 : vector<8xf32> to vector<8x1xf32>
    %277 = math.absf %276 : vector<8x1xf32>
    %278 = arith.maximumf %277, %274 : vector<8x1xf32>
    %cst_76 = arith.constant 9.99999997E-7 : f32
    %279 = vector.broadcast %cst_76 : f32 to vector<8x1xf32>
    %280 = arith.addf %278, %279 : vector<8x1xf32>
    %281 = tpu.reciprocal %280 {approx = true} : vector<8x1xf32> -> vector<8x1xf32>
    %282 = vector.broadcast %281 : vector<8x1xf32> to vector<8x8xf32>
    %283 = arith.mulf %269, %282 : vector<8x8xf32>
    %284 = arith.truncf %283 : vector<8x8xf32> to vector<8x8xbf16>
    %cst_77 = arith.constant dense<0.000000e+00> : vector<8x16xf32>
    %285 = tpu.matmul %284, %250, %cst_77 {dimension_numbers = #tpu.dot_dimension_numbers<[1], [0], [0], [1], [0, 0, 1, 1], [], []>} : vector<8x8xbf16>, vector<8x16xbf16>, vector<8x16xf32> -> vector<8x16xf32>
    %cst_78 = arith.constant dense<0.000000e+00> : vector<8xf32>
    %286 = vector.multi_reduction <add>, %285, %cst_78 [1] : vector<8x16xf32> to vector<8xf32>
    %287 = vector.shape_cast %286 : vector<8xf32> to vector<8x1xf32>
    %cst_79 = arith.constant 1.600000e+01 : f32
    %288 = vector.broadcast %cst_79 : f32 to vector<8x1xf32>
    %289 = arith.divf %287, %288 : vector<8x1xf32>
    %290 = vector.broadcast %289 : vector<8x1xf32> to vector<8x16xf32>
    %291 = arith.subf %285, %290 : vector<8x16xf32>
    %292 = arith.mulf %291, %291 : vector<8x16xf32>
    %cst_80 = arith.constant dense<0.000000e+00> : vector<8xf32>
    %293 = vector.multi_reduction <add>, %292, %cst_80 [1] : vector<8x16xf32> to vector<8xf32>
    %294 = vector.shape_cast %293 : vector<8xf32> to vector<8x1xf32>
    %cst_81 = arith.constant 1.600000e+01 : f32
    %295 = vector.broadcast %cst_81 : f32 to vector<8x1xf32>
    %296 = arith.divf %294, %295 : vector<8x1xf32>
    %cst_82 = arith.constant 9.99999974E-6 : f32
    %297 = vector.broadcast %cst_82 : f32 to vector<8x1xf32>
    %298 = arith.addf %296, %297 : vector<8x1xf32>
    %299 = math.rsqrt %298 : vector<8x1xf32>
    %300 = vector.broadcast %299 : vector<8x1xf32> to vector<8x16xf32>
    %301 = arith.mulf %291, %300 : vector<8x16xf32>
    %302 = vector.extract_strided_slice %104 {offsets = [2, 0], sizes = [1, 16], strides = [1, 1]} : vector<4x16xf32> to vector<1x16xf32>
    %303 = vector.broadcast %302 : vector<1x16xf32> to vector<8x16xf32>
    %304 = arith.mulf %301, %303 : vector<8x16xf32>
    %305 = vector.extract_strided_slice %105 {offsets = [0, 32], sizes = [1, 16], strides = [1, 1]} : vector<1x64xf32> to vector<1x16xf32>
    %306 = vector.extract_strided_slice %55 {offsets = [0, 32], sizes = [8, 16], strides = [1, 1]} : vector<8x64xf32> to vector<8x16xf32>
    %307 = vector.broadcast %305 : vector<1x16xf32> to vector<8x16xf32>
    %308 = arith.mulf %307, %306 : vector<8x16xf32>
    %309 = arith.addf %304, %308 : vector<8x16xf32>
    %310 = vector.extract_strided_slice %111 {offsets = [0, 32], sizes = [8, 16], strides = [1, 1]} : vector<8x64xf32> to vector<8x16xf32>
    %311 = arith.mulf %309, %310 : vector<8x16xf32>
    %312 = arith.truncf %311 : vector<8x16xf32> to vector<8x16xbf16>
    %c0_83 = arith.constant 0 : index
    %c0_84 = arith.constant 0 : index
    %c32 = arith.constant 32 : index
    %313 = vector.load %arg8[%c0_83, %c0_84, %c32] : memref<1x8x64xbf16, #tpu.memory_space<vmem>>, vector<1x8x16xbf16>
    %314 = vector.shape_cast %313 : vector<1x8x16xbf16> to vector<8x16xbf16>
    %315 = vector.shape_cast %312 : vector<8x16xbf16> to vector<1x8x16xbf16>
    tpu.vector_store %arg8[%c0_83, %c0_84, %c32], %315 {strides = array<i32>} : memref<1x8x64xbf16, #tpu.memory_space<vmem>>, vector<1x8x16xbf16>,
    %316 = vector.extract_strided_slice %62 {offsets = [0, 48], sizes = [8, 16], strides = [1, 1]} : vector<8x64xf32> to vector<8x16xf32>
    %317 = vector.extract_strided_slice %63 {offsets = [0, 48], sizes = [8, 16], strides = [1, 1]} : vector<8x64xf32> to vector<8x16xf32>
    %318 = vector.extract_strided_slice %6 {offsets = [0, 48], sizes = [8, 16], strides = [1, 1]} : vector<8x64xbf16> to vector<8x16xbf16>
    %319 = vector.extract_strided_slice %99 {offsets = [0, 3], sizes = [8, 1], strides = [1, 1]} : vector<8x4xf32> to vector<8x1xf32>
    %320 = vector.extract_strided_slice %98 {offsets = [0, 3], sizes = [8, 1], strides = [1, 1]} : vector<8x4xf32> to vector<8x1xf32>
    %321 = arith.subf %320, %319 : vector<8x1xf32>
    %cst_85 = arith.constant dense<0.000000e+00> : vector<8x8xf32>
    %322 = tpu.matmul %103, %321, %cst_85 {dimension_numbers = #tpu.dot_dimension_numbers<[1], [1], [0], [0], [0, 0, 1, 0], [], []>} : vector<8x1xf32>, vector<8x1xf32>, vector<8x8xf32> -> vector<8x8xf32>
    %323 = vector.broadcast %319 : vector<8x1xf32> to vector<8x8xf32>
    %324 = arith.addf %323, %322 : vector<8x8xf32>
    %cst_86 = arith.constant -1.000000e+30 : f32
    %325 = vector.broadcast %cst_86 : f32 to vector<8x8xf32>
    %326 = arith.select %102, %324, %325 : vector<8x8xi1>, vector<8x8xf32>
    %cst_87 = arith.constant dense<0xFF800000> : vector<8xf32>
    %327 = vector.multi_reduction <maximumf>, %326, %cst_87 [1] : vector<8x8xf32> to vector<8xf32>
    %328 = vector.shape_cast %327 : vector<8xf32> to vector<8x1xf32>
    %329 = vector.broadcast %328 : vector<8x1xf32> to vector<8x8xf32>
    %330 = arith.subf %326, %329 : vector<8x8xf32>
    %331 = math.exp %330 : vector<8x8xf32>
    %332 = arith.truncf %316 : vector<8x16xf32> to vector<8x16xbf16>
    %333 = arith.truncf %317 : vector<8x16xf32> to vector<8x16xbf16>
    %cst_88 = arith.constant dense<0.000000e+00> : vector<8x8xf32>
    %334 = tpu.matmul %332, %333, %cst_88 {dimension_numbers = #tpu.dot_dimension_numbers<[1], [1], [0], [0], [0, 0, 1, 0], [], []>} : vector<8x16xbf16>, vector<8x16xbf16>, vector<8x8xf32> -> vector<8x8xf32>
    %cst_89 = arith.constant 2.500000e-01 : f32
    %335 = vector.broadcast %cst_89 : f32 to vector<8x8xf32>
    %336 = arith.mulf %334, %335 : vector<8x8xf32>
    %337 = arith.mulf %336, %331 : vector<8x8xf32>
    %cst_90 = arith.constant 0.000000e+00 : f32
    %338 = vector.broadcast %cst_90 : f32 to vector<8x1xf32>
    %339 = arith.subf %338, %328 : vector<8x1xf32>
    %cst_91 = arith.constant 8.000000e+01 : f32
    %340 = vector.broadcast %cst_91 : f32 to vector<8x1xf32>
    %341 = arith.minimumf %339, %340 : vector<8x1xf32>
    %342 = math.exp %341 : vector<8x1xf32>
    %cst_92 = arith.constant dense<0.000000e+00> : vector<8xf32>
    %343 = vector.multi_reduction <add>, %337, %cst_92 [1] : vector<8x8xf32> to vector<8xf32>
    %344 = vector.shape_cast %343 : vector<8xf32> to vector<8x1xf32>
    %345 = math.absf %344 : vector<8x1xf32>
    %346 = arith.maximumf %345, %342 : vector<8x1xf32>
    %cst_93 = arith.constant 9.99999997E-7 : f32
    %347 = vector.broadcast %cst_93 : f32 to vector<8x1xf32>
    %348 = arith.addf %346, %347 : vector<8x1xf32>
    %349 = tpu.reciprocal %348 {approx = true} : vector<8x1xf32> -> vector<8x1xf32>
    %350 = vector.broadcast %349 : vector<8x1xf32> to vector<8x8xf32>
    %351 = arith.mulf %337, %350 : vector<8x8xf32>
    %352 = arith.truncf %351 : vector<8x8xf32> to vector<8x8xbf16>
    %cst_94 = arith.constant dense<0.000000e+00> : vector<8x16xf32>
    %353 = tpu.matmul %352, %318, %cst_94 {dimension_numbers = #tpu.dot_dimension_numbers<[1], [0], [0], [1], [0, 0, 1, 1], [], []>} : vector<8x8xbf16>, vector<8x16xbf16>, vector<8x16xf32> -> vector<8x16xf32>
    %cst_95 = arith.constant dense<0.000000e+00> : vector<8xf32>
    %354 = vector.multi_reduction <add>, %353, %cst_95 [1] : vector<8x16xf32> to vector<8xf32>
    %355 = vector.shape_cast %354 : vector<8xf32> to vector<8x1xf32>
    %cst_96 = arith.constant 1.600000e+01 : f32
    %356 = vector.broadcast %cst_96 : f32 to vector<8x1xf32>
    %357 = arith.divf %355, %356 : vector<8x1xf32>
    %358 = vector.broadcast %357 : vector<8x1xf32> to vector<8x16xf32>
    %359 = arith.subf %353, %358 : vector<8x16xf32>
    %360 = arith.mulf %359, %359 : vector<8x16xf32>
    %cst_97 = arith.constant dense<0.000000e+00> : vector<8xf32>
    %361 = vector.multi_reduction <add>, %360, %cst_97 [1] : vector<8x16xf32> to vector<8xf32>
    %362 = vector.shape_cast %361 : vector<8xf32> to vector<8x1xf32>
    %cst_98 = arith.constant 1.600000e+01 : f32
    %363 = vector.broadcast %cst_98 : f32 to vector<8x1xf32>
    %364 = arith.divf %362, %363 : vector<8x1xf32>
    %cst_99 = arith.constant 9.99999974E-6 : f32
    %365 = vector.broadcast %cst_99 : f32 to vector<8x1xf32>
    %366 = arith.addf %364, %365 : vector<8x1xf32>
    %367 = math.rsqrt %366 : vector<8x1xf32>
    %368 = vector.broadcast %367 : vector<8x1xf32> to vector<8x16xf32>
    %369 = arith.mulf %359, %368 : vector<8x16xf32>
    %370 = vector.extract_strided_slice %104 {offsets = [3, 0], sizes = [1, 16], strides = [1, 1]} : vector<4x16xf32> to vector<1x16xf32>
    %371 = vector.broadcast %370 : vector<1x16xf32> to vector<8x16xf32>
    %372 = arith.mulf %369, %371 : vector<8x16xf32>
    %373 = vector.extract_strided_slice %105 {offsets = [0, 48], sizes = [1, 16], strides = [1, 1]} : vector<1x64xf32> to vector<1x16xf32>
    %374 = vector.extract_strided_slice %55 {offsets = [0, 48], sizes = [8, 16], strides = [1, 1]} : vector<8x64xf32> to vector<8x16xf32>
    %375 = vector.broadcast %373 : vector<1x16xf32> to vector<8x16xf32>
    %376 = arith.mulf %375, %374 : vector<8x16xf32>
    %377 = arith.addf %372, %376 : vector<8x16xf32>
    %378 = vector.extract_strided_slice %111 {offsets = [0, 48], sizes = [8, 16], strides = [1, 1]} : vector<8x64xf32> to vector<8x16xf32>
    %379 = arith.mulf %377, %378 : vector<8x16xf32>
    %380 = arith.truncf %379 : vector<8x16xf32> to vector<8x16xbf16>
    %c0_100 = arith.constant 0 : index
    %c0_101 = arith.constant 0 : index
    %c48 = arith.constant 48 : index
    %381 = vector.load %arg8[%c0_100, %c0_101, %c48] : memref<1x8x64xbf16, #tpu.memory_space<vmem>>, vector<1x8x16xbf16>
    %382 = vector.shape_cast %381 : vector<1x8x16xbf16> to vector<8x16xbf16>
    %383 = vector.shape_cast %380 : vector<8x16xbf16> to vector<1x8x16xbf16>
    tpu.vector_store %arg8[%c0_100, %c0_101, %c48], %383 {strides = array<i32>} : memref<1x8x64xbf16, #tpu.memory_space<vmem>>, vector<1x8x16xbf16>,
    return
  }
  func.func @transform_0(%arg0: i32) -> (i32, i32, i32) {
    %c0_i32 = arith.constant 0 : i32
    %c0_i32_0 = arith.constant 0 : i32
    %c0_i32_1 = arith.constant 0 : i32
    return %arg0, %c0_i32, %c0_i32_0 : i32, i32, i32
  }
  func.func @transform_1(%arg0: i32) -> (i32, i32) {
    %c0_i32 = arith.constant 0 : i32
    %c0_i32_0 = arith.constant 0 : i32
    %c0_i32_1 = arith.constant 0 : i32
    return %c0_i32, %c0_i32_0 : i32, i32
  }
  func.func @transform_2(%arg0: i32) -> (i32, i32) {
    %c0_i32 = arith.constant 0 : i32
    %c0_i32_0 = arith.constant 0 : i32
    %c0_i32_1 = arith.constant 0 : i32
    return %c0_i32, %c0_i32_0 : i32, i32
  }
  func.func @transform_3(%arg0: i32) -> (i32, i32) {
    %c0_i32 = arith.constant 0 : i32
    %c0_i32_0 = arith.constant 0 : i32
    %c0_i32_1 = arith.constant 0 : i32
    return %c0_i32, %c0_i32_0 : i32, i32
  }
  func.func @transform_4(%arg0: i32) -> (i32, i32) {
    %c0_i32 = arith.constant 0 : i32
    %c0_i32_0 = arith.constant 0 : i32
    %c0_i32_1 = arith.constant 0 : i32
    return %c0_i32, %c0_i32_0 : i32, i32
  }
  func.func @transform_5(%arg0: i32) -> (i32, i32) {
    %c0_i32 = arith.constant 0 : i32
    %c0_i32_0 = arith.constant 0 : i32
    %c0_i32_1 = arith.constant 0 : i32
    return %c0_i32, %c0_i32_0 : i32, i32
  }
  func.func @transform_6(%arg0: i32) -> (i32, i32) {
    %c0_i32 = arith.constant 0 : i32
    %c0_i32_0 = arith.constant 0 : i32
    %c0_i32_1 = arith.constant 0 : i32
    return %c0_i32, %c0_i32_0 : i32, i32
  }
  func.func @transform_7(%arg0: i32) -> (i32, i32, i32) {
    %c0_i32 = arith.constant 0 : i32
    %c0_i32_0 = arith.constant 0 : i32
    %c0_i32_1 = arith.constant 0 : i32
    return %arg0, %c0_i32, %c0_i32_0 : i32, i32, i32
  }
}

module attributes {stable_mosaic.version = 11 : i64} {
  func.func @_matmul_kernel(%arg0: i32, %arg1: i32, %arg2: i32, %arg3: memref<16x64xbf16, #tpu.memory_space<vmem>>, %arg4: memref<64x32xbf16, #tpu.memory_space<vmem>>, %arg5: memref<16x32xbf16, #tpu.memory_space<vmem>>, %arg6: memref<16x32xbf16, #tpu.memory_space<vmem>>, %arg7: memref<16x32xf32, #tpu.memory_space<vmem>>) attributes {dimension_semantics = [#tpu.dimension_semantics<parallel>, #tpu.dimension_semantics<parallel>, #tpu.dimension_semantics<arbitrary>], iteration_bounds = array<i64: 1, 1, 1>, scalar_prefetch = 0 : i64, scratch_operands = 1 : i64, tpu.core_type = #tpu.core_type<tc>, window_params = [{transform_indices = @transform_0, window_bounds = array<i64: 16, 64>}, {transform_indices = @transform_1, window_bounds = array<i64: 64, 32>}, {transform_indices = @transform_2, window_bounds = array<i64: 16, 32>}, {transform_indices = @transform_3, window_bounds = array<i64: 16, 32>}]} {
    %c0_i32 = arith.constant 0 : i32
    %0 = arith.cmpi eq, %arg2, %c0_i32 : i32
    %1 = arith.extui %0 : i1 to i32
    %c0_i32_0 = arith.constant 0 : i32
    %2 = arith.cmpi ne, %1, %c0_i32_0 : i32
    scf.if %2 {
      %cst_10 = arith.constant 0.000000e+00 : f32
      %12 = vector.broadcast %cst_10 : f32 to vector<16x32xf32>
      %c0_11 = arith.constant 0 : index
      %c0_12 = arith.constant 0 : index
      %13 = vector.load %arg7[%c0_11, %c0_12] : memref<16x32xf32, #tpu.memory_space<vmem>>, vector<16x32xf32>
      tpu.vector_store %arg7[%c0_11, %c0_12], %12 {strides = array<i32>} : memref<16x32xf32, #tpu.memory_space<vmem>>, vector<16x32xf32>,
    } else {
    }
    %c0 = arith.constant 0 : index
    %c0_1 = arith.constant 0 : index
    %3 = vector.load %arg7[%c0, %c0_1] : memref<16x32xf32, #tpu.memory_space<vmem>>, vector<16x32xf32>
    %c0_2 = arith.constant 0 : index
    %c0_3 = arith.constant 0 : index
    %4 = vector.load %arg3[%c0_2, %c0_3] : memref<16x64xbf16, #tpu.memory_space<vmem>>, vector<16x64xbf16>
    %c0_4 = arith.constant 0 : index
    %c0_5 = arith.constant 0 : index
    %5 = vector.load %arg4[%c0_4, %c0_5] : memref<64x32xbf16, #tpu.memory_space<vmem>>, vector<64x32xbf16>
    %cst = arith.constant dense<0.000000e+00> : vector<16x32xf32>
    %6 = tpu.matmul %4, %5, %cst {dimension_numbers = #tpu.dot_dimension_numbers<[1], [0], [0], [1], [0, 0, 1, 1], [], []>} : vector<16x64xbf16>, vector<64x32xbf16>, vector<16x32xf32> -> vector<16x32xf32>
    %7 = arith.addf %3, %6 : vector<16x32xf32>
    %c0_6 = arith.constant 0 : index
    %c0_7 = arith.constant 0 : index
    %8 = vector.load %arg7[%c0_6, %c0_7] : memref<16x32xf32, #tpu.memory_space<vmem>>, vector<16x32xf32>
    tpu.vector_store %arg7[%c0_6, %c0_7], %7 {strides = array<i32>} : memref<16x32xf32, #tpu.memory_space<vmem>>, vector<16x32xf32>,
    %c0_i32_8 = arith.constant 0 : i32
    %9 = arith.cmpi eq, %arg2, %c0_i32_8 : i32
    %10 = arith.extui %9 : i1 to i32
    %c0_i32_9 = arith.constant 0 : i32
    %11 = arith.cmpi ne, %10, %c0_i32_9 : i32
    scf.if %11 {
      %c0_10 = arith.constant 0 : index
      %c0_11 = arith.constant 0 : index
      %12 = vector.load %arg7[%c0_10, %c0_11] : memref<16x32xf32, #tpu.memory_space<vmem>>, vector<16x32xf32>
      %c0_12 = arith.constant 0 : index
      %c0_13 = arith.constant 0 : index
      %13 = vector.load %arg5[%c0_12, %c0_13] : memref<16x32xbf16, #tpu.memory_space<vmem>>, vector<16x32xbf16>
      %14 = arith.extf %13 : vector<16x32xbf16> to vector<16x32xf32>
      %15 = arith.addf %12, %14 : vector<16x32xf32>
      %16 = arith.truncf %15 : vector<16x32xf32> to vector<16x32xbf16>
      %c0_14 = arith.constant 0 : index
      %c0_15 = arith.constant 0 : index
      %17 = vector.load %arg6[%c0_14, %c0_15] : memref<16x32xbf16, #tpu.memory_space<vmem>>, vector<16x32xbf16>
      tpu.vector_store %arg6[%c0_14, %c0_15], %16 {strides = array<i32>} : memref<16x32xbf16, #tpu.memory_space<vmem>>, vector<16x32xbf16>,
    } else {
    }
    return
  }
  func.func @transform_0(%arg0: i32, %arg1: i32, %arg2: i32) -> (i32, i32) {
    %c0_i32 = arith.constant 0 : i32
    return %arg0, %arg2 : i32, i32
  }
  func.func @transform_1(%arg0: i32, %arg1: i32, %arg2: i32) -> (i32, i32) {
    %c0_i32 = arith.constant 0 : i32
    return %arg2, %arg1 : i32, i32
  }
  func.func @transform_2(%arg0: i32, %arg1: i32, %arg2: i32) -> (i32, i32) {
    %c0_i32 = arith.constant 0 : i32
    return %arg0, %arg1 : i32, i32
  }
  func.func @transform_3(%arg0: i32, %arg1: i32, %arg2: i32) -> (i32, i32) {
    %c0_i32 = arith.constant 0 : i32
    return %arg0, %arg1 : i32, i32
  }
}

module attributes {stable_mosaic.version = 11 : i64} {
  func.func @_ln_head_kernel(%arg0: i32, %arg1: memref<1x8x32xbf16, #tpu.memory_space<vmem>>, %arg2: memref<1x32xf32, #tpu.memory_space<vmem>>, %arg3: memref<1x32xf32, #tpu.memory_space<vmem>>, %arg4: memref<256x128xbf16, #tpu.memory_space<vmem>>, %arg5: memref<1x128xf32, #tpu.memory_space<vmem>>, %arg6: memref<1x1x128xf32, #tpu.memory_space<vmem>>) attributes {dimension_semantics = [#tpu.dimension_semantics<parallel>], iteration_bounds = array<i64: 2>, scalar_prefetch = 0 : i64, scratch_operands = 0 : i64, tpu.core_type = #tpu.core_type<tc>, window_params = [{transform_indices = @transform_0, window_bounds = array<i64: 1, 8, 32>}, {pipeline_mode = #tpu.pipeline_mode<synchronous>, transform_indices = @transform_1, window_bounds = array<i64: 1, 32>}, {pipeline_mode = #tpu.pipeline_mode<synchronous>, transform_indices = @transform_2, window_bounds = array<i64: 1, 32>}, {pipeline_mode = #tpu.pipeline_mode<synchronous>, transform_indices = @transform_3, window_bounds = array<i64: 256, 128>}, {pipeline_mode = #tpu.pipeline_mode<synchronous>, transform_indices = @transform_4, window_bounds = array<i64: 1, 128>}, {transform_indices = @transform_5, window_bounds = array<i64: 1, 1, 128>}]} {
    %c0 = arith.constant 0 : index
    %c0_0 = arith.constant 0 : index
    %c0_1 = arith.constant 0 : index
    %0 = vector.load %arg1[%c0, %c0_0, %c0_1] : memref<1x8x32xbf16, #tpu.memory_space<vmem>>, vector<1x8x32xbf16>
    %1 = vector.shape_cast %0 : vector<1x8x32xbf16> to vector<8x32xbf16>
    %2 = arith.extf %1 : vector<8x32xbf16> to vector<8x32xf32>
    %cst = arith.constant dense<0.000000e+00> : vector<8xf32>
    %3 = vector.multi_reduction <add>, %2, %cst [1] : vector<8x32xf32> to vector<8xf32>
    %4 = vector.shape_cast %3 : vector<8xf32> to vector<8x1xf32>
    %cst_2 = arith.constant 3.200000e+01 : f32
    %5 = vector.broadcast %cst_2 : f32 to vector<8x1xf32>
    %6 = arith.divf %4, %5 : vector<8x1xf32>
    %7 = vector.broadcast %6 : vector<8x1xf32> to vector<8x32xf32>
    %8 = arith.subf %2, %7 : vector<8x32xf32>
    %9 = arith.mulf %8, %8 : vector<8x32xf32>
    %cst_3 = arith.constant dense<0.000000e+00> : vector<8xf32>
    %10 = vector.multi_reduction <add>, %9, %cst_3 [1] : vector<8x32xf32> to vector<8xf32>
    %11 = vector.shape_cast %10 : vector<8xf32> to vector<8x1xf32>
    %cst_4 = arith.constant 3.200000e+01 : f32
    %12 = vector.broadcast %cst_4 : f32 to vector<8x1xf32>
    %13 = arith.divf %11, %12 : vector<8x1xf32>
    %cst_5 = arith.constant 9.99999974E-6 : f32
    %14 = vector.broadcast %cst_5 : f32 to vector<8x1xf32>
    %15 = arith.addf %13, %14 : vector<8x1xf32>
    %16 = math.rsqrt %15 : vector<8x1xf32>
    %17 = vector.broadcast %16 : vector<8x1xf32> to vector<8x32xf32>
    %18 = arith.mulf %8, %17 : vector<8x32xf32>
    %c0_6 = arith.constant 0 : index
    %c0_7 = arith.constant 0 : index
    %19 = vector.load %arg2[%c0_6, %c0_7] : memref<1x32xf32, #tpu.memory_space<vmem>>, vector<1x32xf32>
    %20 = vector.broadcast %19 : vector<1x32xf32> to vector<8x32xf32>
    %21 = arith.mulf %18, %20 : vector<8x32xf32>
    %c0_8 = arith.constant 0 : index
    %c0_9 = arith.constant 0 : index
    %22 = vector.load %arg3[%c0_8, %c0_9] : memref<1x32xf32, #tpu.memory_space<vmem>>, vector<1x32xf32>
    %23 = vector.broadcast %22 : vector<1x32xf32> to vector<8x32xf32>
    %24 = arith.addf %21, %23 : vector<8x32xf32>
    %25 = arith.truncf %24 : vector<8x32xf32> to vector<8x32xbf16>
    %c0_10 = arith.constant 0 : index
    %c0_11 = arith.constant 0 : index
    %26 = vector.load %arg5[%c0_10, %c0_11] : memref<1x128xf32, #tpu.memory_space<vmem>>, vector<1x128xf32>
    %27 = vector.extract_strided_slice %25 {offsets = [0, 0], sizes = [1, 32], strides = [1, 1]} : vector<8x32xbf16> to vector<1x32xbf16>
    %c0_12 = arith.constant 0 : index
    %c0_13 = arith.constant 0 : index
    %28 = vector.load %arg4[%c0_12, %c0_13] : memref<256x128xbf16, #tpu.memory_space<vmem>>, vector<32x128xbf16>
    %cst_14 = arith.constant dense<0.000000e+00> : vector<1x128xf32>
    %29 = tpu.matmul %27, %28, %cst_14 {dimension_numbers = #tpu.dot_dimension_numbers<[1], [0], [0], [1], [0, 0, 1, 1], [], []>} : vector<1x32xbf16>, vector<32x128xbf16>, vector<1x128xf32> -> vector<1x128xf32>
    %30 = arith.addf %26, %29 : vector<1x128xf32>
    %31 = vector.extract_strided_slice %25 {offsets = [1, 0], sizes = [1, 32], strides = [1, 1]} : vector<8x32xbf16> to vector<1x32xbf16>
    %c32 = arith.constant 32 : index
    %c0_15 = arith.constant 0 : index
    %32 = vector.load %arg4[%c32, %c0_15] : memref<256x128xbf16, #tpu.memory_space<vmem>>, vector<32x128xbf16>
    %cst_16 = arith.constant dense<0.000000e+00> : vector<1x128xf32>
    %33 = tpu.matmul %31, %32, %cst_16 {dimension_numbers = #tpu.dot_dimension_numbers<[1], [0], [0], [1], [0, 0, 1, 1], [], []>} : vector<1x32xbf16>, vector<32x128xbf16>, vector<1x128xf32> -> vector<1x128xf32>
    %34 = arith.addf %30, %33 : vector<1x128xf32>
    %35 = vector.extract_strided_slice %25 {offsets = [2, 0], sizes = [1, 32], strides = [1, 1]} : vector<8x32xbf16> to vector<1x32xbf16>
    %c64 = arith.constant 64 : index
    %c0_17 = arith.constant 0 : index
    %36 = vector.load %arg4[%c64, %c0_17] : memref<256x128xbf16, #tpu.memory_space<vmem>>, vector<32x128xbf16>
    %cst_18 = arith.constant dense<0.000000e+00> : vector<1x128xf32>
    %37 = tpu.matmul %35, %36, %cst_18 {dimension_numbers = #tpu.dot_dimension_numbers<[1], [0], [0], [1], [0, 0, 1, 1], [], []>} : vector<1x32xbf16>, vector<32x128xbf16>, vector<1x128xf32> -> vector<1x128xf32>
    %38 = arith.addf %34, %37 : vector<1x128xf32>
    %39 = vector.extract_strided_slice %25 {offsets = [3, 0], sizes = [1, 32], strides = [1, 1]} : vector<8x32xbf16> to vector<1x32xbf16>
    %c96 = arith.constant 96 : index
    %c0_19 = arith.constant 0 : index
    %40 = vector.load %arg4[%c96, %c0_19] : memref<256x128xbf16, #tpu.memory_space<vmem>>, vector<32x128xbf16>
    %cst_20 = arith.constant dense<0.000000e+00> : vector<1x128xf32>
    %41 = tpu.matmul %39, %40, %cst_20 {dimension_numbers = #tpu.dot_dimension_numbers<[1], [0], [0], [1], [0, 0, 1, 1], [], []>} : vector<1x32xbf16>, vector<32x128xbf16>, vector<1x128xf32> -> vector<1x128xf32>
    %42 = arith.addf %38, %41 : vector<1x128xf32>
    %43 = vector.extract_strided_slice %25 {offsets = [4, 0], sizes = [1, 32], strides = [1, 1]} : vector<8x32xbf16> to vector<1x32xbf16>
    %c128 = arith.constant 128 : index
    %c0_21 = arith.constant 0 : index
    %44 = vector.load %arg4[%c128, %c0_21] : memref<256x128xbf16, #tpu.memory_space<vmem>>, vector<32x128xbf16>
    %cst_22 = arith.constant dense<0.000000e+00> : vector<1x128xf32>
    %45 = tpu.matmul %43, %44, %cst_22 {dimension_numbers = #tpu.dot_dimension_numbers<[1], [0], [0], [1], [0, 0, 1, 1], [], []>} : vector<1x32xbf16>, vector<32x128xbf16>, vector<1x128xf32> -> vector<1x128xf32>
    %46 = arith.addf %42, %45 : vector<1x128xf32>
    %47 = vector.extract_strided_slice %25 {offsets = [5, 0], sizes = [1, 32], strides = [1, 1]} : vector<8x32xbf16> to vector<1x32xbf16>
    %c160 = arith.constant 160 : index
    %c0_23 = arith.constant 0 : index
    %48 = vector.load %arg4[%c160, %c0_23] : memref<256x128xbf16, #tpu.memory_space<vmem>>, vector<32x128xbf16>
    %cst_24 = arith.constant dense<0.000000e+00> : vector<1x128xf32>
    %49 = tpu.matmul %47, %48, %cst_24 {dimension_numbers = #tpu.dot_dimension_numbers<[1], [0], [0], [1], [0, 0, 1, 1], [], []>} : vector<1x32xbf16>, vector<32x128xbf16>, vector<1x128xf32> -> vector<1x128xf32>
    %50 = arith.addf %46, %49 : vector<1x128xf32>
    %51 = vector.extract_strided_slice %25 {offsets = [6, 0], sizes = [1, 32], strides = [1, 1]} : vector<8x32xbf16> to vector<1x32xbf16>
    %c192 = arith.constant 192 : index
    %c0_25 = arith.constant 0 : index
    %52 = vector.load %arg4[%c192, %c0_25] : memref<256x128xbf16, #tpu.memory_space<vmem>>, vector<32x128xbf16>
    %cst_26 = arith.constant dense<0.000000e+00> : vector<1x128xf32>
    %53 = tpu.matmul %51, %52, %cst_26 {dimension_numbers = #tpu.dot_dimension_numbers<[1], [0], [0], [1], [0, 0, 1, 1], [], []>} : vector<1x32xbf16>, vector<32x128xbf16>, vector<1x128xf32> -> vector<1x128xf32>
    %54 = arith.addf %50, %53 : vector<1x128xf32>
    %55 = vector.extract_strided_slice %25 {offsets = [7, 0], sizes = [1, 32], strides = [1, 1]} : vector<8x32xbf16> to vector<1x32xbf16>
    %c224 = arith.constant 224 : index
    %c0_27 = arith.constant 0 : index
    %56 = vector.load %arg4[%c224, %c0_27] : memref<256x128xbf16, #tpu.memory_space<vmem>>, vector<32x128xbf16>
    %cst_28 = arith.constant dense<0.000000e+00> : vector<1x128xf32>
    %57 = tpu.matmul %55, %56, %cst_28 {dimension_numbers = #tpu.dot_dimension_numbers<[1], [0], [0], [1], [0, 0, 1, 1], [], []>} : vector<1x32xbf16>, vector<32x128xbf16>, vector<1x128xf32> -> vector<1x128xf32>
    %58 = arith.addf %54, %57 : vector<1x128xf32>
    %59 = arith.negf %58 : vector<1x128xf32>
    %60 = math.exp %59 : vector<1x128xf32>
    %cst_29 = arith.constant 1.000000e+00 : f32
    %61 = vector.broadcast %cst_29 : f32 to vector<1x128xf32>
    %62 = arith.addf %61, %60 : vector<1x128xf32>
    %63 = arith.divf %61, %62 : vector<1x128xf32>
    %c0_30 = arith.constant 0 : index
    %c0_31 = arith.constant 0 : index
    %c0_32 = arith.constant 0 : index
    %64 = vector.load %arg6[%c0_30, %c0_31, %c0_32] : memref<1x1x128xf32, #tpu.memory_space<vmem>>, vector<1x1x128xf32>
    %65 = vector.shape_cast %64 : vector<1x1x128xf32> to vector<1x128xf32>
    %66 = vector.shape_cast %63 : vector<1x128xf32> to vector<1x1x128xf32>
    tpu.vector_store %arg6[%c0_30, %c0_31, %c0_32], %66 {strides = array<i32>} : memref<1x1x128xf32, #tpu.memory_space<vmem>>, vector<1x1x128xf32>,
    return
  }
  func.func @transform_0(%arg0: i32) -> (i32, i32, i32) {
    %c0_i32 = arith.constant 0 : i32
    %c0_i32_0 = arith.constant 0 : i32
    %c0_i32_1 = arith.constant 0 : i32
    return %arg0, %c0_i32, %c0_i32_0 : i32, i32, i32
  }
  func.func @transform_1(%arg0: i32) -> (i32, i32) {
    %c0_i32 = arith.constant 0 : i32
    %c0_i32_0 = arith.constant 0 : i32
    %c0_i32_1 = arith.constant 0 : i32
    return %c0_i32, %c0_i32_0 : i32, i32
  }
  func.func @transform_2(%arg0: i32) -> (i32, i32) {
    %c0_i32 = arith.constant 0 : i32
    %c0_i32_0 = arith.constant 0 : i32
    %c0_i32_1 = arith.constant 0 : i32
    return %c0_i32, %c0_i32_0 : i32, i32
  }
  func.func @transform_3(%arg0: i32) -> (i32, i32) {
    %c0_i32 = arith.constant 0 : i32
    %c0_i32_0 = arith.constant 0 : i32
    %c0_i32_1 = arith.constant 0 : i32
    return %c0_i32, %c0_i32_0 : i32, i32
  }
  func.func @transform_4(%arg0: i32) -> (i32, i32) {
    %c0_i32 = arith.constant 0 : i32
    %c0_i32_0 = arith.constant 0 : i32
    %c0_i32_1 = arith.constant 0 : i32
    return %c0_i32, %c0_i32_0 : i32, i32
  }
  func.func @transform_5(%arg0: i32) -> (i32, i32, i32) {
    %c0_i32 = arith.constant 0 : i32
    %c0_i32_0 = arith.constant 0 : i32
    %c0_i32_1 = arith.constant 0 : i32
    return %arg0, %c0_i32, %c0_i32_0 : i32, i32, i32
  }
}

module attributes {stable_mosaic.version = 11 : i64} {
  func.func @_mlstm_block_kernel(%arg0: i32, %arg1: memref<1x8x512xbf16, #tpu.memory_space<vmem>>, %arg2: memref<4x64xf32, #tpu.memory_space<vmem>>, %arg3: memref<1x64xf32, #tpu.memory_space<vmem>>, %arg4: memref<64x384xbf16, #tpu.memory_space<vmem>>, %arg5: memref<1x384xf32, #tpu.memory_space<vmem>>, %arg6: memref<4x16xf32, #tpu.memory_space<vmem>>, %arg7: memref<1x64xf32, #tpu.memory_space<vmem>>, %arg8: memref<1x8x64xbf16, #tpu.memory_space<vmem>>) attributes {dimension_semantics = [#tpu.dimension_semantics<parallel>], iteration_bounds = array<i64: 2>, scalar_prefetch = 0 : i64, scratch_operands = 0 : i64, tpu.core_type = #tpu.core_type<tc>, window_params = [{transform_indices = @transform_0, window_bounds = array<i64: 1, 8, 512>}, {pipeline_mode = #tpu.pipeline_mode<synchronous>, transform_indices = @transform_1, window_bounds = array<i64: 4, 64>}, {pipeline_mode = #tpu.pipeline_mode<synchronous>, transform_indices = @transform_2, window_bounds = array<i64: 1, 64>}, {pipeline_mode = #tpu.pipeline_mode<synchronous>, transform_indices = @transform_3, window_bounds = array<i64: 64, 384>}, {pipeline_mode = #tpu.pipeline_mode<synchronous>, transform_indices = @transform_4, window_bounds = array<i64: 1, 384>}, {pipeline_mode = #tpu.pipeline_mode<synchronous>, transform_indices = @transform_5, window_bounds = array<i64: 4, 16>}, {pipeline_mode = #tpu.pipeline_mode<synchronous>, transform_indices = @transform_6, window_bounds = array<i64: 1, 64>}, {transform_indices = @transform_7, window_bounds = array<i64: 1, 8, 64>}]} {
    %c0 = arith.constant 0 : index
    %c0_0 = arith.constant 0 : index
    %c0_1 = arith.constant 0 : index
    %0 = vector.load %arg1[%c0, %c0_0, %c0_1] : memref<1x8x512xbf16, #tpu.memory_space<vmem>>, vector<1x8x512xbf16>
    %1 = vector.shape_cast %0 : vector<1x8x512xbf16> to vector<8x512xbf16>
    %2 = vector.extract_strided_slice %1 {offsets = [0, 0], sizes = [8, 64], strides = [1, 1]} : vector<8x512xbf16> to vector<8x64xbf16>
    %3 = arith.extf %2 : vector<8x64xbf16> to vector<8x64xf32>
    %4 = vector.extract_strided_slice %1 {offsets = [0, 128], sizes = [8, 64], strides = [1, 1]} : vector<8x512xbf16> to vector<8x64xbf16>
    %5 = arith.extf %4 : vector<8x64xbf16> to vector<8x64xf32>
    %6 = vector.extract_strided_slice %1 {offsets = [0, 256], sizes = [8, 64], strides = [1, 1]} : vector<8x512xbf16> to vector<8x64xbf16>
    %7 = vector.extract_strided_slice %1 {offsets = [0, 384], sizes = [8, 128], strides = [1, 1]} : vector<8x512xbf16> to vector<8x128xbf16>
    %8 = arith.extf %7 : vector<8x128xbf16> to vector<8x128xf32>
    %9 = tpu.iota {dimensions = array<i32: 0>} : vector<8x1xi32>
    %c0_2 = arith.constant 0 : index
    %c0_3 = arith.constant 0 : index
    %10 = vector.load %arg2[%c0_2, %c0_3] : memref<4x64xf32, #tpu.memory_space<vmem>>, vector<4x64xf32>
    %11 = vector.extract_strided_slice %10 {offsets = [3, 0], sizes = [1, 64], strides = [1, 1]} : vector<4x64xf32> to vector<1x64xf32>
    %12 = vector.broadcast %11 : vector<1x64xf32> to vector<8x64xf32>
    %13 = arith.mulf %3, %12 : vector<8x64xf32>
    %c1_i32 = arith.constant 1 : i32
    %14 = tpu.dynamic_rotate %3 by %c1_i32 dim 0 : vector<8x64xf32>, i32 -> vector<8x64xf32>
    %c1_i32_4 = arith.constant 1 : i32
    %15 = vector.broadcast %c1_i32_4 : i32 to vector<8x1xi32>
    %16 = arith.cmpi sge, %9, %15 : vector<8x1xi32>
    %cst = arith.constant 0.000000e+00 : f32
    %17 = vector.shape_cast %16 : vector<8x1xi1> to vector<8x1xi1>
    %18 = vector.broadcast %17 : vector<8x1xi1> to vector<8x64xi1>
    %19 = vector.broadcast %cst : f32 to vector<8x64xf32>
    %20 = arith.select %18, %14, %19 : vector<8x64xi1>, vector<8x64xf32>
    %21 = vector.extract_strided_slice %10 {offsets = [2, 0], sizes = [1, 64], strides = [1, 1]} : vector<4x64xf32> to vector<1x64xf32>
    %22 = vector.broadcast %21 : vector<1x64xf32> to vector<8x64xf32>
    %23 = arith.mulf %20, %22 : vector<8x64xf32>
    %24 = arith.addf %13, %23 : vector<8x64xf32>
    %c2_i32 = arith.constant 2 : i32
    %25 = tpu.dynamic_rotate %3 by %c2_i32 dim 0 : vector<8x64xf32>, i32 -> vector<8x64xf32>
    %c2_i32_5 = arith.constant 2 : i32
    %26 = vector.broadcast %c2_i32_5 : i32 to vector<8x1xi32>
    %27 = arith.cmpi sge, %9, %26 : vector<8x1xi32>
    %cst_6 = arith.constant 0.000000e+00 : f32
    %28 = vector.shape_cast %27 : vector<8x1xi1> to vector<8x1xi1>
    %29 = vector.broadcast %28 : vector<8x1xi1> to vector<8x64xi1>
    %30 = vector.broadcast %cst_6 : f32 to vector<8x64xf32>
    %31 = arith.select %29, %25, %30 : vector<8x64xi1>, vector<8x64xf32>
    %32 = vector.extract_strided_slice %10 {offsets = [1, 0], sizes = [1, 64], strides = [1, 1]} : vector<4x64xf32> to vector<1x64xf32>
    %33 = vector.broadcast %32 : vector<1x64xf32> to vector<8x64xf32>
    %34 = arith.mulf %31, %33 : vector<8x64xf32>
    %35 = arith.addf %24, %34 : vector<8x64xf32>
    %c3_i32 = arith.constant 3 : i32
    %36 = tpu.dynamic_rotate %3 by %c3_i32 dim 0 : vector<8x64xf32>, i32 -> vector<8x64xf32>
    %c3_i32_7 = arith.constant 3 : i32
    %37 = vector.broadcast %c3_i32_7 : i32 to vector<8x1xi32>
    %38 = arith.cmpi sge, %9, %37 : vector<8x1xi32>
    %cst_8 = arith.constant 0.000000e+00 : f32
    %39 = vector.shape_cast %38 : vector<8x1xi1> to vector<8x1xi1>
    %40 = vector.broadcast %39 : vector<8x1xi1> to vector<8x64xi1>
    %41 = vector.broadcast %cst_8 : f32 to vector<8x64xf32>
    %42 = arith.select %40, %36, %41 : vector<8x64xi1>, vector<8x64xf32>
    %43 = vector.extract_strided_slice %10 {offsets = [0, 0], sizes = [1, 64], strides = [1, 1]} : vector<4x64xf32> to vector<1x64xf32>
    %44 = vector.broadcast %43 : vector<1x64xf32> to vector<8x64xf32>
    %45 = arith.mulf %42, %44 : vector<8x64xf32>
    %46 = arith.addf %35, %45 : vector<8x64xf32>
    %c0_9 = arith.constant 0 : index
    %c0_10 = arith.constant 0 : index
    %47 = vector.load %arg3[%c0_9, %c0_10] : memref<1x64xf32, #tpu.memory_space<vmem>>, vector<1x64xf32>
    %48 = vector.broadcast %47 : vector<1x64xf32> to vector<8x64xf32>
    %49 = arith.addf %46, %48 : vector<8x64xf32>
    %50 = arith.negf %49 : vector<8x64xf32>
    %51 = math.exp %50 : vector<8x64xf32>
    %cst_11 = arith.constant 1.000000e+00 : f32
    %52 = vector.broadcast %cst_11 : f32 to vector<8x64xf32>
    %53 = arith.addf %52, %51 : vector<8x64xf32>
    %54 = arith.divf %52, %53 : vector<8x64xf32>
    %55 = arith.mulf %49, %54 : vector<8x64xf32>
    %56 = arith.truncf %55 : vector<8x64xf32> to vector<8x64xbf16>
    %c0_12 = arith.constant 0 : index
    %c0_13 = arith.constant 0 : index
    %57 = vector.load %arg4[%c0_12, %c0_13] : memref<64x384xbf16, #tpu.memory_space<vmem>>, vector<64x384xbf16>
    %cst_14 = arith.constant dense<0.000000e+00> : vector<8x384xf32>
    %58 = tpu.matmul %56, %57, %cst_14 {dimension_numbers = #tpu.dot_dimension_numbers<[1], [0], [0], [1], [0, 0, 1, 1], [], []>} : vector<8x64xbf16>, vector<64x384xbf16>, vector<8x384xf32> -> vector<8x384xf32>
    %c0_15 = arith.constant 0 : index
    %c0_16 = arith.constant 0 : index
    %59 = vector.load %arg5[%c0_15, %c0_16] : memref<1x384xf32, #tpu.memory_space<vmem>>, vector<1x384xf32>
    %60 = vector.broadcast %59 : vector<1x384xf32> to vector<8x384xf32>
    %61 = arith.addf %58, %60 : vector<8x384xf32>
    %62 = vector.extract_strided_slice %61 {offsets = [0, 0], sizes = [8, 64], strides = [1, 1]} : vector<8x384xf32> to vector<8x64xf32>
    %63 = vector.extract_strided_slice %61 {offsets = [0, 128], sizes = [8, 64], strides = [1, 1]} : vector<8x384xf32> to vector<8x64xf32>
    %64 = vector.extract_strided_slice %61 {offsets = [0, 256], sizes = [8, 128], strides = [1, 1]} : vector<8x384xf32> to vector<8x128xf32>
    %65 = arith.addf %64, %8 : vector<8x128xf32>
    %cst_17 = arith.constant 0.000000e+00 : f32
    %66 = vector.broadcast %cst_17 : f32 to vector<8x128xf32>
    %67 = arith.minimumf %65, %66 : vector<8x128xf32>
    %68 = math.absf %65 : vector<8x128xf32>
    %cst_18 = arith.constant 0.000000e+00 : f32
    %69 = vector.broadcast %cst_18 : f32 to vector<8x128xf32>
    %70 = arith.subf %69, %68 : vector<8x128xf32>
    %71 = math.exp %70 : vector<8x128xf32>
    %72 = math.log1p %71 : vector<8x128xf32>
    %73 = arith.subf %67, %72 : vector<8x128xf32>
    %c1_i32_19 = arith.constant 1 : i32
    %74 = vector.broadcast %c1_i32_19 : i32 to vector<8x1xi32>
    %75 = arith.cmpi sge, %9, %74 : vector<8x1xi32>
    %c1_i32_20 = arith.constant 1 : i32
    %76 = tpu.dynamic_rotate %73 by %c1_i32_20 dim 0 : vector<8x128xf32>, i32 -> vector<8x128xf32>
    %cst_21 = arith.constant 0.000000e+00 : f32
    %77 = vector.shape_cast %75 : vector<8x1xi1> to vector<8x1xi1>
    %78 = vector.broadcast %77 : vector<8x1xi1> to vector<8x128xi1>
    %79 = vector.broadcast %cst_21 : f32 to vector<8x128xf32>
    %80 = arith.select %78, %76, %79 : vector<8x128xi1>, vector<8x128xf32>
    %81 = arith.addf %73, %80 : vector<8x128xf32>
    %c2_i32_22 = arith.constant 2 : i32
    %82 = vector.broadcast %c2_i32_22 : i32 to vector<8x1xi32>
    %83 = arith.cmpi sge, %9, %82 : vector<8x1xi32>
    %c2_i32_23 = arith.constant 2 : i32
    %84 = tpu.dynamic_rotate %81 by %c2_i32_23 dim 0 : vector<8x128xf32>, i32 -> vector<8x128xf32>
    %cst_24 = arith.constant 0.000000e+00 : f32
    %85 = vector.shape_cast %83 : vector<8x1xi1> to vector<8x1xi1>
    %86 = vector.broadcast %85 : vector<8x1xi1> to vector<8x128xi1>
    %87 = vector.broadcast %cst_24 : f32 to vector<8x128xf32>
    %88 = arith.select %86, %84, %87 : vector<8x128xi1>, vector<8x128xf32>
    %89 = arith.addf %81, %88 : vector<8x128xf32>
    %c4_i32 = arith.constant 4 : i32
    %90 = vector.broadcast %c4_i32 : i32 to vector<8x1xi32>
    %91 = arith.cmpi sge, %9, %90 : vector<8x1xi32>
    %c4_i32_25 = arith.constant 4 : i32
    %92 = tpu.dynamic_rotate %89 by %c4_i32_25 dim 0 : vector<8x128xf32>, i32 -> vector<8x128xf32>
    %cst_26 = arith.constant 0.000000e+00 : f32
    %93 = vector.shape_cast %91 : vector<8x1xi1> to vector<8x1xi1>
    %94 = vector.broadcast %93 : vector<8x1xi1> to vector<8x128xi1>
    %95 = vector.broadcast %cst_26 : f32 to vector<8x128xf32>
    %96 = arith.select %94, %92, %95 : vector<8x128xi1>, vector<8x128xf32>
    %97 = arith.addf %89, %96 : vector<8x128xf32>
    %98 = vector.extract_strided_slice %65 {offsets = [0, 0], sizes = [8, 4], strides = [1, 1]} : vector<8x128xf32> to vector<8x4xf32>
    %99 = vector.extract_strided_slice %97 {offsets = [0, 4], sizes = [8, 4], strides = [1, 1]} : vector<8x128xf32> to vector<8x4xf32>
    %100 = tpu.iota {dimensions = array<i32: 0>} : vector<8x8xi32>
    %101 = tpu.iota {dimensions = array<i32: 1>} : vector<8x8xi32>
    %102 = arith.cmpi sle, %101, %100 : vector<8x8xi32>
    %cst_27 = arith.constant 1.000000e+00 : f32
    %103 = vector.broadcast %cst_27 : f32 to vector<8x1xf32>
    %c0_28 = arith.constant 0 : index
    %c0_29 = arith.constant 0 : index
    %104 = vector.load %arg6[%c0_28, %c0_29] : memref<4x16xf32, #tpu.memory_space<vmem>>, vector<4x16xf32>
    %c0_30 = arith.constant 0 : index
    %c0_31 = arith.constant 0 : index
    %105 = vector.load %arg7[%c0_30, %c0_31] : memref<1x64xf32, #tpu.memory_space<vmem>>, vector<1x64xf32>
    %106 = arith.negf %5 : vector<8x64xf32>
    %107 = math.exp %106 : vector<8x64xf32>
    %cst_32 = arith.constant 1.000000e+00 : f32
    %108 = vector.broadcast %cst_32 : f32 to vector<8x64xf32>
    %109 = arith.addf %108, %107 : vector<8x64xf32>
    %110 = arith.divf %108, %109 : vector<8x64xf32>
    %111 = arith.mulf %5, %110 : vector<8x64xf32>
    %112 = vector.extract_strided_slice %62 {offsets = [0, 0], sizes = [8, 16], strides = [1, 1]} : vector<8x64xf32> to vector<8x16xf32>
    %113 = vector.extract_strided_slice %63 {offsets = [0, 0], sizes = [8, 16], strides = [1, 1]} : vector<8x64xf32> to vector<8x16xf32>
    %114 = vector.extract_strided_slice %6 {offsets = [0, 0], sizes = [8, 16], strides = [1, 1]} : vector<8x64xbf16> to vector<8x16xbf16>
    %115 = vector.extract_strided_slice %99 {offsets = [0, 0], sizes = [8, 1], strides = [1, 1]} : vector<8x4xf32> to vector<8x1xf32>
    %116 = vector.extract_strided_slice %98 {offsets = [0, 0], sizes = [8, 1], strides = [1, 1]} : vector<8x4xf32> to vector<8x1xf32>
    %117 = arith.subf %116, %115 : vector<8x1xf32>
    %cst_33 = arith.constant dense<0.000000e+00> : vector<8x8xf32>
    %118 = tpu.matmul %103, %117, %cst_33 {dimension_numbers = #tpu.dot_dimension_numbers<[1], [1], [0], [0], [0, 0, 1, 0], [], []>} : vector<8x1xf32>, vector<8x1xf32>, vector<8x8xf32> -> vector<8x8xf32>
    %119 = vector.broadcast %115 : vector<8x1xf32> to vector<8x8xf32>
    %120 = arith.addf %119, %118 : vector<8x8xf32>
    %cst_34 = arith.constant -1.000000e+30 : f32
    %121 = vector.broadcast %cst_34 : f32 to vector<8x8xf32>
    %122 = arith.select %102, %120, %121 : vector<8x8xi1>, vector<8x8xf32>
    %cst_35 = arith.constant dense<0xFF800000> : vector<8xf32>
    %123 = vector.multi_reduction <maximumf>, %122, %cst_35 [1] : vector<8x8xf32> to vector<8xf32>
    %124 = vector.shape_cast %123 : vector<8xf32> to vector<8x1xf32>
    %125 = vector.broadcast %124 : vector<8x1xf32> to vector<8x8xf32>
    %126 = arith.subf %122, %125 : vector<8x8xf32>
    %127 = math.exp %126 : vector<8x8xf32>
    %128 = arith.truncf %112 : vector<8x16xf32> to vector<8x16xbf16>
    %129 = arith.truncf %113 : vector<8x16xf32> to vector<8x16xbf16>
    %cst_36 = arith.constant dense<0.000000e+00> : vector<8x8xf32>
    %130 = tpu.matmul %128, %129, %cst_36 {dimension_numbers = #tpu.dot_dimension_numbers<[1], [1], [0], [0], [0, 0, 1, 0], [], []>} : vector<8x16xbf16>, vector<8x16xbf16>, vector<8x8xf32> -> vector<8x8xf32>
    %cst_37 = arith.constant 2.500000e-01 : f32
    %131 = vector.broadcast %cst_37 : f32 to vector<8x8xf32>
    %132 = arith.mulf %130, %131 : vector<8x8xf32>
    %133 = arith.mulf %132, %127 : vector<8x8xf32>
    %cst_38 = arith.constant 0.000000e+00 : f32
    %134 = vector.broadcast %cst_38 : f32 to vector<8x1xf32>
    %135 = arith.subf %134, %124 : vector<8x1xf32>
    %cst_39 = arith.constant 8.000000e+01 : f32
    %136 = vector.broadcast %cst_39 : f32 to vector<8x1xf32>
    %137 = arith.minimumf %135, %136 : vector<8x1xf32>
    %138 = math.exp %137 : vector<8x1xf32>
    %cst_40 = arith.constant dense<0.000000e+00> : vector<8xf32>
    %139 = vector.multi_reduction <add>, %133, %cst_40 [1] : vector<8x8xf32> to vector<8xf32>
    %140 = vector.shape_cast %139 : vector<8xf32> to vector<8x1xf32>
    %141 = math.absf %140 : vector<8x1xf32>
    %142 = arith.maximumf %141, %138 : vector<8x1xf32>
    %cst_41 = arith.constant 9.99999997E-7 : f32
    %143 = vector.broadcast %cst_41 : f32 to vector<8x1xf32>
    %144 = arith.addf %142, %143 : vector<8x1xf32>
    %145 = tpu.reciprocal %144 {approx = true} : vector<8x1xf32> -> vector<8x1xf32>
    %146 = vector.broadcast %145 : vector<8x1xf32> to vector<8x8xf32>
    %147 = arith.mulf %133, %146 : vector<8x8xf32>
    %148 = arith.truncf %147 : vector<8x8xf32> to vector<8x8xbf16>
    %cst_42 = arith.constant dense<0.000000e+00> : vector<8x16xf32>
    %149 = tpu.matmul %148, %114, %cst_42 {dimension_numbers = #tpu.dot_dimension_numbers<[1], [0], [0], [1], [0, 0, 1, 1], [], []>} : vector<8x8xbf16>, vector<8x16xbf16>, vector<8x16xf32> -> vector<8x16xf32>
    %cst_43 = arith.constant dense<0.000000e+00> : vector<8xf32>
    %150 = vector.multi_reduction <add>, %149, %cst_43 [1] : vector<8x16xf32> to vector<8xf32>
    %151 = vector.shape_cast %150 : vector<8xf32> to vector<8x1xf32>
    %cst_44 = arith.constant 1.600000e+01 : f32
    %152 = vector.broadcast %cst_44 : f32 to vector<8x1xf32>
    %153 = arith.divf %151, %152 : vector<8x1xf32>
    %154 = vector.broadcast %153 : vector<8x1xf32> to vector<8x16xf32>
    %155 = arith.subf %149, %154 : vector<8x16xf32>
    %156 = arith.mulf %155, %155 : vector<8x16xf32>
    %cst_45 = arith.constant dense<0.000000e+00> : vector<8xf32>
    %157 = vector.multi_reduction <add>, %156, %cst_45 [1] : vector<8x16xf32> to vector<8xf32>
    %158 = vector.shape_cast %157 : vector<8xf32> to vector<8x1xf32>
    %cst_46 = arith.constant 1.600000e+01 : f32
    %159 = vector.broadcast %cst_46 : f32 to vector<8x1xf32>
    %160 = arith.divf %158, %159 : vector<8x1xf32>
    %cst_47 = arith.constant 9.99999974E-6 : f32
    %161 = vector.broadcast %cst_47 : f32 to vector<8x1xf32>
    %162 = arith.addf %160, %161 : vector<8x1xf32>
    %163 = math.rsqrt %162 : vector<8x1xf32>
    %164 = vector.broadcast %163 : vector<8x1xf32> to vector<8x16xf32>
    %165 = arith.mulf %155, %164 : vector<8x16xf32>
    %166 = vector.extract_strided_slice %104 {offsets = [0, 0], sizes = [1, 16], strides = [1, 1]} : vector<4x16xf32> to vector<1x16xf32>
    %167 = vector.broadcast %166 : vector<1x16xf32> to vector<8x16xf32>
    %168 = arith.mulf %165, %167 : vector<8x16xf32>
    %169 = vector.extract_strided_slice %105 {offsets = [0, 0], sizes = [1, 16], strides = [1, 1]} : vector<1x64xf32> to vector<1x16xf32>
    %170 = vector.extract_strided_slice %55 {offsets = [0, 0], sizes = [8, 16], strides = [1, 1]} : vector<8x64xf32> to vector<8x16xf32>
    %171 = vector.broadcast %169 : vector<1x16xf32> to vector<8x16xf32>
    %172 = arith.mulf %171, %170 : vector<8x16xf32>
    %173 = arith.addf %168, %172 : vector<8x16xf32>
    %174 = vector.extract_strided_slice %111 {offsets = [0, 0], sizes = [8, 16], strides = [1, 1]} : vector<8x64xf32> to vector<8x16xf32>
    %175 = arith.mulf %173, %174 : vector<8x16xf32>
    %176 = arith.truncf %175 : vector<8x16xf32> to vector<8x16xbf16>
    %c0_48 = arith.constant 0 : index
    %c0_49 = arith.constant 0 : index
    %c0_50 = arith.constant 0 : index
    %177 = vector.load %arg8[%c0_48, %c0_49, %c0_50] : memref<1x8x64xbf16, #tpu.memory_space<vmem>>, vector<1x8x16xbf16>
    %178 = vector.shape_cast %177 : vector<1x8x16xbf16> to vector<8x16xbf16>
    %179 = vector.shape_cast %176 : vector<8x16xbf16> to vector<1x8x16xbf16>
    tpu.vector_store %arg8[%c0_48, %c0_49, %c0_50], %179 {strides = array<i32>} : memref<1x8x64xbf16, #tpu.memory_space<vmem>>, vector<1x8x16xbf16>,
    %180 = vector.extract_strided_slice %62 {offsets = [0, 16], sizes = [8, 16], strides = [1, 1]} : vector<8x64xf32> to vector<8x16xf32>
    %181 = vector.extract_strided_slice %63 {offsets = [0, 16], sizes = [8, 16], strides = [1, 1]} : vector<8x64xf32> to vector<8x16xf32>
    %182 = vector.extract_strided_slice %6 {offsets = [0, 16], sizes = [8, 16], strides = [1, 1]} : vector<8x64xbf16> to vector<8x16xbf16>
    %183 = vector.extract_strided_slice %99 {offsets = [0, 1], sizes = [8, 1], strides = [1, 1]} : vector<8x4xf32> to vector<8x1xf32>
    %184 = vector.extract_strided_slice %98 {offsets = [0, 1], sizes = [8, 1], strides = [1, 1]} : vector<8x4xf32> to vector<8x1xf32>
    %185 = arith.subf %184, %183 : vector<8x1xf32>
    %cst_51 = arith.constant dense<0.000000e+00> : vector<8x8xf32>
    %186 = tpu.matmul %103, %185, %cst_51 {dimension_numbers = #tpu.dot_dimension_numbers<[1], [1], [0], [0], [0, 0, 1, 0], [], []>} : vector<8x1xf32>, vector<8x1xf32>, vector<8x8xf32> -> vector<8x8xf32>
    %187 = vector.broadcast %183 : vector<8x1xf32> to vector<8x8xf32>
    %188 = arith.addf %187, %186 : vector<8x8xf32>
    %cst_52 = arith.constant -1.000000e+30 : f32
    %189 = vector.broadcast %cst_52 : f32 to vector<8x8xf32>
    %190 = arith.select %102, %188, %189 : vector<8x8xi1>, vector<8x8xf32>
    %cst_53 = arith.constant dense<0xFF800000> : vector<8xf32>
    %191 = vector.multi_reduction <maximumf>, %190, %cst_53 [1] : vector<8x8xf32> to vector<8xf32>
    %192 = vector.shape_cast %191 : vector<8xf32> to vector<8x1xf32>
    %193 = vector.broadcast %192 : vector<8x1xf32> to vector<8x8xf32>
    %194 = arith.subf %190, %193 : vector<8x8xf32>
    %195 = math.exp %194 : vector<8x8xf32>
    %196 = arith.truncf %180 : vector<8x16xf32> to vector<8x16xbf16>
    %197 = arith.truncf %181 : vector<8x16xf32> to vector<8x16xbf16>
    %cst_54 = arith.constant dense<0.000000e+00> : vector<8x8xf32>
    %198 = tpu.matmul %196, %197, %cst_54 {dimension_numbers = #tpu.dot_dimension_numbers<[1], [1], [0], [0], [0, 0, 1, 0], [], []>} : vector<8x16xbf16>, vector<8x16xbf16>, vector<8x8xf32> -> vector<8x8xf32>
    %cst_55 = arith.constant 2.500000e-01 : f32
    %199 = vector.broadcast %cst_55 : f32 to vector<8x8xf32>
    %200 = arith.mulf %198, %199 : vector<8x8xf32>
    %201 = arith.mulf %200, %195 : vector<8x8xf32>
    %cst_56 = arith.constant 0.000000e+00 : f32
    %202 = vector.broadcast %cst_56 : f32 to vector<8x1xf32>
    %203 = arith.subf %202, %192 : vector<8x1xf32>
    %cst_57 = arith.constant 8.000000e+01 : f32
    %204 = vector.broadcast %cst_57 : f32 to vector<8x1xf32>
    %205 = arith.minimumf %203, %204 : vector<8x1xf32>
    %206 = math.exp %205 : vector<8x1xf32>
    %cst_58 = arith.constant dense<0.000000e+00> : vector<8xf32>
    %207 = vector.multi_reduction <add>, %201, %cst_58 [1] : vector<8x8xf32> to vector<8xf32>
    %208 = vector.shape_cast %207 : vector<8xf32> to vector<8x1xf32>
    %209 = math.absf %208 : vector<8x1xf32>
    %210 = arith.maximumf %209, %206 : vector<8x1xf32>
    %cst_59 = arith.constant 9.99999997E-7 : f32
    %211 = vector.broadcast %cst_59 : f32 to vector<8x1xf32>
    %212 = arith.addf %210, %211 : vector<8x1xf32>
    %213 = tpu.reciprocal %212 {approx = true} : vector<8x1xf32> -> vector<8x1xf32>
    %214 = vector.broadcast %213 : vector<8x1xf32> to vector<8x8xf32>
    %215 = arith.mulf %201, %214 : vector<8x8xf32>
    %216 = arith.truncf %215 : vector<8x8xf32> to vector<8x8xbf16>
    %cst_60 = arith.constant dense<0.000000e+00> : vector<8x16xf32>
    %217 = tpu.matmul %216, %182, %cst_60 {dimension_numbers = #tpu.dot_dimension_numbers<[1], [0], [0], [1], [0, 0, 1, 1], [], []>} : vector<8x8xbf16>, vector<8x16xbf16>, vector<8x16xf32> -> vector<8x16xf32>
    %cst_61 = arith.constant dense<0.000000e+00> : vector<8xf32>
    %218 = vector.multi_reduction <add>, %217, %cst_61 [1] : vector<8x16xf32> to vector<8xf32>
    %219 = vector.shape_cast %218 : vector<8xf32> to vector<8x1xf32>
    %cst_62 = arith.constant 1.600000e+01 : f32
    %220 = vector.broadcast %cst_62 : f32 to vector<8x1xf32>
    %221 = arith.divf %219, %220 : vector<8x1xf32>
    %222 = vector.broadcast %221 : vector<8x1xf32> to vector<8x16xf32>
    %223 = arith.subf %217, %222 : vector<8x16xf32>
    %224 = arith.mulf %223, %223 : vector<8x16xf32>
    %cst_63 = arith.constant dense<0.000000e+00> : vector<8xf32>
    %225 = vector.multi_reduction <add>, %224, %cst_63 [1] : vector<8x16xf32> to vector<8xf32>
    %226 = vector.shape_cast %225 : vector<8xf32> to vector<8x1xf32>
    %cst_64 = arith.constant 1.600000e+01 : f32
    %227 = vector.broadcast %cst_64 : f32 to vector<8x1xf32>
    %228 = arith.divf %226, %227 : vector<8x1xf32>
    %cst_65 = arith.constant 9.99999974E-6 : f32
    %229 = vector.broadcast %cst_65 : f32 to vector<8x1xf32>
    %230 = arith.addf %228, %229 : vector<8x1xf32>
    %231 = math.rsqrt %230 : vector<8x1xf32>
    %232 = vector.broadcast %231 : vector<8x1xf32> to vector<8x16xf32>
    %233 = arith.mulf %223, %232 : vector<8x16xf32>
    %234 = vector.extract_strided_slice %104 {offsets = [1, 0], sizes = [1, 16], strides = [1, 1]} : vector<4x16xf32> to vector<1x16xf32>
    %235 = vector.broadcast %234 : vector<1x16xf32> to vector<8x16xf32>
    %236 = arith.mulf %233, %235 : vector<8x16xf32>
    %237 = vector.extract_strided_slice %105 {offsets = [0, 16], sizes = [1, 16], strides = [1, 1]} : vector<1x64xf32> to vector<1x16xf32>
    %238 = vector.extract_strided_slice %55 {offsets = [0, 16], sizes = [8, 16], strides = [1, 1]} : vector<8x64xf32> to vector<8x16xf32>
    %239 = vector.broadcast %237 : vector<1x16xf32> to vector<8x16xf32>
    %240 = arith.mulf %239, %238 : vector<8x16xf32>
    %241 = arith.addf %236, %240 : vector<8x16xf32>
    %242 = vector.extract_strided_slice %111 {offsets = [0, 16], sizes = [8, 16], strides = [1, 1]} : vector<8x64xf32> to vector<8x16xf32>
    %243 = arith.mulf %241, %242 : vector<8x16xf32>
    %244 = arith.truncf %243 : vector<8x16xf32> to vector<8x16xbf16>
    %c0_66 = arith.constant 0 : index
    %c0_67 = arith.constant 0 : index
    %c16 = arith.constant 16 : index
    %245 = vector.load %arg8[%c0_66, %c0_67, %c16] : memref<1x8x64xbf16, #tpu.memory_space<vmem>>, vector<1x8x16xbf16>
    %246 = vector.shape_cast %245 : vector<1x8x16xbf16> to vector<8x16xbf16>
    %247 = vector.shape_cast %244 : vector<8x16xbf16> to vector<1x8x16xbf16>
    tpu.vector_store %arg8[%c0_66, %c0_67, %c16], %247 {strides = array<i32>} : memref<1x8x64xbf16, #tpu.memory_space<vmem>>, vector<1x8x16xbf16>,
    %248 = vector.extract_strided_slice %62 {offsets = [0, 32], sizes = [8, 16], strides = [1, 1]} : vector<8x64xf32> to vector<8x16xf32>
    %249 = vector.extract_strided_slice %63 {offsets = [0, 32], sizes = [8, 16], strides = [1, 1]} : vector<8x64xf32> to vector<8x16xf32>
    %250 = vector.extract_strided_slice %6 {offsets = [0, 32], sizes = [8, 16], strides = [1, 1]} : vector<8x64xbf16> to vector<8x16xbf16>
    %251 = vector.extract_strided_slice %99 {offsets = [0, 2], sizes = [8, 1], strides = [1, 1]} : vector<8x4xf32> to vector<8x1xf32>
    %252 = vector.extract_strided_slice %98 {offsets = [0, 2], sizes = [8, 1], strides = [1, 1]} : vector<8x4xf32> to vector<8x1xf32>
    %253 = arith.subf %252, %251 : vector<8x1xf32>
    %cst_68 = arith.constant dense<0.000000e+00> : vector<8x8xf32>
    %254 = tpu.matmul %103, %253, %cst_68 {dimension_numbers = #tpu.dot_dimension_numbers<[1], [1], [0], [0], [0, 0, 1, 0], [], []>} : vector<8x1xf32>, vector<8x1xf32>, vector<8x8xf32> -> vector<8x8xf32>
    %255 = vector.broadcast %251 : vector<8x1xf32> to vector<8x8xf32>
    %256 = arith.addf %255, %254 : vector<8x8xf32>
    %cst_69 = arith.constant -1.000000e+30 : f32
    %257 = vector.broadcast %cst_69 : f32 to vector<8x8xf32>
    %258 = arith.select %102, %256, %257 : vector<8x8xi1>, vector<8x8xf32>
    %cst_70 = arith.constant dense<0xFF800000> : vector<8xf32>
    %259 = vector.multi_reduction <maximumf>, %258, %cst_70 [1] : vector<8x8xf32> to vector<8xf32>
    %260 = vector.shape_cast %259 : vector<8xf32> to vector<8x1xf32>
    %261 = vector.broadcast %260 : vector<8x1xf32> to vector<8x8xf32>
    %262 = arith.subf %258, %261 : vector<8x8xf32>
    %263 = math.exp %262 : vector<8x8xf32>
    %264 = arith.truncf %248 : vector<8x16xf32> to vector<8x16xbf16>
    %265 = arith.truncf %249 : vector<8x16xf32> to vector<8x16xbf16>
    %cst_71 = arith.constant dense<0.000000e+00> : vector<8x8xf32>
    %266 = tpu.matmul %264, %265, %cst_71 {dimension_numbers = #tpu.dot_dimension_numbers<[1], [1], [0], [0], [0, 0, 1, 0], [], []>} : vector<8x16xbf16>, vector<8x16xbf16>, vector<8x8xf32> -> vector<8x8xf32>
    %cst_72 = arith.constant 2.500000e-01 : f32
    %267 = vector.broadcast %cst_72 : f32 to vector<8x8xf32>
    %268 = arith.mulf %266, %267 : vector<8x8xf32>
    %269 = arith.mulf %268, %263 : vector<8x8xf32>
    %cst_73 = arith.constant 0.000000e+00 : f32
    %270 = vector.broadcast %cst_73 : f32 to vector<8x1xf32>
    %271 = arith.subf %270, %260 : vector<8x1xf32>
    %cst_74 = arith.constant 8.000000e+01 : f32
    %272 = vector.broadcast %cst_74 : f32 to vector<8x1xf32>
    %273 = arith.minimumf %271, %272 : vector<8x1xf32>
    %274 = math.exp %273 : vector<8x1xf32>
    %cst_75 = arith.constant dense<0.000000e+00> : vector<8xf32>
    %275 = vector.multi_reduction <add>, %269, %cst_75 [1] : vector<8x8xf32> to vector<8xf32>
    %276 = vector.shape_cast %275 : vector<8xf32> to vector<8x1xf32>
    %277 = math.absf %276 : vector<8x1xf32>
    %278 = arith.maximumf %277, %274 : vector<8x1xf32>
    %cst_76 = arith.constant 9.99999997E-7 : f32
    %279 = vector.broadcast %cst_76 : f32 to vector<8x1xf32>
    %280 = arith.addf %278, %279 : vector<8x1xf32>
    %281 = tpu.reciprocal %280 {approx = true} : vector<8x1xf32> -> vector<8x1xf32>
    %282 = vector.broadcast %281 : vector<8x1xf32> to vector<8x8xf32>
    %283 = arith.mulf %269, %282 : vector<8x8xf32>
    %284 = arith.truncf %283 : vector<8x8xf32> to vector<8x8xbf16>
    %cst_77 = arith.constant dense<0.000000e+00> : vector<8x16xf32>
    %285 = tpu.matmul %284, %250, %cst_77 {dimension_numbers = #tpu.dot_dimension_numbers<[1], [0], [0], [1], [0, 0, 1, 1], [], []>} : vector<8x8xbf16>, vector<8x16xbf16>, vector<8x16xf32> -> vector<8x16xf32>
    %cst_78 = arith.constant dense<0.000000e+00> : vector<8xf32>
    %286 = vector.multi_reduction <add>, %285, %cst_78 [1] : vector<8x16xf32> to vector<8xf32>
    %287 = vector.shape_cast %286 : vector<8xf32> to vector<8x1xf32>
    %cst_79 = arith.constant 1.600000e+01 : f32
    %288 = vector.broadcast %cst_79 : f32 to vector<8x1xf32>
    %289 = arith.divf %287, %288 : vector<8x1xf32>
    %290 = vector.broadcast %289 : vector<8x1xf32> to vector<8x16xf32>
    %291 = arith.subf %285, %290 : vector<8x16xf32>
    %292 = arith.mulf %291, %291 : vector<8x16xf32>
    %cst_80 = arith.constant dense<0.000000e+00> : vector<8xf32>
    %293 = vector.multi_reduction <add>, %292, %cst_80 [1] : vector<8x16xf32> to vector<8xf32>
    %294 = vector.shape_cast %293 : vector<8xf32> to vector<8x1xf32>
    %cst_81 = arith.constant 1.600000e+01 : f32
    %295 = vector.broadcast %cst_81 : f32 to vector<8x1xf32>
    %296 = arith.divf %294, %295 : vector<8x1xf32>
    %cst_82 = arith.constant 9.99999974E-6 : f32
    %297 = vector.broadcast %cst_82 : f32 to vector<8x1xf32>
    %298 = arith.addf %296, %297 : vector<8x1xf32>
    %299 = math.rsqrt %298 : vector<8x1xf32>
    %300 = vector.broadcast %299 : vector<8x1xf32> to vector<8x16xf32>
    %301 = arith.mulf %291, %300 : vector<8x16xf32>
    %302 = vector.extract_strided_slice %104 {offsets = [2, 0], sizes = [1, 16], strides = [1, 1]} : vector<4x16xf32> to vector<1x16xf32>
    %303 = vector.broadcast %302 : vector<1x16xf32> to vector<8x16xf32>
    %304 = arith.mulf %301, %303 : vector<8x16xf32>
    %305 = vector.extract_strided_slice %105 {offsets = [0, 32], sizes = [1, 16], strides = [1, 1]} : vector<1x64xf32> to vector<1x16xf32>
    %306 = vector.extract_strided_slice %55 {offsets = [0, 32], sizes = [8, 16], strides = [1, 1]} : vector<8x64xf32> to vector<8x16xf32>
    %307 = vector.broadcast %305 : vector<1x16xf32> to vector<8x16xf32>
    %308 = arith.mulf %307, %306 : vector<8x16xf32>
    %309 = arith.addf %304, %308 : vector<8x16xf32>
    %310 = vector.extract_strided_slice %111 {offsets = [0, 32], sizes = [8, 16], strides = [1, 1]} : vector<8x64xf32> to vector<8x16xf32>
    %311 = arith.mulf %309, %310 : vector<8x16xf32>
    %312 = arith.truncf %311 : vector<8x16xf32> to vector<8x16xbf16>
    %c0_83 = arith.constant 0 : index
    %c0_84 = arith.constant 0 : index
    %c32 = arith.constant 32 : index
    %313 = vector.load %arg8[%c0_83, %c0_84, %c32] : memref<1x8x64xbf16, #tpu.memory_space<vmem>>, vector<1x8x16xbf16>
    %314 = vector.shape_cast %313 : vector<1x8x16xbf16> to vector<8x16xbf16>
    %315 = vector.shape_cast %312 : vector<8x16xbf16> to vector<1x8x16xbf16>
    tpu.vector_store %arg8[%c0_83, %c0_84, %c32], %315 {strides = array<i32>} : memref<1x8x64xbf16, #tpu.memory_space<vmem>>, vector<1x8x16xbf16>,
    %316 = vector.extract_strided_slice %62 {offsets = [0, 48], sizes = [8, 16], strides = [1, 1]} : vector<8x64xf32> to vector<8x16xf32>
    %317 = vector.extract_strided_slice %63 {offsets = [0, 48], sizes = [8, 16], strides = [1, 1]} : vector<8x64xf32> to vector<8x16xf32>
    %318 = vector.extract_strided_slice %6 {offsets = [0, 48], sizes = [8, 16], strides = [1, 1]} : vector<8x64xbf16> to vector<8x16xbf16>
    %319 = vector.extract_strided_slice %99 {offsets = [0, 3], sizes = [8, 1], strides = [1, 1]} : vector<8x4xf32> to vector<8x1xf32>
    %320 = vector.extract_strided_slice %98 {offsets = [0, 3], sizes = [8, 1], strides = [1, 1]} : vector<8x4xf32> to vector<8x1xf32>
    %321 = arith.subf %320, %319 : vector<8x1xf32>
    %cst_85 = arith.constant dense<0.000000e+00> : vector<8x8xf32>
    %322 = tpu.matmul %103, %321, %cst_85 {dimension_numbers = #tpu.dot_dimension_numbers<[1], [1], [0], [0], [0, 0, 1, 0], [], []>} : vector<8x1xf32>, vector<8x1xf32>, vector<8x8xf32> -> vector<8x8xf32>
    %323 = vector.broadcast %319 : vector<8x1xf32> to vector<8x8xf32>
    %324 = arith.addf %323, %322 : vector<8x8xf32>
    %cst_86 = arith.constant -1.000000e+30 : f32
    %325 = vector.broadcast %cst_86 : f32 to vector<8x8xf32>
    %326 = arith.select %102, %324, %325 : vector<8x8xi1>, vector<8x8xf32>
    %cst_87 = arith.constant dense<0xFF800000> : vector<8xf32>
    %327 = vector.multi_reduction <maximumf>, %326, %cst_87 [1] : vector<8x8xf32> to vector<8xf32>
    %328 = vector.shape_cast %327 : vector<8xf32> to vector<8x1xf32>
    %329 = vector.broadcast %328 : vector<8x1xf32> to vector<8x8xf32>
    %330 = arith.subf %326, %329 : vector<8x8xf32>
    %331 = math.exp %330 : vector<8x8xf32>
    %332 = arith.truncf %316 : vector<8x16xf32> to vector<8x16xbf16>
    %333 = arith.truncf %317 : vector<8x16xf32> to vector<8x16xbf16>
    %cst_88 = arith.constant dense<0.000000e+00> : vector<8x8xf32>
    %334 = tpu.matmul %332, %333, %cst_88 {dimension_numbers = #tpu.dot_dimension_numbers<[1], [1], [0], [0], [0, 0, 1, 0], [], []>} : vector<8x16xbf16>, vector<8x16xbf16>, vector<8x8xf32> -> vector<8x8xf32>
    %cst_89 = arith.constant 2.500000e-01 : f32
    %335 = vector.broadcast %cst_89 : f32 to vector<8x8xf32>
    %336 = arith.mulf %334, %335 : vector<8x8xf32>
    %337 = arith.mulf %336, %331 : vector<8x8xf32>
    %cst_90 = arith.constant 0.000000e+00 : f32
    %338 = vector.broadcast %cst_90 : f32 to vector<8x1xf32>
    %339 = arith.subf %338, %328 : vector<8x1xf32>
    %cst_91 = arith.constant 8.000000e+01 : f32
    %340 = vector.broadcast %cst_91 : f32 to vector<8x1xf32>
    %341 = arith.minimumf %339, %340 : vector<8x1xf32>
    %342 = math.exp %341 : vector<8x1xf32>
    %cst_92 = arith.constant dense<0.000000e+00> : vector<8xf32>
    %343 = vector.multi_reduction <add>, %337, %cst_92 [1] : vector<8x8xf32> to vector<8xf32>
    %344 = vector.shape_cast %343 : vector<8xf32> to vector<8x1xf32>
    %345 = math.absf %344 : vector<8x1xf32>
    %346 = arith.maximumf %345, %342 : vector<8x1xf32>
    %cst_93 = arith.constant 9.99999997E-7 : f32
    %347 = vector.broadcast %cst_93 : f32 to vector<8x1xf32>
    %348 = arith.addf %346, %347 : vector<8x1xf32>
    %349 = tpu.reciprocal %348 {approx = true} : vector<8x1xf32> -> vector<8x1xf32>
    %350 = vector.broadcast %349 : vector<8x1xf32> to vector<8x8xf32>
    %351 = arith.mulf %337, %350 : vector<8x8xf32>
    %352 = arith.truncf %351 : vector<8x8xf32> to vector<8x8xbf16>
    %cst_94 = arith.constant dense<0.000000e+00> : vector<8x16xf32>
    %353 = tpu.matmul %352, %318, %cst_94 {dimension_numbers = #tpu.dot_dimension_numbers<[1], [0], [0], [1], [0, 0, 1, 1], [], []>} : vector<8x8xbf16>, vector<8x16xbf16>, vector<8x16xf32> -> vector<8x16xf32>
    %cst_95 = arith.constant dense<0.000000e+00> : vector<8xf32>
    %354 = vector.multi_reduction <add>, %353, %cst_95 [1] : vector<8x16xf32> to vector<8xf32>
    %355 = vector.shape_cast %354 : vector<8xf32> to vector<8x1xf32>
    %cst_96 = arith.constant 1.600000e+01 : f32
    %356 = vector.broadcast %cst_96 : f32 to vector<8x1xf32>
    %357 = arith.divf %355, %356 : vector<8x1xf32>
    %358 = vector.broadcast %357 : vector<8x1xf32> to vector<8x16xf32>
    %359 = arith.subf %353, %358 : vector<8x16xf32>
    %360 = arith.mulf %359, %359 : vector<8x16xf32>
    %cst_97 = arith.constant dense<0.000000e+00> : vector<8xf32>
    %361 = vector.multi_reduction <add>, %360, %cst_97 [1] : vector<8x16xf32> to vector<8xf32>
    %362 = vector.shape_cast %361 : vector<8xf32> to vector<8x1xf32>
    %cst_98 = arith.constant 1.600000e+01 : f32
    %363 = vector.broadcast %cst_98 : f32 to vector<8x1xf32>
    %364 = arith.divf %362, %363 : vector<8x1xf32>
    %cst_99 = arith.constant 9.99999974E-6 : f32
    %365 = vector.broadcast %cst_99 : f32 to vector<8x1xf32>
    %366 = arith.addf %364, %365 : vector<8x1xf32>
    %367 = math.rsqrt %366 : vector<8x1xf32>
    %368 = vector.broadcast %367 : vector<8x1xf32> to vector<8x16xf32>
    %369 = arith.mulf %359, %368 : vector<8x16xf32>
    %370 = vector.extract_strided_slice %104 {offsets = [3, 0], sizes = [1, 16], strides = [1, 1]} : vector<4x16xf32> to vector<1x16xf32>
    %371 = vector.broadcast %370 : vector<1x16xf32> to vector<8x16xf32>
    %372 = arith.mulf %369, %371 : vector<8x16xf32>
    %373 = vector.extract_strided_slice %105 {offsets = [0, 48], sizes = [1, 16], strides = [1, 1]} : vector<1x64xf32> to vector<1x16xf32>
    %374 = vector.extract_strided_slice %55 {offsets = [0, 48], sizes = [8, 16], strides = [1, 1]} : vector<8x64xf32> to vector<8x16xf32>
    %375 = vector.broadcast %373 : vector<1x16xf32> to vector<8x16xf32>
    %376 = arith.mulf %375, %374 : vector<8x16xf32>
    %377 = arith.addf %372, %376 : vector<8x16xf32>
    %378 = vector.extract_strided_slice %111 {offsets = [0, 48], sizes = [8, 16], strides = [1, 1]} : vector<8x64xf32> to vector<8x16xf32>
    %379 = arith.mulf %377, %378 : vector<8x16xf32>
    %380 = arith.truncf %379 : vector<8x16xf32> to vector<8x16xbf16>
    %c0_100 = arith.constant 0 : index
    %c0_101 = arith.constant 0 : index
    %c48 = arith.constant 48 : index
    %381 = vector.load %arg8[%c0_100, %c0_101, %c48] : memref<1x8x64xbf16, #tpu.memory_space<vmem>>, vector<1x8x16xbf16>
    %382 = vector.shape_cast %381 : vector<1x8x16xbf16> to vector<8x16xbf16>
    %383 = vector.shape_cast %380 : vector<8x16xbf16> to vector<1x8x16xbf16>
    tpu.vector_store %arg8[%c0_100, %c0_101, %c48], %383 {strides = array<i32>} : memref<1x8x64xbf16, #tpu.memory_space<vmem>>, vector<1x8x16xbf16>,
    return
  }
  func.func @transform_0(%arg0: i32) -> (i32, i32, i32) {
    %c0_i32 = arith.constant 0 : i32
    %c0_i32_0 = arith.constant 0 : i32
    %c0_i32_1 = arith.constant 0 : i32
    return %arg0, %c0_i32, %c0_i32_0 : i32, i32, i32
  }
  func.func @transform_1(%arg0: i32) -> (i32, i32) {
    %c0_i32 = arith.constant 0 : i32
    %c0_i32_0 = arith.constant 0 : i32
    %c0_i32_1 = arith.constant 0 : i32
    return %c0_i32, %c0_i32_0 : i32, i32
  }
  func.func @transform_2(%arg0: i32) -> (i32, i32) {
    %c0_i32 = arith.constant 0 : i32
    %c0_i32_0 = arith.constant 0 : i32
    %c0_i32_1 = arith.constant 0 : i32
    return %c0_i32, %c0_i32_0 : i32, i32
  }
  func.func @transform_3(%arg0: i32) -> (i32, i32) {
    %c0_i32 = arith.constant 0 : i32
    %c0_i32_0 = arith.constant 0 : i32
    %c0_i32_1 = arith.constant 0 : i32
    return %c0_i32, %c0_i32_0 : i32, i32
  }
  func.func @transform_4(%arg0: i32) -> (i32, i32) {
    %c0_i32 = arith.constant 0 : i32
    %c0_i32_0 = arith.constant 0 : i32
    %c0_i32_1 = arith.constant 0 : i32
    return %c0_i32, %c0_i32_0 : i32, i32
  }
  func.func @transform_5(%arg0: i32) -> (i32, i32) {
    %c0_i32 = arith.constant 0 : i32
    %c0_i32_0 = arith.constant 0 : i32
    %c0_i32_1 = arith.constant 0 : i32
    return %c0_i32, %c0_i32_0 : i32, i32
  }
  func.func @transform_6(%arg0: i32) -> (i32, i32) {
    %c0_i32 = arith.constant 0 : i32
    %c0_i32_0 = arith.constant 0 : i32
    %c0_i32_1 = arith.constant 0 : i32
    return %c0_i32, %c0_i32_0 : i32, i32
  }
  func.func @transform_7(%arg0: i32) -> (i32, i32, i32) {
    %c0_i32 = arith.constant 0 : i32
    %c0_i32_0 = arith.constant 0 : i32
    %c0_i32_1 = arith.constant 0 : i32
    return %arg0, %c0_i32, %c0_i32_0 : i32, i32, i32
  }
}

</mosaic_0001>

<llo_original>
// kernel: xlstm_forward.9
$region0: #{xlstm_forward.9}
  #allocation0 [shape = 'u32[]', space=smem, size = 0x4, offset = 0x4, fixed_abs, tag = 'smem constant byte address 0x4 - core index']
  #allocation1 [shape = 'u32[72,128]{1,0:T(1,128)}', space=vmem, size = 0x9000, scoped, tag = 'internal scratch']
  #allocation2 [shape = 'bf16[16,32]{1,0:T(8,128)(2,1)}', space=vmem, size = 0x1000, scoped, tag = 'scratch operand']
  %s0 = inlined_call_operand.vmem [shape: bf16[16,32], index: 0, kind: input, shape index: {}]
  %s1 = inlined_call_operand.vmem [shape: f32[1,32], index: 1, kind: input, shape index: {}]
  %s2 = inlined_call_operand.vmem [shape: f32[1,32], index: 2, kind: input, shape index: {}]
  %s3 = inlined_call_operand.hbm [shape: bf16[32,512], index: 3, kind: input, shape index: {}]
  %s4 = inlined_call_operand.vmem [shape: bf16[16,512], index: 4, kind: output, shape index: {}]
  %s5 = sld [smem:[#allocation0]]
  $region34: #{xlstm_forward.9} parent=0
    _
  %s7 = ssub.s32 1, %s5
  %s8 = scalar_select 0, %s7, %s5
  $region1: #{xlstm_forward.9} parent=0
    #allocation3 [shape = 'u8[32768]{0}', space=vmem, size = 0x8000, scoped, tag = 'input window, operand 3, single buffered']
    #allocation4 [shape = 's32[1]{0}', space=sflag, size = 0x4, scoped, tag = 'scoped memory for xlstm_forward.9']
    %9 = vsyncpa [#allocation4], 0
    // Predicated region
    $region2: #{xlstm_forward.9} parent=1 // pred_check
      _
    $region3: #{xlstm_forward.9} parent=1 // pred_check_branch
      %11 = sbr.rel (0) target = $region5
    $region4: #{xlstm_forward.9} parent=1 // pred_region
      _
    $region5: #{xlstm_forward.9} parent=1 // pred_fallthru
      _
    // Predicated region
    $region6: #{xlstm_forward.9} parent=1 // pred_check
      _
    $region7: #{xlstm_forward.9} parent=1 // pred_check_branch
      %13 = sbr.rel (0) target = $region9
    $region8: #{xlstm_forward.9} parent=1 // pred_region
      _
    $region9: #{xlstm_forward.9} parent=1 // pred_fallthru
      _
    // Predicated region
    $region10: #{xlstm_forward.9} parent=1 // pred_check
      _
    $region11: #{xlstm_forward.9} parent=1 // pred_check_branch
      %15 = sbr.rel (0) target = $region13
    $region12: #{xlstm_forward.9} parent=1 // pred_region
      _
    $region13: #{xlstm_forward.9} parent=1 // pred_fallthru
      _
    // Predicated region
    $region14: #{xlstm_forward.9} parent=1 // pred_check
      _
    $region15: #{xlstm_forward.9} parent=1 // pred_check_branch
      %17 = sbr.rel (0) target = $region17
    $region16: #{xlstm_forward.9} parent=1 // pred_region
      %19 = vsyncadd [#allocation4], 0
      %s20 = sshll.u32 %s3, 4
      %s21 = int_to_ptr.hbm [resolvable:$true] %s20
      %s22 = sshll.u32 [#allocation3], 4
      %s23 = int_to_ptr.vmem [resolvable:$true] %s22
      %28 = dma.hbm_to_vmem [thread:$0]  %s21, 1024, %s23, [#allocation4], 256, 256, 16
    $region17: #{xlstm_forward.9} parent=1 // pred_fallthru
      _
    // Predicated region
    $region18: #{xlstm_forward.9} parent=1 // pred_check
      _
    $region19: #{xlstm_forward.9} parent=1 // pred_check_branch
      %30 = sbr.rel (0) target = $region21
    $region20: #{xlstm_forward.9} parent=1 // pred_region
      %32 = dma.done [#allocation4], 1024
    $region21: #{xlstm_forward.9} parent=1 // pred_fallthru
      _
    %p34 = scmp.eq.s32.totalorder 0, 0
    // Predicated region
    $region22: #{xlstm_forward.9} parent=1 // pred_check
      %p35 = pneg %p34
    $region23: #{xlstm_forward.9} parent=1 // pred_check_branch
      %37 = sbr.rel (%p35) target = $region25
    $region24: #{xlstm_forward.9} parent=1 // pred_region
      %v38 = vld [vmem:[%s0] sm:$0xf]
      %v39 = vld [vmem:[%s0 + $0x4] sm:$0xf]
      %v40 = vunpack.c.l.bf16 %v38
      %v41 = vunpack.c.l.bf16 %v39
      %vm42 = vcmask 261120
      %v43 = vsel %vm42, %v40, 0.0
      %44 = vadd.xlane.f32.xlu0 %v43
      %v45 = vpop.xlane.xlu0 %44
      %v46 = vsel %vm42, %v41, 0.0
      %47 = vadd.xlane.f32.xlu0 %v46
      %v48 = vpop.xlane.xlu0 %47
      %v49 = vrcp.pop 32.0
      %v50 = vmul.f32 32.0, %v49
      %v51 = vsub.f32 1.0, %v50
      %v52 = vmul.f32 %v49, %v51
      %v53 = vadd.f32 %v49, %v52
      %vm54 = vweird.f32 %v49
      %v55 = vsel %vm54, %v49, %v53
      %v56 = vmul.f32 %v45, %v55
      %v57 = vmul.f32 %v48, %v55
      %v58 = vsub.f32 %v40, %v56
      %v59 = vsub.f32 %v41, %v57
      %v60 = vmul.f32 %v58, %v58
      %v61 = vmul.f32 %v59, %v59
      %v62 = vsel %vm42, %v60, 0.0
      %63 = vadd.xlane.f32.xlu0 %v62
      %v64 = vpop.xlane.xlu0 %63
      %v65 = vsel %vm42, %v61, 0.0
      %66 = vadd.xlane.f32.xlu0 %v65
      %v67 = vpop.xlane.xlu0 %66
      %v68 = vmul.f32 %v64, %v55
      %v69 = vmul.f32 %v67, %v55
      %v70 = vadd.f32 %v68, 1e-05
      %v71 = vadd.f32 %v69, 1e-05
      %v72 = vrsqrt.pop %v70
      %v73 = vmul.f32 %v72, %v70
      %v74 = vmul.f32 %v73, %v72
      %v75 = vmul.f32 0.5, %v74
      %v76 = vsub.f32 1.5, %v75
      %v77 = vmul.f32 %v72, %v76
      %vm78 = vweird.f32 %v70
      %vm79 = vweird.f32 %v72
      %vm80 = vmor %vm78, %vm79
      %v81 = vsel %vm80, %v72, %v77
      %v82 = vrsqrt.pop %v71
      %v83 = vmul.f32 %v82, %v71
      %v84 = vmul.f32 %v83, %v82
      %v85 = vmul.f32 0.5, %v84
      %v86 = vsub.f32 1.5, %v85
      %v87 = vmul.f32 %v82, %v86
      %vm88 = vweird.f32 %v71
      %vm89 = vweird.f32 %v82
      %vm90 = vmor %vm88, %vm89
      %v91 = vsel %vm90, %v82, %v87
      %v92 = vmul.f32 %v58, %v81
      %v93 = vmul.f32 %v59, %v91
      %v94 = vld [vmem:[%s1] sm:$0x1]
      %v96 = vperm.slane %v94, 0
      %v98 = vmul.f32 %v92, %v96
      %v99 = vmul.f32 %v93, %v96
      %v100 = vld [vmem:[%s2] sm:$0x1]
      %v102 = vperm.slane %v100, 0
      %v104 = vadd.f32 %v98, %v102
      %v105 = vadd.f32 %v99, %v102
      %v106 = vpack.c.bf16 %v104, %v104
      %v107 = vpack.c.bf16 %v105, %v105
      %vm108 = vcmask 257024
      %109 = vst.msk [vmem:[#allocation2] sm:$0xf] %vm108, %v106
      %110 = vst.msk [vmem:[#allocation2 + $0x4] sm:$0xf] %vm108, %v107
    $region25: #{xlstm_forward.9} parent=1 // pred_fallthru
      _
    %v111 = vld [vmem:[#allocation2] sm:$0xf]
    %v112 = vld [vmem:[#allocation2 + $0x4] sm:$0xf]
    %v113 = vld [vmem:[#allocation3] sm:$0xff]
    %v114 = vld [vmem:[#allocation3 + $0x8] sm:$0xff]
    %v115 = vld [vmem:[#allocation3 + $0x10] sm:$0xff]
    %v116 = vld [vmem:[#allocation3 + $0x18] sm:$0xff]
    %v117 = vld [vmem:[#allocation3 + $0x20] sm:$0xff]
    %v118 = vld [vmem:[#allocation3 + $0x28] sm:$0xff]
    %v119 = vld [vmem:[#allocation3 + $0x30] sm:$0xff]
    %v120 = vld [vmem:[#allocation3 + $0x38] sm:$0xff]
    %v123 = vunpack.c.l.b16 %v111
    %v124 = vunpack.c.l.b16 %v112
    %v125 = vpack.c.b16 %v124, %v123
    %v134 = vunpack.c.l.b16 %v113
    %v135 = vunpack.c.h.b16 %v113
    %v136 = vunpack.c.l.b16 %v114
    %v137 = vunpack.c.h.b16 %v114
    %v138 = vunpack.c.l.b16 %v115
    %v139 = vunpack.c.h.b16 %v115
    %v140 = vunpack.c.l.b16 %v116
    %v141 = vunpack.c.h.b16 %v116
    %v142 = vunpack.c.l.b16 %v117
    %v143 = vunpack.c.h.b16 %v117
    %v144 = vunpack.c.l.b16 %v118
    %v145 = vunpack.c.h.b16 %v118
    %v146 = vunpack.c.l.b16 %v119
    %v147 = vunpack.c.h.b16 %v119
    %v148 = vunpack.c.l.b16 %v120
    %v149 = vunpack.c.h.b16 %v120
    %v150 = vpack.c.b16 %v138, %v134
    %v151 = vpack.c.b16 %v139, %v135
    %v152 = vpack.c.b16 %v140, %v136
    %v153 = vpack.c.b16 %v141, %v137
    %v154 = vpack.c.b16 %v146, %v142
    %v155 = vpack.c.b16 %v147, %v143
    %v156 = vpack.c.b16 %v148, %v144
    %v157 = vpack.c.b16 %v149, %v145
    %vm166 = vcmask 261120
    %v168 = vsel %vm166, %v125, 0
    %170 = vmatpush.bf16.msra.mxu0 0
    %171 = vmatpush.bf16.msra.mxu0 0
    %172 = vmatpush.bf16.msra.mxu0 0
    %173 = vmatpush.bf16.msra.mxu0 0
    %174 = vmatpush.bf16.msra.mxu0 0
    %175 = vmatpush.bf16.msra.mxu0 0
    %176 = vmatpush.bf16.msra.mxu0 %v154
    %177 = vmatpush.bf16.msra.mxu0 %v150
    %178 = vmatmul.bf16.gmra.mxu0 %v168
    %v179 = vpop.f32.mrf.mxu0
    %v180 = vadd.f32 0.0, %v179
    %v181 = vpop.f32.mrf.mxu0
    %v182 = vadd.f32 0.0, %v181
    %183 = vdwg.mxu0
    %184 = vmatpush.bf16.msra.mxu0 0
    %185 = vmatpush.bf16.msra.mxu0 0
    %186 = vmatpush.bf16.msra.mxu0 0
    %187 = vmatpush.bf16.msra.mxu0 0
    %188 = vmatpush.bf16.msra.mxu0 0
    %189 = vmatpush.bf16.msra.mxu0 0
    %190 = vmatpush.bf16.msra.mxu0 %v155
    %191 = vmatpush.bf16.msra.mxu0 %v151
    %192 = vmatmul.bf16.gmra.mxu0 %v168
    %v193 = vpop.f32.mrf.mxu0
    %v194 = vadd.f32 0.0, %v193
    %v195 = vpop.f32.mrf.mxu0
    %v196 = vadd.f32 0.0, %v195
    %197 = vdwg.mxu0
    %198 = vmatpush.bf16.msra.mxu0 0
    %199 = vmatpush.bf16.msra.mxu0 0
    %200 = vmatpush.bf16.msra.mxu0 0
    %201 = vmatpush.bf16.msra.mxu0 0
    %202 = vmatpush.bf16.msra.mxu0 0
    %203 = vmatpush.bf16.msra.mxu0 0
    %204 = vmatpush.bf16.msra.mxu0 %v156
    %205 = vmatpush.bf16.msra.mxu0 %v152
    %206 = vmatmul.bf16.gmra.mxu0 %v168
    %v207 = vpop.f32.mrf.mxu0
    %v208 = vadd.f32 0.0, %v207
    %v209 = vpop.f32.mrf.mxu0
    %v210 = vadd.f32 0.0, %v209
    %211 = vdwg.mxu0
    %212 = vmatpush.bf16.msra.mxu0 0
    %213 = vmatpush.bf16.msra.mxu0 0
    %214 = vmatpush.bf16.msra.mxu0 0
    %215 = vmatpush.bf16.msra.mxu0 0
    %216 = vmatpush.bf16.msra.mxu0 0
    %217 = vmatpush.bf16.msra.mxu0 0
    %218 = vmatpush.bf16.msra.mxu0 %v157
    %219 = vmatpush.bf16.msra.mxu0 %v153
    %220 = vmatmul.bf16.gmra.mxu0 %v168
    %v221 = vpop.f32.mrf.mxu0
    %v222 = vadd.f32 0.0, %v221
    %v223 = vpop.f32.mrf.mxu0
    %v224 = vadd.f32 0.0, %v223
    %225 = vdwg.mxu0
    %v226 = vpack.c.bf16 %v194, %v180
    %v227 = vpack.c.bf16 %v222, %v208
    %v228 = vpack.c.bf16 %v196, %v182
    %v229 = vpack.c.bf16 %v224, %v210
    %230 = vst [vmem:[%s4] sm:$0xff] %v226
    %231 = vst [vmem:[%s4 + $0x8] sm:$0xff] %v227
    %232 = vst [vmem:[%s4 + $0x10] sm:$0xff] %v228
    %233 = vst [vmem:[%s4 + $0x18] sm:$0xff] %v229
    // Predicated region
    $region26: #{xlstm_forward.9} parent=1 // pred_check
      _
    $region27: #{xlstm_forward.9} parent=1 // pred_check_branch
      %235 = sbr.rel (0) target = $region29
    $region28: #{xlstm_forward.9} parent=1 // pred_region
      _
    $region29: #{xlstm_forward.9} parent=1 // pred_fallthru
      _
    // Predicated region
    $region30: #{xlstm_forward.9} parent=1 // pred_check
      _
    $region31: #{xlstm_forward.9} parent=1 // pred_check_branch
      %237 = sbr.rel (0) target = $region33
    $region32: #{xlstm_forward.9} parent=1 // pred_region
      _
    $region33: #{xlstm_forward.9} parent=1 // pred_fallthru
      _
    %238 = vsyncpa [#allocation4], 1

// kernel: xlstm_forward.8
$region0: #{xlstm_forward.8}
  #allocation0 [shape = 'u32[]', space=smem, size = 0x4, offset = 0x4, fixed_abs, tag = 'smem constant byte address 0x4 - core index']
  #allocation1 [shape = 'u32[72,128]{1,0:T(1,128)}', space=vmem, size = 0x9000, scoped, tag = 'internal scratch']
  #allocation2 [shape = 'f32[16,32]{1,0:T(8,128)}', space=vmem, size = 0x2000, scoped, tag = 'scratch operand']
  %s0 = inlined_call_operand.vmem [shape: f32[16,4], index: 0, kind: input, shape index: {}]
  %s1 = inlined_call_operand.vmem [shape: bf16[4,32], index: 1, kind: input, shape index: {}]
  %s2 = inlined_call_operand.vmem [shape: f32[1,32], index: 2, kind: input, shape index: {}]
  %s3 = inlined_call_operand.vmem [shape: bf16[16,32], index: 3, kind: output, shape index: {}]
  %s4 = sld [smem:[#allocation0]]
  $region30: #{xlstm_forward.8} parent=0
    _
  %s6 = ssub.s32 1, %s4
  %s7 = scalar_select 0, %s6, %s4
  // Predicated region
  $region2: #{xlstm_forward.8} parent=0 // pred_check
    _
  $region3: #{xlstm_forward.8} parent=0 // pred_check_branch
    %9 = sbr.rel (0) target = $region5
  $region4: #{xlstm_forward.8} parent=0 // pred_region
    _
  $region5: #{xlstm_forward.8} parent=0 // pred_fallthru
    _
  // Predicated region
  $region6: #{xlstm_forward.8} parent=0 // pred_check
    _
  $region7: #{xlstm_forward.8} parent=0 // pred_check_branch
    %11 = sbr.rel (0) target = $region9
  $region8: #{xlstm_forward.8} parent=0 // pred_region
    _
  $region9: #{xlstm_forward.8} parent=0 // pred_fallthru
    _
  // Predicated region
  $region10: #{xlstm_forward.8} parent=0 // pred_check
    _
  $region11: #{xlstm_forward.8} parent=0 // pred_check_branch
    %13 = sbr.rel (0) target = $region13
  $region12: #{xlstm_forward.8} parent=0 // pred_region
    _
  $region13: #{xlstm_forward.8} parent=0 // pred_fallthru
    _
  %p15 = scmp.eq.s32.totalorder 0, 0
  // Predicated region
  $region14: #{xlstm_forward.8} parent=0 // pred_check
    %p16 = pneg %p15
  $region15: #{xlstm_forward.8} parent=0 // pred_check_branch
    %18 = sbr.rel (%p16) target = $region17
  $region16: #{xlstm_forward.8} parent=0 // pred_region
    %vm19 = vcmask 261120
    %20 = vst.msk [vmem:[#allocation2] sm:$0xff] %vm19, 0.0
    %21 = vst.msk [vmem:[#allocation2 + $0x8] sm:$0xff] %vm19, 0.0
  $region17: #{xlstm_forward.8} parent=0 // pred_fallthru
    _
  %v22 = vld [vmem:[#allocation2] sm:$0xff]
  %v23 = vld [vmem:[#allocation2 + $0x8] sm:$0xff]
  %v24 = vld [vmem:[%s0] sm:$0xff]
  %v25 = vld [vmem:[%s0 + $0x8] sm:$0xff]
  %v26 = vpack.c.bf16 %v25, %v24
  %v27 = vld [vmem:[%s1] sm:$0x3]
  %vm28 = vcmask 31744
  %v30 = vsel %vm28, %v26, 0
  %vm32 = vcmask 1041408
  %v34 = vsel %vm32, %v27, 0
  %36 = vmatpush.bf16.msra.mxu0 0
  %37 = vmatpush.bf16.msra.mxu0 0
  %38 = vmatpush.bf16.msra.mxu0 0
  %39 = vmatpush.bf16.msra.mxu0 0
  %40 = vmatpush.bf16.msra.mxu0 0
  %41 = vmatpush.bf16.msra.mxu0 0
  %42 = vmatpush.bf16.msra.mxu0 0
  %43 = vmatpush.bf16.msra.mxu0 %v34
  %44 = vmatmul.bf16.gmra.mxu0 %v30
  %v45 = vpop.f32.mrf.mxu0
  %v46 = vadd.f32 0.0, %v45
  %v47 = vpop.f32.mrf.mxu0
  %v48 = vadd.f32 0.0, %v47
  %49 = vdwg.mxu0
  %v50 = vadd.f32 %v22, %v46
  %v51 = vadd.f32 %v23, %v48
  %vm52 = vcmask 261120
  %53 = vst.msk [vmem:[#allocation2] sm:$0xff] %vm52, %v50
  %54 = vst.msk [vmem:[#allocation2 + $0x8] sm:$0xff] %vm52, %v51
  // Predicated region
  $region18: #{xlstm_forward.8} parent=0 // pred_check
    %p55 = pneg %p15
  $region19: #{xlstm_forward.8} parent=0 // pred_check_branch
    %57 = sbr.rel (%p55) target = $region21
  $region20: #{xlstm_forward.8} parent=0 // pred_region
    %v58 = vld [vmem:[#allocation2] sm:$0xff]
    %v59 = vld [vmem:[#allocation2 + $0x8] sm:$0xff]
    %v60 = vld [vmem:[%s2] sm:$0x1]
    %v62 = vperm.slane %v60, 0
    %v64 = vadd.f32 %v58, %v62
    %v65 = vadd.f32 %v59, %v62
    %v66 = vpack.c.bf16 %v64, %v64
    %v67 = vpack.c.bf16 %v65, %v65
    %vm68 = vcmask 257024
    %69 = vst.msk [vmem:[%s3] sm:$0xf] %vm68, %v66
    %70 = vst.msk [vmem:[%s3 + $0x4] sm:$0xf] %vm68, %v67
  $region21: #{xlstm_forward.8} parent=0 // pred_fallthru
    _
  // Predicated region
  $region22: #{xlstm_forward.8} parent=0 // pred_check
    _
  $region23: #{xlstm_forward.8} parent=0 // pred_check_branch
    %72 = sbr.rel (0) target = $region25
  $region24: #{xlstm_forward.8} parent=0 // pred_region
    _
  $region25: #{xlstm_forward.8} parent=0 // pred_fallthru
    _
  // Predicated region
  $region26: #{xlstm_forward.8} parent=0 // pred_check
    _
  $region27: #{xlstm_forward.8} parent=0 // pred_check_branch
    %74 = sbr.rel (0) target = $region29
  $region28: #{xlstm_forward.8} parent=0 // pred_region
    _
  $region29: #{xlstm_forward.8} parent=0 // pred_fallthru
    _

// kernel: xlstm_forward.11
$region0: #{xlstm_forward.11}
  #allocation0 [shape = 'u32[]', space=smem, size = 0x4, offset = 0x4, fixed_abs, tag = 'smem constant byte address 0x4 - core index']
  #allocation1 [shape = 'u32[72,128]{1,0:T(1,128)}', space=vmem, size = 0x9000, scoped, tag = 'internal scratch']
  #allocation2 [shape = 'f32[16,32]{1,0:T(8,128)}', space=vmem, size = 0x2000, scoped, tag = 'scratch operand']
  %s0 = inlined_call_operand.vmem [shape: bf16[16,64], index: 0, kind: input, shape index: {}]
  %s1 = inlined_call_operand.hbm [shape: bf16[64,32], index: 1, kind: input, shape index: {}]
  %s2 = inlined_call_operand.vmem [shape: bf16[16,32], index: 2, kind: input, shape index: {}]
  %s3 = inlined_call_operand.vmem [shape: bf16[16,32], index: 3, kind: output, shape index: {}]
  %s4 = sld [smem:[#allocation0]]
  $region34: #{xlstm_forward.11} parent=0
    _
  %s6 = ssub.s32 1, %s4
  %s7 = scalar_select 0, %s6, %s4
  $region1: #{xlstm_forward.11} parent=0
    #allocation3 [shape = 'u8[16384]{0}', space=vmem, size = 0x4000, scoped, tag = 'input window, operand 1, single buffered']
    #allocation4 [shape = 's32[1]{0}', space=sflag, size = 0x4, scoped, tag = 'scoped memory for xlstm_forward.11']
    %8 = vsyncpa [#allocation4], 0
    // Predicated region
    $region2: #{xlstm_forward.11} parent=1 // pred_check
      _
    $region3: #{xlstm_forward.11} parent=1 // pred_check_branch
      %10 = sbr.rel (0) target = $region5
    $region4: #{xlstm_forward.11} parent=1 // pred_region
      _
    $region5: #{xlstm_forward.11} parent=1 // pred_fallthru
      _
    // Predicated region
    $region6: #{xlstm_forward.11} parent=1 // pred_check
      _
    $region7: #{xlstm_forward.11} parent=1 // pred_check_branch
      %12 = sbr.rel (0) target = $region9
    $region8: #{xlstm_forward.11} parent=1 // pred_region
      %14 = vsyncadd [#allocation4], 0
      %s15 = sshll.u32 %s1, 4
      %s16 = int_to_ptr.hbm [resolvable:$true] %s15
      %s17 = sshll.u32 [#allocation3], 4
      %s18 = int_to_ptr.vmem [resolvable:$true] %s17
      %23 = dma.hbm_to_vmem [thread:$0]  %s16, 512, %s18, [#allocation4], 64, 64, 4
    $region9: #{xlstm_forward.11} parent=1 // pred_fallthru
      _
    // Predicated region
    $region10: #{xlstm_forward.11} parent=1 // pred_check
      _
    $region11: #{xlstm_forward.11} parent=1 // pred_check_branch
      %25 = sbr.rel (0) target = $region13
    $region12: #{xlstm_forward.11} parent=1 // pred_region
      _
    $region13: #{xlstm_forward.11} parent=1 // pred_fallthru
      _
    // Predicated region
    $region14: #{xlstm_forward.11} parent=1 // pred_check
      _
    $region15: #{xlstm_forward.11} parent=1 // pred_check_branch
      %27 = sbr.rel (0) target = $region17
    $region16: #{xlstm_forward.11} parent=1 // pred_region
      %29 = dma.done [#allocation4], 512
    $region17: #{xlstm_forward.11} parent=1 // pred_fallthru
      _
    %p31 = scmp.eq.s32.totalorder 0, 0
    // Predicated region
    $region18: #{xlstm_forward.11} parent=1 // pred_check
      %p32 = pneg %p31
    $region19: #{xlstm_forward.11} parent=1 // pred_check_branch
      %34 = sbr.rel (%p32) target = $region21
    $region20: #{xlstm_forward.11} parent=1 // pred_region
      %vm35 = vcmask 261120
      %36 = vst.msk [vmem:[#allocation2] sm:$0xff] %vm35, 0.0
      %37 = vst.msk [vmem:[#allocation2 + $0x8] sm:$0xff] %vm35, 0.0
    $region21: #{xlstm_forward.11} parent=1 // pred_fallthru
      _
    %v38 = vld [vmem:[#allocation2] sm:$0xff]
    %v39 = vld [vmem:[#allocation2 + $0x8] sm:$0xff]
    %v40 = vld [vmem:[%s0] sm:$0xf]
    %v41 = vld [vmem:[%s0 + $0x4] sm:$0xf]
    %v42 = vld [vmem:[#allocation3] sm:$0xf]
    %v43 = vld [vmem:[#allocation3 + $0x4] sm:$0xf]
    %v44 = vld [vmem:[#allocation3 + $0x8] sm:$0xf]
    %v45 = vld [vmem:[#allocation3 + $0xc] sm:$0xf]
    %v46 = vld [vmem:[#allocation3 + $0x10] sm:$0xf]
    %v47 = vld [vmem:[#allocation3 + $0x14] sm:$0xf]
    %v48 = vld [vmem:[#allocation3 + $0x18] sm:$0xf]
    %v49 = vld [vmem:[#allocation3 + $0x1c] sm:$0xf]
    %v52 = vunpack.c.l.b16 %v40
    %v53 = vunpack.c.l.b16 %v41
    %v54 = vpack.c.b16 %v53, %v52
    %v63 = vunpack.c.l.b16 %v42
    %v64 = vunpack.c.l.b16 %v43
    %v65 = vunpack.c.l.b16 %v44
    %v66 = vunpack.c.l.b16 %v45
    %v67 = vunpack.c.l.b16 %v46
    %v68 = vunpack.c.l.b16 %v47
    %v69 = vunpack.c.l.b16 %v48
    %v70 = vunpack.c.l.b16 %v49
    %v71 = vpack.c.b16 %v64, %v63
    %v72 = vpack.c.b16 %v66, %v65
    %v73 = vpack.c.b16 %v68, %v67
    %v74 = vpack.c.b16 %v70, %v69
    %vm79 = vcmask 523264
    %v81 = vsel %vm79, %v54, 0
    %83 = vmatpush.bf16.msra.mxu0 0
    %84 = vmatpush.bf16.msra.mxu0 0
    %85 = vmatpush.bf16.msra.mxu0 0
    %86 = vmatpush.bf16.msra.mxu0 0
    %87 = vmatpush.bf16.msra.mxu0 %v74
    %88 = vmatpush.bf16.msra.mxu0 %v73
    %89 = vmatpush.bf16.msra.mxu0 %v72
    %90 = vmatpush.bf16.msra.mxu0 %v71
    %91 = vmatmul.bf16.gmra.mxu0 %v81
    %v92 = vpop.f32.mrf.mxu0
    %v93 = vadd.f32 0.0, %v92
    %v94 = vpop.f32.mrf.mxu0
    %v95 = vadd.f32 0.0, %v94
    %96 = vdwg.mxu0
    %v97 = vadd.f32 %v38, %v93
    %v98 = vadd.f32 %v39, %v95
    %vm99 = vcmask 261120
    %100 = vst.msk [vmem:[#allocation2] sm:$0xff] %vm99, %v97
    %101 = vst.msk [vmem:[#allocation2 + $0x8] sm:$0xff] %vm99, %v98
    // Predicated region
    $region22: #{xlstm_forward.11} parent=1 // pred_check
      %p102 = pneg %p31
    $region23: #{xlstm_forward.11} parent=1 // pred_check_branch
      %104 = sbr.rel (%p102) target = $region25
    $region24: #{xlstm_forward.11} parent=1 // pred_region
      %v105 = vld [vmem:[#allocation2] sm:$0xff]
      %v106 = vld [vmem:[#allocation2 + $0x8] sm:$0xff]
      %v107 = vld [vmem:[%s2] sm:$0xf]
      %v108 = vld [vmem:[%s2 + $0x4] sm:$0xf]
      %v109 = vunpack.c.l.bf16 %v107
      %v110 = vunpack.c.l.bf16 %v108
      %v111 = vadd.f32 %v105, %v109
      %v112 = vadd.f32 %v106, %v110
      %v113 = vpack.c.bf16 %v111, %v111
      %v114 = vpack.c.bf16 %v112, %v112
      %vm115 = vcmask 257024
      %116 = vst.msk [vmem:[%s3] sm:$0xf] %vm115, %v113
      %117 = vst.msk [vmem:[%s3 + $0x4] sm:$0xf] %vm115, %v114
    $region25: #{xlstm_forward.11} parent=1 // pred_fallthru
      _
    // Predicated region
    $region26: #{xlstm_forward.11} parent=1 // pred_check
      _
    $region27: #{xlstm_forward.11} parent=1 // pred_check_branch
      %119 = sbr.rel (0) target = $region29
    $region28: #{xlstm_forward.11} parent=1 // pred_region
      _
    $region29: #{xlstm_forward.11} parent=1 // pred_fallthru
      _
    // Predicated region
    $region30: #{xlstm_forward.11} parent=1 // pred_check
      _
    $region31: #{xlstm_forward.11} parent=1 // pred_check_branch
      %121 = sbr.rel (0) target = $region33
    $region32: #{xlstm_forward.11} parent=1 // pred_region
      _
    $region33: #{xlstm_forward.11} parent=1 // pred_fallthru
      _
    %122 = vsyncpa [#allocation4], 1

// kernel: xlstm_forward.14
$region0: #{xlstm_forward.14}
  #allocation0 [shape = 'u32[]', space=smem, size = 0x4, offset = 0x4, fixed_abs, tag = 'smem constant byte address 0x4 - core index']
  #allocation1 [shape = 'u32[72,128]{1,0:T(1,128)}', space=vmem, size = 0x9000, scoped, tag = 'internal scratch']
  #allocation2 [shape = 'f32[16,32]{1,0:T(8,128)}', space=vmem, size = 0x2000, scoped, tag = 'scratch operand']
  %s0 = inlined_call_operand.vmem [shape: bf16[16,64], index: 0, kind: input, shape index: {}]
  %s1 = inlined_call_operand.vmem [shape: bf16[64,32], index: 1, kind: input, shape index: {}]
  %s2 = inlined_call_operand.vmem [shape: bf16[16,32], index: 2, kind: input, shape index: {}]
  %s3 = inlined_call_operand.vmem [shape: bf16[16,32], index: 3, kind: output, shape index: {}]
  %s4 = sld [smem:[#allocation0]]
  $region30: #{xlstm_forward.14} parent=0
    _
  %s6 = ssub.s32 1, %s4
  %s7 = scalar_select 0, %s6, %s4
  // Predicated region
  $region2: #{xlstm_forward.14} parent=0 // pred_check
    _
  $region3: #{xlstm_forward.14} parent=0 // pred_check_branch
    %9 = sbr.rel (0) target = $region5
  $region4: #{xlstm_forward.14} parent=0 // pred_region
    _
  $region5: #{xlstm_forward.14} parent=0 // pred_fallthru
    _
  // Predicated region
  $region6: #{xlstm_forward.14} parent=0 // pred_check
    _
  $region7: #{xlstm_forward.14} parent=0 // pred_check_branch
    %11 = sbr.rel (0) target = $region9
  $region8: #{xlstm_forward.14} parent=0 // pred_region
    _
  $region9: #{xlstm_forward.14} parent=0 // pred_fallthru
    _
  // Predicated region
  $region10: #{xlstm_forward.14} parent=0 // pred_check
    _
  $region11: #{xlstm_forward.14} parent=0 // pred_check_branch
    %13 = sbr.rel (0) target = $region13
  $region12: #{xlstm_forward.14} parent=0 // pred_region
    _
  $region13: #{xlstm_forward.14} parent=0 // pred_fallthru
    _
  %p15 = scmp.eq.s32.totalorder 0, 0
  // Predicated region
  $region14: #{xlstm_forward.14} parent=0 // pred_check
    %p16 = pneg %p15
  $region15: #{xlstm_forward.14} parent=0 // pred_check_branch
    %18 = sbr.rel (%p16) target = $region17
  $region16: #{xlstm_forward.14} parent=0 // pred_region
    %vm19 = vcmask 261120
    %20 = vst.msk [vmem:[#allocation2] sm:$0xff] %vm19, 0.0
    %21 = vst.msk [vmem:[#allocation2 + $0x8] sm:$0xff] %vm19, 0.0
  $region17: #{xlstm_forward.14} parent=0 // pred_fallthru
    _
  %v22 = vld [vmem:[#allocation2] sm:$0xff]
  %v23 = vld [vmem:[#allocation2 + $0x8] sm:$0xff]
  %v24 = vld [vmem:[%s0] sm:$0xf]
  %v25 = vld [vmem:[%s0 + $0x4] sm:$0xf]
  %v26 = vld [vmem:[%s1] sm:$0xf]
  %v27 = vld [vmem:[%s1 + $0x4] sm:$0xf]
  %v28 = vld [vmem:[%s1 + $0x8] sm:$0xf]
  %v29 = vld [vmem:[%s1 + $0xc] sm:$0xf]
  %v30 = vld [vmem:[%s1 + $0x10] sm:$0xf]
  %v31 = vld [vmem:[%s1 + $0x14] sm:$0xf]
  %v32 = vld [vmem:[%s1 + $0x18] sm:$0xf]
  %v33 = vld [vmem:[%s1 + $0x1c] sm:$0xf]
  %v36 = vunpack.c.l.b16 %v24
  %v37 = vunpack.c.l.b16 %v25
  %v38 = vpack.c.b16 %v37, %v36
  %v47 = vunpack.c.l.b16 %v26
  %v48 = vunpack.c.l.b16 %v27
  %v49 = vunpack.c.l.b16 %v28
  %v50 = vunpack.c.l.b16 %v29
  %v51 = vunpack.c.l.b16 %v30
  %v52 = vunpack.c.l.b16 %v31
  %v53 = vunpack.c.l.b16 %v32
  %v54 = vunpack.c.l.b16 %v33
  %v55 = vpack.c.b16 %v48, %v47
  %v56 = vpack.c.b16 %v50, %v49
  %v57 = vpack.c.b16 %v52, %v51
  %v58 = vpack.c.b16 %v54, %v53
  %vm63 = vcmask 523264
  %v65 = vsel %vm63, %v38, 0
  %67 = vmatpush.bf16.msra.mxu0 0
  %68 = vmatpush.bf16.msra.mxu0 0
  %69 = vmatpush.bf16.msra.mxu0 0
  %70 = vmatpush.bf16.msra.mxu0 0
  %71 = vmatpush.bf16.msra.mxu0 %v58
  %72 = vmatpush.bf16.msra.mxu0 %v57
  %73 = vmatpush.bf16.msra.mxu0 %v56
  %74 = vmatpush.bf16.msra.mxu0 %v55
  %75 = vmatmul.bf16.gmra.mxu0 %v65
  %v76 = vpop.f32.mrf.mxu0
  %v77 = vadd.f32 0.0, %v76
  %v78 = vpop.f32.mrf.mxu0
  %v79 = vadd.f32 0.0, %v78
  %80 = vdwg.mxu0
  %v81 = vadd.f32 %v22, %v77
  %v82 = vadd.f32 %v23, %v79
  %vm83 = vcmask 261120
  %84 = vst.msk [vmem:[#allocation2] sm:$0xff] %vm83, %v81
  %85 = vst.msk [vmem:[#allocation2 + $0x8] sm:$0xff] %vm83, %v82
  // Predicated region
  $region18: #{xlstm_forward.14} parent=0 // pred_check
    %p86 = pneg %p15
  $region19: #{xlstm_forward.14} parent=0 // pred_check_branch
    %88 = sbr.rel (%p86) target = $region21
  $region20: #{xlstm_forward.14} parent=0 // pred_region
    %v89 = vld [vmem:[#allocation2] sm:$0xff]
    %v90 = vld [vmem:[#allocation2 + $0x8] sm:$0xff]
    %v91 = vld [vmem:[%s2] sm:$0xf]
    %v92 = vld [vmem:[%s2 + $0x4] sm:$0xf]
    %v93 = vunpack.c.l.bf16 %v91
    %v94 = vunpack.c.l.bf16 %v92
    %v95 = vadd.f32 %v89, %v93
    %v96 = vadd.f32 %v90, %v94
    %v97 = vpack.c.bf16 %v95, %v95
    %v98 = vpack.c.bf16 %v96, %v96
    %vm99 = vcmask 257024
    %100 = vst.msk [vmem:[%s3] sm:$0xf] %vm99, %v97
    %101 = vst.msk [vmem:[%s3 + $0x4] sm:$0xf] %vm99, %v98
  $region21: #{xlstm_forward.14} parent=0 // pred_fallthru
    _
  // Predicated region
  $region22: #{xlstm_forward.14} parent=0 // pred_check
    _
  $region23: #{xlstm_forward.14} parent=0 // pred_check_branch
    %103 = sbr.rel (0) target = $region25
  $region24: #{xlstm_forward.14} parent=0 // pred_region
    _
  $region25: #{xlstm_forward.14} parent=0 // pred_fallthru
    _
  // Predicated region
  $region26: #{xlstm_forward.14} parent=0 // pred_check
    _
  $region27: #{xlstm_forward.14} parent=0 // pred_check_branch
    %105 = sbr.rel (0) target = $region29
  $region28: #{xlstm_forward.14} parent=0 // pred_region
    _
  $region29: #{xlstm_forward.14} parent=0 // pred_fallthru
    _

// kernel: xlstm_forward.10
$region0: #{xlstm_forward.10}
  #allocation0 [shape = 'u32[]', space=smem, size = 0x4, offset = 0x4, fixed_abs, tag = 'smem constant byte address 0x4 - core index']
  #allocation1 [shape = 'u32[72,128]{1,0:T(1,128)}', space=vmem, size = 0x9000, scoped, tag = 'internal scratch']
  %s0 = inlined_call_operand.vmem [shape: bf16[2,8,512], index: 0, kind: input, shape index: {}]
  %s1 = inlined_call_operand.vmem [shape: f32[4,64], index: 1, kind: input, shape index: {}]
  %s2 = inlined_call_operand.vmem [shape: f32[1,64], index: 2, kind: input, shape index: {}]
  %s3 = inlined_call_operand.hbm [shape: bf16[64,384], index: 3, kind: input, shape index: {}]
  %s4 = inlined_call_operand.vmem [shape: f32[1,384], index: 4, kind: input, shape index: {}]
  %s5 = inlined_call_operand.vmem [shape: f32[4,16], index: 5, kind: input, shape index: {}]
  %s6 = inlined_call_operand.vmem [shape: f32[1,64], index: 6, kind: input, shape index: {}]
  %s7 = inlined_call_operand.vmem [shape: bf16[2,8,64], index: 7, kind: output, shape index: {}]
  %s8 = sld [smem:[#allocation0]]
  $region65: #{xlstm_forward.10} parent=0
    _
  %s10 = ssub.s32 1, %s8
  %s11 = scalar_select 0, %s10, %s8
  $region1: #{xlstm_forward.10} parent=0
    #allocation2 [shape = 'u8[49152]{0}', space=vmem, size = 0xc000, scoped, tag = 'input window, operand 3, single buffered']
    #allocation3 [shape = 's32[2]{0}', space=sflag, size = 0x8, scoped, tag = 'scoped memory for xlstm_forward.10']
    %12 = vsyncpa [#allocation3], 0
    loop: start=0, step=1, limit=4
    $region2: #{xlstm_forward.10} parent=1 // loop_pre_header
      _
    $region3: #{xlstm_forward.10} parent=1 // loop_header
      %s14 = sphi 0, %s18
      %p15 = scmp.ge.s32.totalorder %s14, 4
      %s24 = sphi 0, %s26
      %s27 = sphi 0, %s24
      %s28 = sphi 0, %s27
      %s44 = sphi 0, %s28
      %s48 = sphi 0, %s48
      %s50 = sphi 0, %s48
      %s51 = sphi 0, %s50
      %s65 = sphi 0, %s51
      %s69 = sphi 0, %s69
      %s71 = sphi 0, %s69
      %s72 = sphi 0, %s71
      %s86 = sphi 0, %s72
      %s90 = sphi 0, %s90
      %s92 = sphi 0, %s90
      %s93 = sphi 0, %s92
      %s107 = sphi 0, %s93
      %s111 = sphi 0, %s111
      %s113 = sphi 0, %s111
      %s114 = sphi 0, %s113
      %s128 = sphi 0, %s114
      %s132 = sphi 0, %s132
      %s134 = sphi 0, %s132
      %s135 = sphi 0, %s134
      %s149 = sphi 0, %s135
      %s153 = sphi 0, %s153
      %s155 = sphi 0, %s153
      %s156 = sphi 0, %s155
      %s170 = sphi 0, %s156
      %s176 = sphi 0, %s178
      %s179 = sphi 0, %s176
      %s180 = sphi 0, %s179
      %s196 = sphi 0, %s180
    $region4: #{xlstm_forward.10} parent=1 // loop_header_branch
      %17 = sbr.rel (%p15) target = $region8
    $region5: #{xlstm_forward.10} parent=1 // loop_body
      %s19 = ssub.s32 %s14, 1
      %s20 = ssub.s32 %s14, 2
      %s21 = sadd.s32 %s14, 1
      %s22 = ssub.s32 %s14, %s21
      %p23 = scmp.eq.s32.totalorder %s22, 0
      %s25 = sadd.s32 %s24, 1
      %s26 = scalar_select %p23, %s24, %s25
      %p29 = pneg %p23
      %p30 = scmp.eq.s32.totalorder %s14, 1
      %p31 = por %p29, %p30
      %p32 = scmp.ne.s32.totalorder %s24, %s27
      %p33 = scmp.eq.s32.totalorder %s14, 0
      %p34 = por %p32, %p33
      %p35 = scmp.ne.s32.totalorder %s24, %s27
      %p36 = scmp.eq.s32.totalorder %s19, 1
      %p37 = por %p35, %p36
      %p38 = scmp.ne.s32.totalorder %s27, %s28
      %p39 = scmp.eq.s32.totalorder %s19, 0
      %p40 = por %p38, %p39
      %p41 = scmp.ne.s32.totalorder %s27, %s28
      %p42 = scmp.eq.s32.totalorder %s20, 1
      %p43 = por %p41, %p42
      %p45 = scmp.ne.s32.totalorder %s28, %s44
      %p46 = scmp.eq.s32.totalorder %s20, 0
      %p47 = por %p45, %p46
      %s49 = sadd.s32 %s48, 1
      %p52 = scmp.eq.s32.totalorder %s14, 1
      %p53 = scmp.ne.s32.totalorder %s48, %s50
      %p54 = scmp.eq.s32.totalorder %s14, 0
      %p55 = por %p53, %p54
      %p56 = scmp.ne.s32.totalorder %s48, %s50
      %p57 = scmp.eq.s32.totalorder %s19, 1
      %p58 = por %p56, %p57
      %p59 = scmp.ne.s32.totalorder %s50, %s51
      %p60 = scmp.eq.s32.totalorder %s19, 0
      %p61 = por %p59, %p60
      %p62 = scmp.ne.s32.totalorder %s50, %s51
      %p63 = scmp.eq.s32.totalorder %s20, 1
      %p64 = por %p62, %p63
      %p66 = scmp.ne.s32.totalorder %s51, %s65
      %p67 = scmp.eq.s32.totalorder %s20, 0
      %p68 = por %p66, %p67
      %s70 = sadd.s32 %s69, 1
      %p73 = scmp.eq.s32.totalorder %s14, 1
      %p74 = scmp.ne.s32.totalorder %s69, %s71
      %p75 = scmp.eq.s32.totalorder %s14, 0
      %p76 = por %p74, %p75
      %p77 = scmp.ne.s32.totalorder %s69, %s71
      %p78 = scmp.eq.s32.totalorder %s19, 1
      %p79 = por %p77, %p78
      %p80 = scmp.ne.s32.totalorder %s71, %s72
      %p81 = scmp.eq.s32.totalorder %s19, 0
      %p82 = por %p80, %p81
      %p83 = scmp.ne.s32.totalorder %s71, %s72
      %p84 = scmp.eq.s32.totalorder %s20, 1
      %p85 = por %p83, %p84
      %p87 = scmp.ne.s32.totalorder %s72, %s86
      %p88 = scmp.eq.s32.totalorder %s20, 0
      %p89 = por %p87, %p88
      %s91 = sadd.s32 %s90, 1
      %p94 = scmp.eq.s32.totalorder %s14, 1
      %p95 = scmp.ne.s32.totalorder %s90, %s92
      %p96 = scmp.eq.s32.totalorder %s14, 0
      %p97 = por %p95, %p96
      %p98 = scmp.ne.s32.totalorder %s90, %s92
      %p99 = scmp.eq.s32.totalorder %s19, 1
      %p100 = por %p98, %p99
      %p101 = scmp.ne.s32.totalorder %s92, %s93
      %p102 = scmp.eq.s32.totalorder %s19, 0
      %p103 = por %p101, %p102
      %p104 = scmp.ne.s32.totalorder %s92, %s93
      %p105 = scmp.eq.s32.totalorder %s20, 1
      %p106 = por %p104, %p105
      %p108 = scmp.ne.s32.totalorder %s93, %s107
      %p109 = scmp.eq.s32.totalorder %s20, 0
      %p110 = por %p108, %p109
      %s112 = sadd.s32 %s111, 1
      %p115 = scmp.eq.s32.totalorder %s14, 1
      %p116 = scmp.ne.s32.totalorder %s111, %s113
      %p117 = scmp.eq.s32.totalorder %s14, 0
      %p118 = por %p116, %p117
      %p119 = scmp.ne.s32.totalorder %s111, %s113
      %p120 = scmp.eq.s32.totalorder %s19, 1
      %p121 = por %p119, %p120
      %p122 = scmp.ne.s32.totalorder %s113, %s114
      %p123 = scmp.eq.s32.totalorder %s19, 0
      %p124 = por %p122, %p123
      %p125 = scmp.ne.s32.totalorder %s113, %s114
      %p126 = scmp.eq.s32.totalorder %s20, 1
      %p127 = por %p125, %p126
      %p129 = scmp.ne.s32.totalorder %s114, %s128
      %p130 = scmp.eq.s32.totalorder %s20, 0
      %p131 = por %p129, %p130
      %s133 = sadd.s32 %s132, 1
      %p136 = scmp.eq.s32.totalorder %s14, 1
      %p137 = scmp.ne.s32.totalorder %s132, %s134
      %p138 = scmp.eq.s32.totalorder %s14, 0
      %p139 = por %p137, %p138
      %p140 = scmp.ne.s32.totalorder %s132, %s134
      %p141 = scmp.eq.s32.totalorder %s19, 1
      %p142 = por %p140, %p141
      %p143 = scmp.ne.s32.totalorder %s134, %s135
      %p144 = scmp.eq.s32.totalorder %s19, 0
      %p145 = por %p143, %p144
      %p146 = scmp.ne.s32.totalorder %s134, %s135
      %p147 = scmp.eq.s32.totalorder %s20, 1
      %p148 = por %p146, %p147
      %p150 = scmp.ne.s32.totalorder %s135, %s149
      %p151 = scmp.eq.s32.totalorder %s20, 0
      %p152 = por %p150, %p151
      %s154 = sadd.s32 %s153, 1
      %p157 = scmp.eq.s32.totalorder %s14, 1
      %p158 = scmp.ne.s32.totalorder %s153, %s155
      %p159 = scmp.eq.s32.totalorder %s14, 0
      %p160 = por %p158, %p159
      %p161 = scmp.ne.s32.totalorder %s153, %s155
      %p162 = scmp.eq.s32.totalorder %s19, 1
      %p163 = por %p161, %p162
      %p164 = scmp.ne.s32.totalorder %s155, %s156
      %p165 = scmp.eq.s32.totalorder %s19, 0
      %p166 = por %p164, %p165
      %p167 = scmp.ne.s32.totalorder %s155, %s156
      %p168 = scmp.eq.s32.totalorder %s20, 1
      %p169 = por %p167, %p168
      %p171 = scmp.ne.s32.totalorder %s156, %s170
      %p172 = scmp.eq.s32.totalorder %s20, 0
      %p173 = por %p171, %p172
      %s174 = ssub.s32 %s14, %s21
      %p175 = scmp.eq.s32.totalorder %s174, 0
      %s177 = sadd.s32 %s176, 1
      %s178 = scalar_select %p175, %s176, %s177
      %p181 = pneg %p175
      %p182 = scmp.eq.s32.totalorder %s14, 1
      %p183 = por %p181, %p182
      %p184 = scmp.ne.s32.totalorder %s176, %s179
      %p185 = scmp.eq.s32.totalorder %s14, 0
      %p186 = por %p184, %p185
      %p187 = scmp.ne.s32.totalorder %s176, %s179
      %p188 = scmp.eq.s32.totalorder %s19, 1
      %p189 = por %p187, %p188
      %p190 = scmp.ne.s32.totalorder %s179, %s180
      %p191 = scmp.eq.s32.totalorder %s19, 0
      %p192 = por %p190, %p191
      %p193 = scmp.ne.s32.totalorder %s179, %s180
      %p194 = scmp.eq.s32.totalorder %s20, 1
      %p195 = por %p193, %p194
      %p197 = scmp.ne.s32.totalorder %s180, %s196
      %p198 = scmp.eq.s32.totalorder %s20, 0
      %p199 = por %p197, %p198
      %p200 = scmp.le.s32.totalorder 1, %s14
      %p201 = scmp.lt.s32.totalorder %s14, 3
      %p202 = pnand %p200, %p201
      %p203 = pneg %p202
      // Predicated region
      $region9: #{xlstm_forward.10} parent=5 // pred_check
        _
      $region10: #{xlstm_forward.10} parent=5 // pred_check_branch
        %205 = sbr.rel (%p202) target = $region12
      $region11: #{xlstm_forward.10} parent=5 // pred_region
        %s206 = ssub.s32 %s14, 1
        // Predicated region
        $region13: #{xlstm_forward.10} parent=11 // pred_check
          %p207 = pneg %p61
        $region14: #{xlstm_forward.10} parent=11 // pred_check_branch
          %209 = sbr.rel (%p207) target = $region16
        $region15: #{xlstm_forward.10} parent=11 // pred_region
          _
        $region16: #{xlstm_forward.10} parent=11 // pred_fallthru
          _
        // Predicated region
        $region17: #{xlstm_forward.10} parent=11 // pred_check
          %p210 = pneg %p82
        $region18: #{xlstm_forward.10} parent=11 // pred_check_branch
          %212 = sbr.rel (%p210) target = $region20
        $region19: #{xlstm_forward.10} parent=11 // pred_region
          _
        $region20: #{xlstm_forward.10} parent=11 // pred_fallthru
          _
        // Predicated region
        $region21: #{xlstm_forward.10} parent=11 // pred_check
          %p213 = pneg %p103
        $region22: #{xlstm_forward.10} parent=11 // pred_check_branch
          %215 = sbr.rel (%p213) target = $region24
        $region23: #{xlstm_forward.10} parent=11 // pred_region
          %217 = vsyncadd [#allocation3], 0
          %s218 = sshll.u32 %s3, 4
          %s219 = int_to_ptr.hbm [resolvable:$true] %s218
          %s220 = sshll.u32 [#allocation2], 4
          %s221 = int_to_ptr.vmem [resolvable:$true] %s220
          %226 = dma.hbm_to_vmem [thread:$0]  %s219, 1536, %s221, [#allocation3], 192, 192, 12
        $region24: #{xlstm_forward.10} parent=11 // pred_fallthru
          _
        // Predicated region
        $region25: #{xlstm_forward.10} parent=11 // pred_check
          %p227 = pneg %p124
        $region26: #{xlstm_forward.10} parent=11 // pred_check_branch
          %229 = sbr.rel (%p227) target = $region28
        $region27: #{xlstm_forward.10} parent=11 // pred_region
          _
        $region28: #{xlstm_forward.10} parent=11 // pred_fallthru
          _
        // Predicated region
        $region29: #{xlstm_forward.10} parent=11 // pred_check
          %p230 = pneg %p145
        $region30: #{xlstm_forward.10} parent=11 // pred_check_branch
          %232 = sbr.rel (%p230) target = $region32
        $region31: #{xlstm_forward.10} parent=11 // pred_region
          _
        $region32: #{xlstm_forward.10} parent=11 // pred_fallthru
          _
        // Predicated region
        $region33: #{xlstm_forward.10} parent=11 // pred_check
          %p233 = pneg %p166
        $region34: #{xlstm_forward.10} parent=11 // pred_check_branch
          %235 = sbr.rel (%p233) target = $region36
        $region35: #{xlstm_forward.10} parent=11 // pred_region
          _
        $region36: #{xlstm_forward.10} parent=11 // pred_fallthru
          _
      $region12: #{xlstm_forward.10} parent=5 // pred_fallthru
        _
      %p236 = scmp.lt.s32.totalorder %s14, 2
      // Predicated region
      $region37: #{xlstm_forward.10} parent=5 // pred_check
        %p237 = pneg %p236
      $region38: #{xlstm_forward.10} parent=5 // pred_check_branch
        %239 = sbr.rel (%p237) target = $region40
      $region39: #{xlstm_forward.10} parent=5 // pred_region
        // Predicated region
        $region41: #{xlstm_forward.10} parent=39 // pred_check
          %p240 = pneg %p34
        $region42: #{xlstm_forward.10} parent=39 // pred_check_branch
          %242 = sbr.rel (%p240) target = $region44
        $region43: #{xlstm_forward.10} parent=39 // pred_region
          %p243 = scmp.lt.s32.totalorder %s14, 1
          %s244 = scalar_select %p243, %s14, 1
          %s245 = smul.addr %s244, 4
          %s246 = smul.addr %s245, 4
          %s247 = scalar_lea.vmem %s0, %s246
        $region44: #{xlstm_forward.10} parent=39 // pred_fallthru
          _
      $region40: #{xlstm_forward.10} parent=5 // pred_fallthru
        _
      %p248 = scmp.le.s32.totalorder 1, %s14
      %p249 = scmp.lt.s32.totalorder %s14, 3
      %p250 = pnand %p248, %p249
      %p251 = pneg %p250
      // Predicated region
      $region45: #{xlstm_forward.10} parent=5 // pred_check
        _
      $region46: #{xlstm_forward.10} parent=5 // pred_check_branch
        %253 = sbr.rel (%p250) target = $region48
      $region47: #{xlstm_forward.10} parent=5 // pred_region
        %s254 = ssub.s32 %s14, 1
        // Predicated region
        $region49: #{xlstm_forward.10} parent=47 // pred_check
          %p255 = pneg %p103
        $region50: #{xlstm_forward.10} parent=47 // pred_check_branch
          %257 = sbr.rel (%p255) target = $region52
        $region51: #{xlstm_forward.10} parent=47 // pred_region
          %259 = dma.done [#allocation3], 1536
        $region52: #{xlstm_forward.10} parent=47 // pred_fallthru
          _
        %p260 = scmp.lt.s32.totalorder %s19, 1
        %s261 = scalar_select %p260, %s19, 1
        %s262 = smul.addr %s261, 4
        %s263 = smul.addr %s262, 4
        %s264 = scalar_lea.vmem %s0, %s263
        %p265 = pneg %p40
        %p266 = pneg %p37
        %p267 = pneg %p61
        %p268 = pneg %p58
        %p269 = pneg %p82
        %p270 = pneg %p79
        %p271 = pneg %p103
        %p272 = pneg %p100
        %p273 = pneg %p124
        %p274 = pneg %p121
        %p275 = pneg %p145
        %p276 = pneg %p142
        %p277 = pneg %p166
        %p278 = pneg %p163
        %p279 = pneg %p192
        %p280 = pneg %p189
        %p281 = scmp.lt.s32.totalorder %s19, 1
        %s282 = scalar_select %p281, %s19, 1
        %s283 = smul.addr %s282, 4
        %s284 = scalar_lea.vmem %s7, %s283
        %p285 = scmp.lt.s32.totalorder %s19, 1
        %s286 = scalar_select %p285, %s19, 1
        %s287 = smul.addr %s286, 4
        %s288 = smul.addr %s287, 4
        %s289 = scalar_lea.vmem %s0, %s288
        %p290 = scmp.lt.s32.totalorder %s19, 1
        %s291 = scalar_select %p290, %s19, 1
        %s292 = smul.addr %s291, 4
        %s293 = scalar_lea.vmem %s7, %s292
        %v295 = vld [vmem:[%s289] sm:$0xff]
        %v296 = vld [vmem:[%s289 + $0x8] sm:$0xff]
        %v297 = vunpack.c.l.bf16 %v295
        %v299 = vrot.slane %v295, 4
        %v301 = vunpack.c.l.bf16 %v299
        %v303 = vrot.slane %v296, 4
        %v305 = vunpack.c.l.bf16 %v303
        %v306 = vlaneseq
        %v307 = vshrl.u32 %v306, 7
        %v308 = vld [vmem:[%s1] sm:$0xf]
        %v309 = vperm.slane %v308, 3
        %v310 = vmul.f32 %v297, %v309
        %v311 = vrot.slane %v297, 7
        %vm312 = vcmp.ge.s32.totalorder %v307, 1
        %v313 = vsel %vm312, 1, 0
        %vm314 = vcmp.eq.s32.totalorder %v313, 1
        %v315 = vsel %vm314, %v311, 0.0
        %v316 = vperm.slane %v308, 2
        %v317 = vmul.f32 %v315, %v316
        %v318 = vadd.f32 %v310, %v317
        %v319 = vrot.slane %v297, 6
        %vm320 = vcmp.ge.s32.totalorder %v307, 2
        %v321 = vsel %vm320, 1, 0
        %vm322 = vcmp.eq.s32.totalorder %v321, 1
        %v323 = vsel %vm322, %v319, 0.0
        %v324 = vperm.slane %v308, 1
        %v325 = vmul.f32 %v323, %v324
        %v326 = vadd.f32 %v318, %v325
        %v327 = vrot.slane %v297, 5
        %vm328 = vcmp.ge.s32.totalorder %v307, 3
        %v329 = vsel %vm328, 1, 0
        %vm330 = vcmp.eq.s32.totalorder %v329, 1
        %v331 = vsel %vm330, %v327, 0.0
        %v332 = vperm.slane %v308, 0
        %v333 = vmul.f32 %v331, %v332
        %v334 = vadd.f32 %v326, %v333
        %v335 = vld [vmem:[%s2] sm:$0x1]
        %v337 = vperm.slane %v335, 0
        %v339 = vadd.f32 %v334, %v337
        %v340 = vxor.u32 %v339, 2147483648
        %v341 = vmul.f32 %v340, 1.442695
        %v342 = vpow.pop %v341
        %v343 = vadd.f32 %v342, 1.0
        %v344 = vrcp.pop %v343
        %v345 = vmul.f32 %v343, %v344
        %v346 = vsub.f32 1.0, %v345
        %v347 = vmul.f32 %v344, %v346
        %v348 = vadd.f32 %v344, %v347
        %vm349 = vweird.f32 %v343
        %vm350 = vweird.f32 %v344
        %vm351 = vmor %vm349, %vm350
        %v352 = vsel %vm351, %v344, %v348
        %v353 = vand.u32 2147483647, %v343
        %vm354 = vcmp.eq.f32.partialorder %v353, 8.507059e+37
        %v355 = vand.u32 %v343, 2147483648
        %v356 = vor.u32 1.1754944e-38, %v355
        %v357 = vsel %vm354, %v356, %v352
        %v358 = vmul.f32 1.0, %v357
        %v359 = vmul.f32 %v339, %v358
        %v360 = vpack.c.bf16 %v359, %v359
        %v361 = vld [vmem:[#allocation2] sm:$0xff]
        %v362 = vld [vmem:[#allocation2 + $0x8] sm:$0xf]
        %v363 = vld [vmem:[#allocation2 + $0xc] sm:$0xff]
        %v364 = vld [vmem:[#allocation2 + $0x14] sm:$0xf]
        %v365 = vld [vmem:[#allocation2 + $0x18] sm:$0xff]
        %v366 = vld [vmem:[#allocation2 + $0x20] sm:$0xf]
        %v367 = vld [vmem:[#allocation2 + $0x24] sm:$0xff]
        %v368 = vld [vmem:[#allocation2 + $0x2c] sm:$0xf]
        %v369 = vld [vmem:[#allocation2 + $0x30] sm:$0xff]
        %v370 = vld [vmem:[#allocation2 + $0x38] sm:$0xf]
        %v371 = vld [vmem:[#allocation2 + $0x3c] sm:$0xff]
        %v372 = vld [vmem:[#allocation2 + $0x44] sm:$0xf]
        %v373 = vld [vmem:[#allocation2 + $0x48] sm:$0xff]
        %v374 = vld [vmem:[#allocation2 + $0x50] sm:$0xf]
        %v375 = vld [vmem:[#allocation2 + $0x54] sm:$0xff]
        %v376 = vld [vmem:[#allocation2 + $0x5c] sm:$0xf]
        %v377 = vld [vmem:[%s4] sm:$0x7]
        %v379 = vperm.slane %v377, 0
        %v380 = vperm.slane %v377, 1
        %v381 = vperm.slane %v377, 2
        %v401 = vunpack.c.l.b16 %v361
        %v402 = vunpack.c.h.b16 %v361
        %v403 = vunpack.c.l.b16 %v362
        %v404 = vunpack.c.l.b16 %v363
        %v405 = vunpack.c.h.b16 %v363
        %v406 = vunpack.c.l.b16 %v364
        %v407 = vunpack.c.l.b16 %v365
        %v408 = vunpack.c.h.b16 %v365
        %v409 = vunpack.c.l.b16 %v366
        %v410 = vunpack.c.l.b16 %v367
        %v411 = vunpack.c.h.b16 %v367
        %v412 = vunpack.c.l.b16 %v368
        %v413 = vunpack.c.l.b16 %v369
        %v414 = vunpack.c.h.b16 %v369
        %v415 = vunpack.c.l.b16 %v370
        %v416 = vunpack.c.l.b16 %v371
        %v417 = vunpack.c.h.b16 %v371
        %v418 = vunpack.c.l.b16 %v372
        %v419 = vunpack.c.l.b16 %v373
        %v420 = vunpack.c.h.b16 %v373
        %v421 = vunpack.c.l.b16 %v374
        %v422 = vunpack.c.l.b16 %v375
        %v423 = vunpack.c.h.b16 %v375
        %v424 = vunpack.c.l.b16 %v376
        %v425 = vpack.c.b16 %v404, %v401
        %v426 = vpack.c.b16 %v405, %v402
        %v427 = vpack.c.b16 %v406, %v403
        %v428 = vpack.c.b16 %v410, %v407
        %v429 = vpack.c.b16 %v411, %v408
        %v430 = vpack.c.b16 %v412, %v409
        %v431 = vpack.c.b16 %v416, %v413
        %v432 = vpack.c.b16 %v417, %v414
        %v433 = vpack.c.b16 %v418, %v415
        %v434 = vpack.c.b16 %v422, %v419
        %v435 = vpack.c.b16 %v423, %v420
        %v436 = vpack.c.b16 %v424, %v421
        %vm449 = vcmask 523264
        %v451 = vsel %vm449, %v360, 0
        %453 = vmatpush.bf16.msra.mxu0 0
        %454 = vmatpush.bf16.msra.mxu0 0
        %455 = vmatpush.bf16.msra.mxu0 0
        %456 = vmatpush.bf16.msra.mxu0 0
        %457 = vmatpush.bf16.msra.mxu0 %v434
        %458 = vmatpush.bf16.msra.mxu0 %v431
        %459 = vmatpush.bf16.msra.mxu0 %v428
        %460 = vmatpush.bf16.msra.mxu0 %v425
        %461 = vmatmul.bf16.gmra.mxu0 %v451
        %v462 = vpop.f32.mrf.mxu0
        %v463 = vadd.f32 %v379, %v462
        %v464 = vpop.f32.mrf.mxu0
        %465 = vdwg.mxu0
        %466 = vmatpush.bf16.msra.mxu0 0
        %467 = vmatpush.bf16.msra.mxu0 0
        %468 = vmatpush.bf16.msra.mxu0 0
        %469 = vmatpush.bf16.msra.mxu0 0
        %470 = vmatpush.bf16.msra.mxu0 %v435
        %471 = vmatpush.bf16.msra.mxu0 %v432
        %472 = vmatpush.bf16.msra.mxu0 %v429
        %473 = vmatpush.bf16.msra.mxu0 %v426
        %474 = vmatmul.bf16.gmra.mxu0 %v451
        %v475 = vpop.f32.mrf.mxu0
        %v476 = vadd.f32 %v380, %v475
        %v477 = vpop.f32.mrf.mxu0
        %478 = vdwg.mxu0
        %479 = vmatpush.bf16.msra.mxu0 0
        %480 = vmatpush.bf16.msra.mxu0 0
        %481 = vmatpush.bf16.msra.mxu0 0
        %482 = vmatpush.bf16.msra.mxu0 0
        %483 = vmatpush.bf16.msra.mxu0 %v436
        %484 = vmatpush.bf16.msra.mxu0 %v433
        %485 = vmatpush.bf16.msra.mxu0 %v430
        %486 = vmatpush.bf16.msra.mxu0 %v427
        %487 = vmatmul.bf16.gmra.mxu0 %v451
        %v488 = vpop.f32.mrf.mxu0
        %v489 = vadd.f32 %v381, %v488
        %v490 = vpop.f32.mrf.mxu0
        %491 = vdwg.mxu0
        %v492 = vadd.f32 %v489, %v305
        %v493 = vmin.f32 %v492, 0.0
        %v494 = vand.u32 2147483647, %v492
        %v495 = vsub.f32 0.0, %v494
        %v496 = vmul.f32 %v495, 1.442695
        %v497 = vpow.pop %v496
        %v498 = vadd.f32 %v497, 1.0
        %v499 = vlog2.pop %v498
        %v500 = vmul.f32 %v499, 0.6931472
        %v501 = vmul.f32 -0.5, %v497
        %v502 = vadd.f32 %v501, 1.0
        %v503 = vmul.f32 %v502, %v497
        %v504 = vand.u32 2147483647, %v497
        %vm505 = vcmp.lt.f32.partialorder %v504, 0.0004427343
        %v506 = vsel %vm505, %v503, %v500
        %v507 = vsub.f32 %v493, %v506
        %v508 = vrot.slane %v507, 7
        %v509 = vsel %vm314, %v508, 0.0
        %v510 = vadd.f32 %v507, %v509
        %v511 = vrot.slane %v510, 6
        %v512 = vsel %vm322, %v511, 0.0
        %v513 = vadd.f32 %v510, %v512
        %vm514 = vcmp.ge.s32.totalorder %v307, 4
        %v515 = vrot.slane %v513, 4
        %v516 = vsel %vm514, 1, 0
        %vm517 = vcmp.eq.s32.totalorder %v516, 1
        %v518 = vsel %vm517, %v515, 0.0
        %v519 = vadd.f32 %v513, %v518
        %v520 = vlaneseq
        %v521 = vand.u32 %v520, 127
        %vm522 = vcmp.le.s32.totalorder %v521, %v307
        %v523 = vld [vmem:[%s5] sm:$0xf]
        %v524 = vld [vmem:[%s6] sm:$0x1]
        %v525 = vxor.u32 %v301, 2147483648
        %v526 = vmul.f32 %v525, 1.442695
        %v527 = vpow.pop %v526
        %v528 = vadd.f32 %v527, 1.0
        %v529 = vrcp.pop %v528
        %v530 = vmul.f32 %v528, %v529
        %v531 = vsub.f32 1.0, %v530
        %v532 = vmul.f32 %v529, %v531
        %v533 = vadd.f32 %v529, %v532
        %vm534 = vweird.f32 %v528
        %vm535 = vweird.f32 %v529
        %vm536 = vmor %vm534, %vm535
        %v537 = vsel %vm536, %v529, %v533
        %v538 = vand.u32 2147483647, %v528
        %vm539 = vcmp.eq.f32.partialorder %v538, 8.507059e+37
        %v540 = vand.u32 %v528, 2147483648
        %v541 = vor.u32 1.1754944e-38, %v540
        %v542 = vsel %vm539, %v541, %v537
        %v543 = vmul.f32 1.0, %v542
        %v544 = vmul.f32 %v301, %v543
        %546 = vrot.lane.b32.xlu0 %v519, 124
        %v547 = vpop.permute.xlu0 %546
        %v549 = vsub.f32 %v492, %v547
        %vm550 = vcmask 7168
        %v552 = vsel %vm550, 1.0, 0
        %v555 = vsel %vm550, %v549, 0
        %557 = vmatpush.xpose.msra.mxu0 0.0
        %558 = vmatpush.xpose.msra.mxu0 0.0
        %559 = vmatpush.xpose.msra.mxu0 0.0
        %560 = vmatpush.xpose.msra.mxu0 0.0
        %561 = vmatpush.xpose.msra.mxu0 0.0
        %562 = vmatpush.xpose.msra.mxu0 0.0
        %563 = vmatpush.xpose.msra.mxu0 0.0
        %564 = vmatpush.xpose.msra.mxu0 0.0
        %565 = vmatpush.xpose.msra.mxu0 0.0
        %566 = vmatpush.xpose.msra.mxu0 0.0
        %567 = vmatpush.xpose.msra.mxu0 0.0
        %568 = vmatpush.xpose.msra.mxu0 0.0
        %569 = vmatpush.xpose.msra.mxu0 0.0
        %570 = vmatpush.xpose.msra.mxu0 0.0
        %571 = vmatpush.xpose.msra.mxu0 0.0
        %572 = vmatpush.xpose.msra.mxu0 %v555
        %573 = vmatmul.f32.gmra.mxu0 %v552
        %v574 = vpop.f32.mrf.mxu0
        %v575 = vadd.f32 0.0, %v574
        %576 = vdwg.mxu0
        %577 = vset.pattern.permute.xlu0 4
        %578 = vperm.xlu0 %577, %v519
        %v579 = vpop.permute.xlu0 %578
        %v581 = vadd.f32 %v579, %v575
        %v582 = vsel %vm522, %v581, -1e+30
        %vm583 = vcmask 64512
        %v584 = vsel %vm583, %v582, -inf
        %585 = vmax.xlane.f32.xlu0 %v584
        %v586 = vpop.xlane.xlu0 %585
        %v587 = vsub.f32 %v582, %v586
        %v588 = vmul.f32 %v587, 1.442695
        %v589 = vpow.pop %v588
        %v590 = vpack.c.bf16 %v463, %v463
        %v591 = vpack.c.bf16 %v476, %v476
        %vm592 = vcmask 130048
        %v594 = vsel %vm592, %v590, 0
        %v597 = vsel %vm592, %v591, 0
        %599 = vmatpush.bf16.xpose.msra.mxu0 0
        %600 = vmatpush.bf16.xpose.msra.mxu0 0
        %601 = vmatpush.bf16.xpose.msra.mxu0 0
        %602 = vmatpush.bf16.xpose.msra.mxu0 0
        %603 = vmatpush.bf16.xpose.msra.mxu0 0
        %604 = vmatpush.bf16.xpose.msra.mxu0 0
        %605 = vmatpush.bf16.xpose.msra.mxu0 0
        %606 = vmatpush.bf16.xpose.msra.mxu0 %v597
        %607 = vmatmul.bf16.gmra.mxu0 %v594
        %v608 = vpop.f32.mrf.mxu0
        %v609 = vadd.f32 0.0, %v608
        %v610 = vpop.f32.mrf.mxu0
        %611 = vdwg.mxu0
        %v612 = vmul.f32 %v609, 0.25
        %v613 = vmul.f32 %v612, %v589
        %v614 = vsub.f32 0.0, %v586
        %v615 = vmin.f32 %v614, 80.0
        %v616 = vmul.f32 %v615, 1.442695
        %v617 = vpow.pop %v616
        %v618 = vsel %vm583, %v613, 0.0
        %619 = vadd.xlane.f32.xlu0 %v618
        %v620 = vpop.xlane.xlu0 %619
        %v621 = vand.u32 2147483647, %v620
        %v622 = vmax.f32 %v621, %v617
        %v623 = vadd.f32 %v622, 1e-06
        %v624 = vrcp.pop %v623
        %v625 = vmul.f32 %v613, %v624
        %v626 = vpack.c.bf16 %v625, %v625
        %v628 = vsel %vm583, %v626, 0
        %vm630 = vcmask 1043456
        %v632 = vsel %vm630, %v296, 0
        %634 = vmatpush.bf16.msra.mxu0 0
        %635 = vmatpush.bf16.msra.mxu0 0
        %636 = vmatpush.bf16.msra.mxu0 0
        %637 = vmatpush.bf16.msra.mxu0 0
        %638 = vmatpush.bf16.msra.mxu0 0
        %639 = vmatpush.bf16.msra.mxu0 0
        %640 = vmatpush.bf16.msra.mxu0 0
        %641 = vmatpush.bf16.msra.mxu0 %v632
        %642 = vmatmul.bf16.gmra.mxu0 %v628
        %v643 = vpop.f32.mrf.mxu0
        %v644 = vadd.f32 0.0, %v643
        %v645 = vpop.f32.mrf.mxu0
        %646 = vdwg.mxu0
        %v647 = vsel %vm592, %v644, 0.0
        %648 = vadd.xlane.f32.xlu0 %v647
        %v649 = vpop.xlane.xlu0 %648
        %v650 = vrcp.pop 16.0
        %v651 = vmul.f32 16.0, %v650
        %v652 = vsub.f32 1.0, %v651
        %v653 = vmul.f32 %v650, %v652
        %v654 = vadd.f32 %v650, %v653
        %vm655 = vweird.f32 %v650
        %v656 = vsel %vm655, %v650, %v654
        %v657 = vmul.f32 %v649, %v656
        %v658 = vsub.f32 %v644, %v657
        %v659 = vmul.f32 %v658, %v658
        %v660 = vsel %vm592, %v659, 0.0
        %661 = vadd.xlane.f32.xlu0 %v660
        %v662 = vpop.xlane.xlu0 %661
        %v663 = vmul.f32 %v662, %v656
        %v664 = vadd.f32 %v663, 1e-05
        %v665 = vrsqrt.pop %v664
        %v666 = vmul.f32 %v665, %v664
        %v667 = vmul.f32 %v666, %v665
        %v668 = vmul.f32 0.5, %v667
        %v669 = vsub.f32 1.5, %v668
        %v670 = vmul.f32 %v665, %v669
        %vm671 = vweird.f32 %v664
        %vm672 = vweird.f32 %v665
        %vm673 = vmor %vm671, %vm672
        %v674 = vsel %vm673, %v665, %v670
        %v675 = vmul.f32 %v658, %v674
        %v676 = vperm.slane %v523, 0
        %v677 = vmul.f32 %v675, %v676
        %v679 = vperm.slane %v524, 0
        %v681 = vmul.f32 %v679, %v359
        %v682 = vadd.f32 %v677, %v681
        %v683 = vmul.f32 %v682, %v544
        %v684 = vpack.c.bf16 %v683, %v683
        %vm685 = vcmask 125952
        %686 = vst.msk [vmem:[%s293] sm:$0xf] %vm685, %v684
        %687 = vrot.lane.b32.xlu0 %v549, 127
        %v688 = vpop.permute.xlu0 %687
        %v689 = vsel %vm550, %v688, 0
        %691 = vmatpush.xpose.msra.mxu0 0.0
        %692 = vmatpush.xpose.msra.mxu0 0.0
        %693 = vmatpush.xpose.msra.mxu0 0.0
        %694 = vmatpush.xpose.msra.mxu0 0.0
        %695 = vmatpush.xpose.msra.mxu0 0.0
        %696 = vmatpush.xpose.msra.mxu0 0.0
        %697 = vmatpush.xpose.msra.mxu0 0.0
        %698 = vmatpush.xpose.msra.mxu0 0.0
        %699 = vmatpush.xpose.msra.mxu0 0.0
        %700 = vmatpush.xpose.msra.mxu0 0.0
        %701 = vmatpush.xpose.msra.mxu0 0.0
        %702 = vmatpush.xpose.msra.mxu0 0.0
        %703 = vmatpush.xpose.msra.mxu0 0.0
        %704 = vmatpush.xpose.msra.mxu0 0.0
        %705 = vmatpush.xpose.msra.mxu0 0.0
        %706 = vmatpush.xpose.msra.mxu0 %v689
        %707 = vmatmul.f32.gmra.mxu0 %v552
        %v708 = vpop.f32.mrf.mxu0
        %v709 = vadd.f32 0.0, %v708
        %710 = vdwg.mxu0
        %711 = vset.pattern.permute.xlu0 5
        %712 = vperm.xlu0 %711, %v519
        %v713 = vpop.permute.xlu0 %712
        %v715 = vadd.f32 %v713, %v709
        %v716 = vsel %vm522, %v715, -1e+30
        %v717 = vsel %vm583, %v716, -inf
        %718 = vmax.xlane.f32.xlu0 %v717
        %v719 = vpop.xlane.xlu0 %718
        %v720 = vsub.f32 %v716, %v719
        %v721 = vmul.f32 %v720, 1.442695
        %v722 = vpow.pop %v721
        %724 = vrot.lane.b32.xlu0 %v590, 112
        %v725 = vpop.permute.xlu0 %724
        %727 = vrot.lane.b32.xlu0 %v591, 112
        %v728 = vpop.permute.xlu0 %727
        %v730 = vsel %vm592, %v725, 0
        %v733 = vsel %vm592, %v728, 0
        %735 = vmatpush.bf16.xpose.msra.mxu0 0
        %736 = vmatpush.bf16.xpose.msra.mxu0 0
        %737 = vmatpush.bf16.xpose.msra.mxu0 0
        %738 = vmatpush.bf16.xpose.msra.mxu0 0
        %739 = vmatpush.bf16.xpose.msra.mxu0 0
        %740 = vmatpush.bf16.xpose.msra.mxu0 0
        %741 = vmatpush.bf16.xpose.msra.mxu0 0
        %742 = vmatpush.bf16.xpose.msra.mxu0 %v733
        %743 = vmatmul.bf16.gmra.mxu0 %v730
        %v744 = vpop.f32.mrf.mxu0
        %v745 = vadd.f32 0.0, %v744
        %v746 = vpop.f32.mrf.mxu0
        %747 = vdwg.mxu0
        %v748 = vmul.f32 %v745, 0.25
        %v749 = vmul.f32 %v748, %v722
        %v750 = vsub.f32 0.0, %v719
        %v751 = vmin.f32 %v750, 80.0
        %v752 = vmul.f32 %v751, 1.442695
        %v753 = vpow.pop %v752
        %v754 = vsel %vm583, %v749, 0.0
        %755 = vadd.xlane.f32.xlu0 %v754
        %v756 = vpop.xlane.xlu0 %755
        %v757 = vand.u32 2147483647, %v756
        %v758 = vmax.f32 %v757, %v753
        %v759 = vadd.f32 %v758, 1e-06
        %v760 = vrcp.pop %v759
        %v761 = vmul.f32 %v749, %v760
        %v762 = vpack.c.bf16 %v761, %v761
        %v763 = vunpack.c.l.b16 %v296
        %v764 = vpack.c.b16 %v763, %v763
        %765 = vrot.lane.b32.xlu0 %v764, 112
        %v766 = vpop.permute.xlu0 %765
        %v768 = vsel %vm583, %v762, 0
        %v771 = vsel %vm630, %v766, 0
        %773 = vmatpush.bf16.msra.mxu0 0
        %774 = vmatpush.bf16.msra.mxu0 0
        %775 = vmatpush.bf16.msra.mxu0 0
        %776 = vmatpush.bf16.msra.mxu0 0
        %777 = vmatpush.bf16.msra.mxu0 0
        %778 = vmatpush.bf16.msra.mxu0 0
        %779 = vmatpush.bf16.msra.mxu0 0
        %780 = vmatpush.bf16.msra.mxu0 %v771
        %781 = vmatmul.bf16.gmra.mxu0 %v768
        %v782 = vpop.f32.mrf.mxu0
        %v783 = vadd.f32 0.0, %v782
        %v784 = vpop.f32.mrf.mxu0
        %785 = vdwg.mxu0
        %v786 = vsel %vm592, %v783, 0.0
        %787 = vadd.xlane.f32.xlu0 %v786
        %v788 = vpop.xlane.xlu0 %787
        %v789 = vmul.f32 %v788, %v656
        %v790 = vsub.f32 %v783, %v789
        %v791 = vmul.f32 %v790, %v790
        %v792 = vsel %vm592, %v791, 0.0
        %793 = vadd.xlane.f32.xlu0 %v792
        %v794 = vpop.xlane.xlu0 %793
        %v795 = vmul.f32 %v794, %v656
        %v796 = vadd.f32 %v795, 1e-05
        %v797 = vrsqrt.pop %v796
        %v798 = vmul.f32 %v797, %v796
        %v799 = vmul.f32 %v798, %v797
        %v800 = vmul.f32 0.5, %v799
        %v801 = vsub.f32 1.5, %v800
        %v802 = vmul.f32 %v797, %v801
        %vm803 = vweird.f32 %v796
        %vm804 = vweird.f32 %v797
        %vm805 = vmor %vm803, %vm804
        %v806 = vsel %vm805, %v797, %v802
        %v807 = vmul.f32 %v790, %v806
        %v808 = vperm.slane %v523, 1
        %v809 = vmul.f32 %v807, %v808
        %811 = vrot.lane.b32.xlu0 %v681, 112
        %v812 = vpop.permute.xlu0 %811
        %v814 = vadd.f32 %v809, %v812
        %816 = vrot.lane.b32.xlu0 %v544, 112
        %v817 = vpop.permute.xlu0 %816
        %v819 = vmul.f32 %v814, %v817
        %v820 = vpack.c.bf16 %v819, %v819
        %822 = vrot.lane.b32.xlu0 %v820, 16
        %v823 = vpop.permute.xlu0 %822
        %vm825 = vcmask 257152
        %826 = vst.msk [vmem:[%s293] sm:$0xf] %vm825, %v823
        %827 = vrot.lane.b32.xlu0 %v549, 126
        %v828 = vpop.permute.xlu0 %827
        %v829 = vsel %vm550, %v828, 0
        %831 = vmatpush.xpose.msra.mxu0 0.0
        %832 = vmatpush.xpose.msra.mxu0 0.0
        %833 = vmatpush.xpose.msra.mxu0 0.0
        %834 = vmatpush.xpose.msra.mxu0 0.0
        %835 = vmatpush.xpose.msra.mxu0 0.0
        %836 = vmatpush.xpose.msra.mxu0 0.0
        %837 = vmatpush.xpose.msra.mxu0 0.0
        %838 = vmatpush.xpose.msra.mxu0 0.0
        %839 = vmatpush.xpose.msra.mxu0 0.0
        %840 = vmatpush.xpose.msra.mxu0 0.0
        %841 = vmatpush.xpose.msra.mxu0 0.0
        %842 = vmatpush.xpose.msra.mxu0 0.0
        %843 = vmatpush.xpose.msra.mxu0 0.0
        %844 = vmatpush.xpose.msra.mxu0 0.0
        %845 = vmatpush.xpose.msra.mxu0 0.0
        %846 = vmatpush.xpose.msra.mxu0 %v829
        %847 = vmatmul.f32.gmra.mxu0 %v552
        %v848 = vpop.f32.mrf.mxu0
        %v849 = vadd.f32 0.0, %v848
        %850 = vdwg.mxu0
        %851 = vset.pattern.permute.xlu0 6
        %852 = vperm.xlu0 %851, %v519
        %v853 = vpop.permute.xlu0 %852
        %v855 = vadd.f32 %v853, %v849
        %v856 = vsel %vm522, %v855, -1e+30
        %v857 = vsel %vm583, %v856, -inf
        %858 = vmax.xlane.f32.xlu0 %v857
        %v859 = vpop.xlane.xlu0 %858
        %v860 = vsub.f32 %v856, %v859
        %v861 = vmul.f32 %v860, 1.442695
        %v862 = vpow.pop %v861
        %863 = vrot.lane.b32.xlu0 %v590, 96
        %v864 = vpop.permute.xlu0 %863
        %865 = vrot.lane.b32.xlu0 %v591, 96
        %v866 = vpop.permute.xlu0 %865
        %v868 = vsel %vm592, %v864, 0
        %v871 = vsel %vm592, %v866, 0
        %873 = vmatpush.bf16.xpose.msra.mxu0 0
        %874 = vmatpush.bf16.xpose.msra.mxu0 0
        %875 = vmatpush.bf16.xpose.msra.mxu0 0
        %876 = vmatpush.bf16.xpose.msra.mxu0 0
        %877 = vmatpush.bf16.xpose.msra.mxu0 0
        %878 = vmatpush.bf16.xpose.msra.mxu0 0
        %879 = vmatpush.bf16.xpose.msra.mxu0 0
        %880 = vmatpush.bf16.xpose.msra.mxu0 %v871
        %881 = vmatmul.bf16.gmra.mxu0 %v868
        %v882 = vpop.f32.mrf.mxu0
        %v883 = vadd.f32 0.0, %v882
        %v884 = vpop.f32.mrf.mxu0
        %885 = vdwg.mxu0
        %v886 = vmul.f32 %v883, 0.25
        %v887 = vmul.f32 %v886, %v862
        %v888 = vsub.f32 0.0, %v859
        %v889 = vmin.f32 %v888, 80.0
        %v890 = vmul.f32 %v889, 1.442695
        %v891 = vpow.pop %v890
        %v892 = vsel %vm583, %v887, 0.0
        %893 = vadd.xlane.f32.xlu0 %v892
        %v894 = vpop.xlane.xlu0 %893
        %v895 = vand.u32 2147483647, %v894
        %v896 = vmax.f32 %v895, %v891
        %v897 = vadd.f32 %v896, 1e-06
        %v898 = vrcp.pop %v897
        %v899 = vmul.f32 %v887, %v898
        %v900 = vpack.c.bf16 %v899, %v899
        %901 = vrot.lane.b32.xlu0 %v764, 96
        %v902 = vpop.permute.xlu0 %901
        %v904 = vsel %vm583, %v900, 0
        %v907 = vsel %vm630, %v902, 0
        %909 = vmatpush.bf16.msra.mxu0 0
        %910 = vmatpush.bf16.msra.mxu0 0
        %911 = vmatpush.bf16.msra.mxu0 0
        %912 = vmatpush.bf16.msra.mxu0 0
        %913 = vmatpush.bf16.msra.mxu0 0
        %914 = vmatpush.bf16.msra.mxu0 0
        %915 = vmatpush.bf16.msra.mxu0 0
        %916 = vmatpush.bf16.msra.mxu0 %v907
        %917 = vmatmul.bf16.gmra.mxu0 %v904
        %v918 = vpop.f32.mrf.mxu0
        %v919 = vadd.f32 0.0, %v918
        %v920 = vpop.f32.mrf.mxu0
        %921 = vdwg.mxu0
        %v922 = vsel %vm592, %v919, 0.0
        %923 = vadd.xlane.f32.xlu0 %v922
        %v924 = vpop.xlane.xlu0 %923
        %v925 = vmul.f32 %v924, %v656
        %v926 = vsub.f32 %v919, %v925
        %v927 = vmul.f32 %v926, %v926
        %v928 = vsel %vm592, %v927, 0.0
        %929 = vadd.xlane.f32.xlu0 %v928
        %v930 = vpop.xlane.xlu0 %929
        %v931 = vmul.f32 %v930, %v656
        %v932 = vadd.f32 %v931, 1e-05
        %v933 = vrsqrt.pop %v932
        %v934 = vmul.f32 %v933, %v932
        %v935 = vmul.f32 %v934, %v933
        %v936 = vmul.f32 0.5, %v935
        %v937 = vsub.f32 1.5, %v936
        %v938 = vmul.f32 %v933, %v937
        %vm939 = vweird.f32 %v932
        %vm940 = vweird.f32 %v933
        %vm941 = vmor %vm939, %vm940
        %v942 = vsel %vm941, %v933, %v938
        %v943 = vmul.f32 %v926, %v942
        %v944 = vperm.slane %v523, 2
        %v945 = vmul.f32 %v943, %v944
        %946 = vrot.lane.b32.xlu0 %v681, 96
        %v947 = vpop.permute.xlu0 %946
        %v949 = vadd.f32 %v945, %v947
        %950 = vrot.lane.b32.xlu0 %v544, 96
        %v951 = vpop.permute.xlu0 %950
        %v953 = vmul.f32 %v949, %v951
        %v954 = vpack.c.bf16 %v953, %v953
        %956 = vrot.lane.b32.xlu0 %v954, 32
        %v957 = vpop.permute.xlu0 %956
        %vm959 = vcmask 388352
        %960 = vst.msk [vmem:[%s293] sm:$0xf] %vm959, %v957
        %961 = vrot.lane.b32.xlu0 %v549, 125
        %v962 = vpop.permute.xlu0 %961
        %v963 = vsel %vm550, %v962, 0
        %965 = vmatpush.xpose.msra.mxu0 0.0
        %966 = vmatpush.xpose.msra.mxu0 0.0
        %967 = vmatpush.xpose.msra.mxu0 0.0
        %968 = vmatpush.xpose.msra.mxu0 0.0
        %969 = vmatpush.xpose.msra.mxu0 0.0
        %970 = vmatpush.xpose.msra.mxu0 0.0
        %971 = vmatpush.xpose.msra.mxu0 0.0
        %972 = vmatpush.xpose.msra.mxu0 0.0
        %973 = vmatpush.xpose.msra.mxu0 0.0
        %974 = vmatpush.xpose.msra.mxu0 0.0
        %975 = vmatpush.xpose.msra.mxu0 0.0
        %976 = vmatpush.xpose.msra.mxu0 0.0
        %977 = vmatpush.xpose.msra.mxu0 0.0
        %978 = vmatpush.xpose.msra.mxu0 0.0
        %979 = vmatpush.xpose.msra.mxu0 0.0
        %980 = vmatpush.xpose.msra.mxu0 %v963
        %981 = vmatmul.f32.gmra.mxu0 %v552
        %v982 = vpop.f32.mrf.mxu0
        %v983 = vadd.f32 0.0, %v982
        %984 = vdwg.mxu0
        %985 = vset.pattern.permute.xlu0 7
        %986 = vperm.xlu0 %985, %v519
        %v987 = vpop.permute.xlu0 %986
        %v989 = vadd.f32 %v987, %v983
        %v990 = vsel %vm522, %v989, -1e+30
        %v991 = vsel %vm583, %v990, -inf
        %992 = vmax.xlane.f32.xlu0 %v991
        %v993 = vpop.xlane.xlu0 %992
        %v994 = vsub.f32 %v990, %v993
        %v995 = vmul.f32 %v994, 1.442695
        %v996 = vpow.pop %v995
        %997 = vrot.lane.b32.xlu0 %v590, 80
        %v998 = vpop.permute.xlu0 %997
        %999 = vrot.lane.b32.xlu0 %v591, 80
        %v1000 = vpop.permute.xlu0 %999
        %v1002 = vsel %vm592, %v998, 0
        %v1005 = vsel %vm592, %v1000, 0
        %1007 = vmatpush.bf16.xpose.msra.mxu0 0
        %1008 = vmatpush.bf16.xpose.msra.mxu0 0
        %1009 = vmatpush.bf16.xpose.msra.mxu0 0
        %1010 = vmatpush.bf16.xpose.msra.mxu0 0
        %1011 = vmatpush.bf16.xpose.msra.mxu0 0
        %1012 = vmatpush.bf16.xpose.msra.mxu0 0
        %1013 = vmatpush.bf16.xpose.msra.mxu0 0
        %1014 = vmatpush.bf16.xpose.msra.mxu0 %v1005
        %1015 = vmatmul.bf16.gmra.mxu0 %v1002
        %v1016 = vpop.f32.mrf.mxu0
        %v1017 = vadd.f32 0.0, %v1016
        %v1018 = vpop.f32.mrf.mxu0
        %1019 = vdwg.mxu0
        %v1020 = vmul.f32 %v1017, 0.25
        %v1021 = vmul.f32 %v1020, %v996
        %v1022 = vsub.f32 0.0, %v993
        %v1023 = vmin.f32 %v1022, 80.0
        %v1024 = vmul.f32 %v1023, 1.442695
        %v1025 = vpow.pop %v1024
        %v1026 = vsel %vm583, %v1021, 0.0
        %1027 = vadd.xlane.f32.xlu0 %v1026
        %v1028 = vpop.xlane.xlu0 %1027
        %v1029 = vand.u32 2147483647, %v1028
        %v1030 = vmax.f32 %v1029, %v1025
        %v1031 = vadd.f32 %v1030, 1e-06
        %v1032 = vrcp.pop %v1031
        %v1033 = vmul.f32 %v1021, %v1032
        %v1034 = vpack.c.bf16 %v1033, %v1033
        %1035 = vrot.lane.b32.xlu0 %v764, 80
        %v1036 = vpop.permute.xlu0 %1035
        %v1038 = vsel %vm583, %v1034, 0
        %v1041 = vsel %vm630, %v1036, 0
        %1043 = vmatpush.bf16.msra.mxu0 0
        %1044 = vmatpush.bf16.msra.mxu0 0
        %1045 = vmatpush.bf16.msra.mxu0 0
        %1046 = vmatpush.bf16.msra.mxu0 0
        %1047 = vmatpush.bf16.msra.mxu0 0
        %1048 = vmatpush.bf16.msra.mxu0 0
        %1049 = vmatpush.bf16.msra.mxu0 0
        %1050 = vmatpush.bf16.msra.mxu0 %v1041
        %1051 = vmatmul.bf16.gmra.mxu0 %v1038
        %v1052 = vpop.f32.mrf.mxu0
        %v1053 = vadd.f32 0.0, %v1052
        %v1054 = vpop.f32.mrf.mxu0
        %1055 = vdwg.mxu0
        %v1056 = vsel %vm592, %v1053, 0.0
        %1057 = vadd.xlane.f32.xlu0 %v1056
        %v1058 = vpop.xlane.xlu0 %1057
        %v1059 = vmul.f32 %v1058, %v656
        %v1060 = vsub.f32 %v1053, %v1059
        %v1061 = vmul.f32 %v1060, %v1060
        %v1062 = vsel %vm592, %v1061, 0.0
        %1063 = vadd.xlane.f32.xlu0 %v1062
        %v1064 = vpop.xlane.xlu0 %1063
        %v1065 = vmul.f32 %v1064, %v656
        %v1066 = vadd.f32 %v1065, 1e-05
        %v1067 = vrsqrt.pop %v1066
        %v1068 = vmul.f32 %v1067, %v1066
        %v1069 = vmul.f32 %v1068, %v1067
        %v1070 = vmul.f32 0.5, %v1069
        %v1071 = vsub.f32 1.5, %v1070
        %v1072 = vmul.f32 %v1067, %v1071
        %vm1073 = vweird.f32 %v1066
        %vm1074 = vweird.f32 %v1067
        %vm1075 = vmor %vm1073, %vm1074
        %v1076 = vsel %vm1075, %v1067, %v1072
        %v1077 = vmul.f32 %v1060, %v1076
        %v1078 = vperm.slane %v523, 3
        %v1079 = vmul.f32 %v1077, %v1078
        %1080 = vrot.lane.b32.xlu0 %v681, 80
        %v1081 = vpop.permute.xlu0 %1080
        %v1083 = vadd.f32 %v1079, %v1081
        %1084 = vrot.lane.b32.xlu0 %v544, 80
        %v1085 = vpop.permute.xlu0 %1084
        %v1087 = vmul.f32 %v1083, %v1085
        %v1088 = vpack.c.bf16 %v1087, %v1087
        %1090 = vrot.lane.b32.xlu0 %v1088, 48
        %v1091 = vpop.permute.xlu0 %1090
        %vm1093 = vcmask 519552
        %1094 = vst.msk [vmem:[%s293] sm:$0xf] %vm1093, %v1091
        %p1095 = scmp.lt.s32.totalorder %s19, 1
        %s1096 = scalar_select %p1095, %s19, 1
        %s1097 = smul.addr %s1096, 4
        %s1098 = scalar_lea.vmem %s7, %s1097
        // Predicated region
        $region53: #{xlstm_forward.10} parent=47 // pred_check
          %p1099 = pneg %p189
        $region54: #{xlstm_forward.10} parent=47 // pred_check_branch
          %1101 = sbr.rel (%p1099) target = $region56
        $region55: #{xlstm_forward.10} parent=47 // pred_region
          _
        $region56: #{xlstm_forward.10} parent=47 // pred_fallthru
          _
      $region48: #{xlstm_forward.10} parent=5 // pred_fallthru
        _
      %p1102 = scmp.le.s32.totalorder 2, %s14
      // Predicated region
      $region57: #{xlstm_forward.10} parent=5 // pred_check
        %p1103 = pneg %p1102
      $region58: #{xlstm_forward.10} parent=5 // pred_check_branch
        %1105 = sbr.rel (%p1103) target = $region60
      $region59: #{xlstm_forward.10} parent=5 // pred_region
        %s1106 = ssub.s32 %s14, 2
        // Predicated region
        $region61: #{xlstm_forward.10} parent=59 // pred_check
          %p1107 = pneg %p195
        $region62: #{xlstm_forward.10} parent=59 // pred_check_branch
          %1109 = sbr.rel (%p1107) target = $region64
        $region63: #{xlstm_forward.10} parent=59 // pred_region
          %p1110 = scmp.lt.s32.totalorder %s20, 1
          %s1111 = scalar_select %p1110, %s20, 1
          %s1112 = smul.addr %s1111, 4
          %s1113 = scalar_lea.vmem %s7, %s1112
        $region64: #{xlstm_forward.10} parent=59 // pred_fallthru
          _
      $region60: #{xlstm_forward.10} parent=5 // pred_fallthru
        _
    $region6: #{xlstm_forward.10} parent=1 // loop_footer
      %s18 = sadd.s32 1, %s14
    $region7: #{xlstm_forward.10} parent=1 // loop_footer_branch
      %13 = sbr.rel target = $region3
    $region8: #{xlstm_forward.10} parent=1 // loop_exit
      _
    %1114 = vsyncpa [#allocation3], 1
    %s1115 = scalar_lea.sflag [#allocation3], 1
    %1116 = vsyncpa %s1115, 1

// kernel: xlstm_forward.15
$region0: #{xlstm_forward.15}
  #allocation0 [shape = 'u32[]', space=smem, size = 0x4, offset = 0x4, fixed_abs, tag = 'smem constant byte address 0x4 - core index']
  #allocation1 [shape = 'u32[72,128]{1,0:T(1,128)}', space=vmem, size = 0x9000, scoped, tag = 'internal scratch']
  %s0 = inlined_call_operand.vmem [shape: bf16[2,8,32], index: 0, kind: input, shape index: {}]
  %s1 = inlined_call_operand.vmem [shape: f32[1,32], index: 1, kind: input, shape index: {}]
  %s2 = inlined_call_operand.vmem [shape: f32[1,32], index: 2, kind: input, shape index: {}]
  %s3 = inlined_call_operand.hbm [shape: bf16[256,128], index: 3, kind: input, shape index: {}]
  %s4 = inlined_call_operand.vmem [shape: f32[1,128], index: 4, kind: input, shape index: {}]
  %s5 = inlined_call_operand.hbm [shape: f32[2,1,128], index: 5, kind: output, shape index: {}]
  %s6 = sld [smem:[#allocation0]]
  $region57: #{xlstm_forward.15} parent=0
    _
  %s8 = ssub.s32 1, %s6
  %s9 = scalar_select 0, %s8, %s6
  $region1: #{xlstm_forward.15} parent=0
    #allocation2 [shape = 'u8[65536]{0}', space=vmem, size = 0x10000, scoped, tag = 'input window, operand 3, single buffered']
    #allocation3 [shape = 's32[2]{0}', space=sflag, size = 0x8, scoped, tag = 'scoped memory for xlstm_forward.15']
    #allocation4 [shape = 's32[2]{0}', space=sflag, size = 0x8, scoped, tag = 'scoped memory for xlstm_forward.15']
    #allocation5 [shape = 'u8[1024]{0}', space=vmem, size = 0x400, scoped, tag = 'output window, operand 0']
    %10 = vsyncpa [#allocation3], 0
    %11 = vsyncpa [#allocation4], 0
    %s12 = scalar_lea.sflag [#allocation4], 1
    %13 = vsyncpa %s12, 0
    loop: start=0, step=1, limit=4
    $region2: #{xlstm_forward.15} parent=1 // loop_pre_header
      _
    $region3: #{xlstm_forward.15} parent=1 // loop_header
      %s15 = sphi 0, %s19
      %p16 = scmp.ge.s32.totalorder %s15, 4
      %s25 = sphi 0, %s27
      %s28 = sphi 0, %s25
      %s29 = sphi 0, %s28
      %s45 = sphi 0, %s29
      %s49 = sphi 0, %s49
      %s51 = sphi 0, %s49
      %s52 = sphi 0, %s51
      %s66 = sphi 0, %s52
      %s70 = sphi 0, %s70
      %s72 = sphi 0, %s70
      %s73 = sphi 0, %s72
      %s87 = sphi 0, %s73
      %s91 = sphi 0, %s91
      %s93 = sphi 0, %s91
      %s94 = sphi 0, %s93
      %s108 = sphi 0, %s94
      %s112 = sphi 0, %s112
      %s114 = sphi 0, %s112
      %s115 = sphi 0, %s114
      %s129 = sphi 0, %s115
      %s135 = sphi 0, %s137
      %s138 = sphi 0, %s135
      %s139 = sphi 0, %s138
      %s155 = sphi 0, %s139
    $region4: #{xlstm_forward.15} parent=1 // loop_header_branch
      %18 = sbr.rel (%p16) target = $region8
    $region5: #{xlstm_forward.15} parent=1 // loop_body
      %s20 = ssub.s32 %s15, 1
      %s21 = ssub.s32 %s15, 2
      %s22 = sadd.s32 %s15, 1
      %s23 = ssub.s32 %s15, %s22
      %p24 = scmp.eq.s32.totalorder %s23, 0
      %s26 = sadd.s32 %s25, 1
      %s27 = scalar_select %p24, %s25, %s26
      %p30 = pneg %p24
      %p31 = scmp.eq.s32.totalorder %s15, 1
      %p32 = por %p30, %p31
      %p33 = scmp.ne.s32.totalorder %s25, %s28
      %p34 = scmp.eq.s32.totalorder %s15, 0
      %p35 = por %p33, %p34
      %p36 = scmp.ne.s32.totalorder %s25, %s28
      %p37 = scmp.eq.s32.totalorder %s20, 1
      %p38 = por %p36, %p37
      %p39 = scmp.ne.s32.totalorder %s28, %s29
      %p40 = scmp.eq.s32.totalorder %s20, 0
      %p41 = por %p39, %p40
      %p42 = scmp.ne.s32.totalorder %s28, %s29
      %p43 = scmp.eq.s32.totalorder %s21, 1
      %p44 = por %p42, %p43
      %p46 = scmp.ne.s32.totalorder %s29, %s45
      %p47 = scmp.eq.s32.totalorder %s21, 0
      %p48 = por %p46, %p47
      %s50 = sadd.s32 %s49, 1
      %p53 = scmp.eq.s32.totalorder %s15, 1
      %p54 = scmp.ne.s32.totalorder %s49, %s51
      %p55 = scmp.eq.s32.totalorder %s15, 0
      %p56 = por %p54, %p55
      %p57 = scmp.ne.s32.totalorder %s49, %s51
      %p58 = scmp.eq.s32.totalorder %s20, 1
      %p59 = por %p57, %p58
      %p60 = scmp.ne.s32.totalorder %s51, %s52
      %p61 = scmp.eq.s32.totalorder %s20, 0
      %p62 = por %p60, %p61
      %p63 = scmp.ne.s32.totalorder %s51, %s52
      %p64 = scmp.eq.s32.totalorder %s21, 1
      %p65 = por %p63, %p64
      %p67 = scmp.ne.s32.totalorder %s52, %s66
      %p68 = scmp.eq.s32.totalorder %s21, 0
      %p69 = por %p67, %p68
      %s71 = sadd.s32 %s70, 1
      %p74 = scmp.eq.s32.totalorder %s15, 1
      %p75 = scmp.ne.s32.totalorder %s70, %s72
      %p76 = scmp.eq.s32.totalorder %s15, 0
      %p77 = por %p75, %p76
      %p78 = scmp.ne.s32.totalorder %s70, %s72
      %p79 = scmp.eq.s32.totalorder %s20, 1
      %p80 = por %p78, %p79
      %p81 = scmp.ne.s32.totalorder %s72, %s73
      %p82 = scmp.eq.s32.totalorder %s20, 0
      %p83 = por %p81, %p82
      %p84 = scmp.ne.s32.totalorder %s72, %s73
      %p85 = scmp.eq.s32.totalorder %s21, 1
      %p86 = por %p84, %p85
      %p88 = scmp.ne.s32.totalorder %s73, %s87
      %p89 = scmp.eq.s32.totalorder %s21, 0
      %p90 = por %p88, %p89
      %s92 = sadd.s32 %s91, 1
      %p95 = scmp.eq.s32.totalorder %s15, 1
      %p96 = scmp.ne.s32.totalorder %s91, %s93
      %p97 = scmp.eq.s32.totalorder %s15, 0
      %p98 = por %p96, %p97
      %p99 = scmp.ne.s32.totalorder %s91, %s93
      %p100 = scmp.eq.s32.totalorder %s20, 1
      %p101 = por %p99, %p100
      %p102 = scmp.ne.s32.totalorder %s93, %s94
      %p103 = scmp.eq.s32.totalorder %s20, 0
      %p104 = por %p102, %p103
      %p105 = scmp.ne.s32.totalorder %s93, %s94
      %p106 = scmp.eq.s32.totalorder %s21, 1
      %p107 = por %p105, %p106
      %p109 = scmp.ne.s32.totalorder %s94, %s108
      %p110 = scmp.eq.s32.totalorder %s21, 0
      %p111 = por %p109, %p110
      %s113 = sadd.s32 %s112, 1
      %p116 = scmp.eq.s32.totalorder %s15, 1
      %p117 = scmp.ne.s32.totalorder %s112, %s114
      %p118 = scmp.eq.s32.totalorder %s15, 0
      %p119 = por %p117, %p118
      %p120 = scmp.ne.s32.totalorder %s112, %s114
      %p121 = scmp.eq.s32.totalorder %s20, 1
      %p122 = por %p120, %p121
      %p123 = scmp.ne.s32.totalorder %s114, %s115
      %p124 = scmp.eq.s32.totalorder %s20, 0
      %p125 = por %p123, %p124
      %p126 = scmp.ne.s32.totalorder %s114, %s115
      %p127 = scmp.eq.s32.totalorder %s21, 1
      %p128 = por %p126, %p127
      %p130 = scmp.ne.s32.totalorder %s115, %s129
      %p131 = scmp.eq.s32.totalorder %s21, 0
      %p132 = por %p130, %p131
      %s133 = ssub.s32 %s15, %s22
      %p134 = scmp.eq.s32.totalorder %s133, 0
      %s136 = sadd.s32 %s135, 1
      %s137 = scalar_select %p134, %s135, %s136
      %p140 = pneg %p134
      %p141 = scmp.eq.s32.totalorder %s15, 1
      %p142 = por %p140, %p141
      %p143 = scmp.ne.s32.totalorder %s135, %s138
      %p144 = scmp.eq.s32.totalorder %s15, 0
      %p145 = por %p143, %p144
      %p146 = scmp.ne.s32.totalorder %s135, %s138
      %p147 = scmp.eq.s32.totalorder %s20, 1
      %p148 = por %p146, %p147
      %p149 = scmp.ne.s32.totalorder %s138, %s139
      %p150 = scmp.eq.s32.totalorder %s20, 0
      %p151 = por %p149, %p150
      %p152 = scmp.ne.s32.totalorder %s138, %s139
      %p153 = scmp.eq.s32.totalorder %s21, 1
      %p154 = por %p152, %p153
      %p156 = scmp.ne.s32.totalorder %s139, %s155
      %p157 = scmp.eq.s32.totalorder %s21, 0
      %p158 = por %p156, %p157
      %p159 = scmp.le.s32.totalorder 1, %s15
      %p160 = scmp.lt.s32.totalorder %s15, 3
      %p161 = pnand %p159, %p160
      %p162 = pneg %p161
      // Predicated region
      $region9: #{xlstm_forward.15} parent=5 // pred_check
        _
      $region10: #{xlstm_forward.15} parent=5 // pred_check_branch
        %164 = sbr.rel (%p161) target = $region12
      $region11: #{xlstm_forward.15} parent=5 // pred_region
        %s165 = ssub.s32 %s15, 1
        // Predicated region
        $region13: #{xlstm_forward.15} parent=11 // pred_check
          %p166 = pneg %p62
        $region14: #{xlstm_forward.15} parent=11 // pred_check_branch
          %168 = sbr.rel (%p166) target = $region16
        $region15: #{xlstm_forward.15} parent=11 // pred_region
          _
        $region16: #{xlstm_forward.15} parent=11 // pred_fallthru
          _
        // Predicated region
        $region17: #{xlstm_forward.15} parent=11 // pred_check
          %p169 = pneg %p83
        $region18: #{xlstm_forward.15} parent=11 // pred_check_branch
          %171 = sbr.rel (%p169) target = $region20
        $region19: #{xlstm_forward.15} parent=11 // pred_region
          _
        $region20: #{xlstm_forward.15} parent=11 // pred_fallthru
          _
        // Predicated region
        $region21: #{xlstm_forward.15} parent=11 // pred_check
          %p172 = pneg %p104
        $region22: #{xlstm_forward.15} parent=11 // pred_check_branch
          %174 = sbr.rel (%p172) target = $region24
        $region23: #{xlstm_forward.15} parent=11 // pred_region
          %176 = vsyncadd [#allocation3], 0
          %s177 = sshll.u32 %s3, 4
          %s178 = int_to_ptr.hbm [resolvable:$true] %s177
          %s179 = sshll.u32 [#allocation2], 4
          %s180 = int_to_ptr.vmem [resolvable:$true] %s179
          %185 = dma.hbm_to_vmem [thread:$0]  %s178, 2048, %s180, [#allocation3], 64, 64, 4
        $region24: #{xlstm_forward.15} parent=11 // pred_fallthru
          _
        // Predicated region
        $region25: #{xlstm_forward.15} parent=11 // pred_check
          %p186 = pneg %p125
        $region26: #{xlstm_forward.15} parent=11 // pred_check_branch
          %188 = sbr.rel (%p186) target = $region28
        $region27: #{xlstm_forward.15} parent=11 // pred_region
          _
        $region28: #{xlstm_forward.15} parent=11 // pred_fallthru
          _
      $region12: #{xlstm_forward.15} parent=5 // pred_fallthru
        _
      %p189 = scmp.lt.s32.totalorder %s15, 2
      // Predicated region
      $region29: #{xlstm_forward.15} parent=5 // pred_check
        %p190 = pneg %p189
      $region30: #{xlstm_forward.15} parent=5 // pred_check_branch
        %192 = sbr.rel (%p190) target = $region32
      $region31: #{xlstm_forward.15} parent=5 // pred_region
        // Predicated region
        $region33: #{xlstm_forward.15} parent=31 // pred_check
          %p193 = pneg %p35
        $region34: #{xlstm_forward.15} parent=31 // pred_check_branch
          %195 = sbr.rel (%p193) target = $region36
        $region35: #{xlstm_forward.15} parent=31 // pred_region
          %p196 = scmp.lt.s32.totalorder %s15, 1
          %s197 = scalar_select %p196, %s15, 1
          %s198 = smul.addr %s197, 4
          %s199 = scalar_lea.vmem %s0, %s198
        $region36: #{xlstm_forward.15} parent=31 // pred_fallthru
          _
      $region32: #{xlstm_forward.15} parent=5 // pred_fallthru
        _
      %p200 = scmp.le.s32.totalorder 1, %s15
      %p201 = scmp.lt.s32.totalorder %s15, 3
      %p202 = pnand %p200, %p201
      %p203 = pneg %p202
      // Predicated region
      $region37: #{xlstm_forward.15} parent=5 // pred_check
        _
      $region38: #{xlstm_forward.15} parent=5 // pred_check_branch
        %205 = sbr.rel (%p202) target = $region40
      $region39: #{xlstm_forward.15} parent=5 // pred_region
        %s206 = ssub.s32 %s15, 1
        // Predicated region
        $region41: #{xlstm_forward.15} parent=39 // pred_check
          %p207 = pneg %p104
        $region42: #{xlstm_forward.15} parent=39 // pred_check_branch
          %209 = sbr.rel (%p207) target = $region44
        $region43: #{xlstm_forward.15} parent=39 // pred_region
          %211 = dma.done [#allocation3], 2048
        $region44: #{xlstm_forward.15} parent=39 // pred_fallthru
          _
        %p212 = scmp.lt.s32.totalorder %s20, 1
        %s213 = scalar_select %p212, %s20, 1
        %s214 = smul.addr %s213, 4
        %s215 = scalar_lea.vmem %s0, %s214
        %p216 = pneg %p41
        %p217 = pneg %p38
        %p218 = pneg %p62
        %p219 = pneg %p59
        %p220 = pneg %p83
        %p221 = pneg %p80
        %p222 = pneg %p104
        %p223 = pneg %p101
        %p224 = pneg %p125
        %p225 = pneg %p122
        %p226 = pneg %p151
        %p227 = pneg %p148
        %s228 = sand.u32 %s138, 1
        %s229 = scalar_lea.sflag [#allocation4], %s228
        %s230 = sand.u32 %s138, 1
        %s231 = scalar_lea.vmem [#allocation5], %s230
        %p232 = scmp.lt.s32.totalorder %s20, 1
        %s233 = scalar_select %p232, %s20, 1
        %s234 = smul.addr %s233, 4
        %s235 = scalar_lea.vmem %s0, %s234
        %v237 = vld [vmem:[%s235] sm:$0xf]
        %v238 = vunpack.c.l.bf16 %v237
        %vm239 = vcmask 261120
        %v240 = vsel %vm239, %v238, 0.0
        %241 = vadd.xlane.f32.xlu0 %v240
        %v242 = vpop.xlane.xlu0 %241
        %v243 = vrcp.pop 32.0
        %v244 = vmul.f32 32.0, %v243
        %v245 = vsub.f32 1.0, %v244
        %v246 = vmul.f32 %v243, %v245
        %v247 = vadd.f32 %v243, %v246
        %vm248 = vweird.f32 %v243
        %v249 = vsel %vm248, %v243, %v247
        %v250 = vmul.f32 %v242, %v249
        %v251 = vsub.f32 %v238, %v250
        %v252 = vmul.f32 %v251, %v251
        %v253 = vsel %vm239, %v252, 0.0
        %254 = vadd.xlane.f32.xlu0 %v253
        %v255 = vpop.xlane.xlu0 %254
        %v256 = vmul.f32 %v255, %v249
        %v257 = vadd.f32 %v256, 1e-05
        %v258 = vrsqrt.pop %v257
        %v259 = vmul.f32 %v258, %v257
        %v260 = vmul.f32 %v259, %v258
        %v261 = vmul.f32 0.5, %v260
        %v262 = vsub.f32 1.5, %v261
        %v263 = vmul.f32 %v258, %v262
        %vm264 = vweird.f32 %v257
        %vm265 = vweird.f32 %v258
        %vm266 = vmor %vm264, %vm265
        %v267 = vsel %vm266, %v258, %v263
        %v268 = vmul.f32 %v251, %v267
        %v269 = vld [vmem:[%s1] sm:$0x1]
        %v271 = vperm.slane %v269, 0
        %v273 = vmul.f32 %v268, %v271
        %v274 = vld [vmem:[%s2] sm:$0x1]
        %v276 = vperm.slane %v274, 0
        %v278 = vadd.f32 %v273, %v276
        %v279 = vpack.c.bf16 %v278, %v278
        %v280 = vld [vmem:[%s4] sm:$0x1]
        %v281 = vld [vmem:[#allocation2] sm:$0xf]
        %v282 = vld [vmem:[#allocation2 + $0x4] sm:$0xf]
        %v283 = vld [vmem:[#allocation2 + $0x8] sm:$0xf]
        %v284 = vld [vmem:[#allocation2 + $0xc] sm:$0xf]
        %v289 = vunpack.c.l.b16 %v281
        %v290 = vunpack.c.l.b16 %v282
        %v291 = vunpack.c.l.b16 %v283
        %v292 = vunpack.c.l.b16 %v284
        %v293 = vpack.c.b16 %v290, %v289
        %v294 = vpack.c.b16 %v292, %v291
        %v298 = vsel %vm239, %v279, 0
        %300 = vmatpush.bf16.msra.mxu0 0
        %301 = vmatpush.bf16.msra.mxu0 0
        %302 = vmatpush.bf16.msra.mxu0 0
        %303 = vmatpush.bf16.msra.mxu0 0
        %304 = vmatpush.bf16.msra.mxu0 0
        %305 = vmatpush.bf16.msra.mxu0 0
        %306 = vmatpush.bf16.msra.mxu0 %v294
        %307 = vmatpush.bf16.msra.mxu0 %v293
        %308 = vmatmul.bf16.gmra.mxu0 %v298
        %v309 = vpop.f32.mrf.mxu0
        %v310 = vadd.f32 0.0, %v309
        %v311 = vpop.f32.mrf.mxu0
        %312 = vdwg.mxu0
        %v313 = vadd.f32 %v280, %v310
        %v314 = vld [vmem:[#allocation2 + $0x10] sm:$0xf]
        %v315 = vld [vmem:[#allocation2 + $0x14] sm:$0xf]
        %v316 = vld [vmem:[#allocation2 + $0x18] sm:$0xf]
        %v317 = vld [vmem:[#allocation2 + $0x1c] sm:$0xf]
        %v319 = vunpack.c.l.b16 %v279
        %v320 = vpack.c.b16 %v319, %v319
        %v322 = vshrl.u32 %v320, 16
        %v328 = vunpack.c.l.b16 %v314
        %v329 = vunpack.c.l.b16 %v315
        %v330 = vunpack.c.l.b16 %v316
        %v331 = vunpack.c.l.b16 %v317
        %v332 = vpack.c.b16 %v329, %v328
        %v333 = vpack.c.b16 %v331, %v330
        %v337 = vsel %vm239, %v322, 0
        %339 = vmatpush.bf16.msra.mxu0 0
        %340 = vmatpush.bf16.msra.mxu0 0
        %341 = vmatpush.bf16.msra.mxu0 0
        %342 = vmatpush.bf16.msra.mxu0 0
        %343 = vmatpush.bf16.msra.mxu0 0
        %344 = vmatpush.bf16.msra.mxu0 0
        %345 = vmatpush.bf16.msra.mxu0 %v333
        %346 = vmatpush.bf16.msra.mxu0 %v332
        %347 = vmatmul.bf16.gmra.mxu0 %v337
        %v348 = vpop.f32.mrf.mxu0
        %v349 = vadd.f32 0.0, %v348
        %v350 = vpop.f32.mrf.mxu0
        %351 = vdwg.mxu0
        %v352 = vadd.f32 %v313, %v349
        %v353 = vld [vmem:[#allocation2 + $0x20] sm:$0xf]
        %v354 = vld [vmem:[#allocation2 + $0x24] sm:$0xf]
        %v355 = vld [vmem:[#allocation2 + $0x28] sm:$0xf]
        %v356 = vld [vmem:[#allocation2 + $0x2c] sm:$0xf]
        %v357 = vrot.slane %v320, 1
        %v362 = vunpack.c.l.b16 %v353
        %v363 = vunpack.c.l.b16 %v354
        %v364 = vunpack.c.l.b16 %v355
        %v365 = vunpack.c.l.b16 %v356
        %v366 = vpack.c.b16 %v363, %v362
        %v367 = vpack.c.b16 %v365, %v364
        %v371 = vsel %vm239, %v357, 0
        %373 = vmatpush.bf16.msra.mxu0 0
        %374 = vmatpush.bf16.msra.mxu0 0
        %375 = vmatpush.bf16.msra.mxu0 0
        %376 = vmatpush.bf16.msra.mxu0 0
        %377 = vmatpush.bf16.msra.mxu0 0
        %378 = vmatpush.bf16.msra.mxu0 0
        %379 = vmatpush.bf16.msra.mxu0 %v367
        %380 = vmatpush.bf16.msra.mxu0 %v366
        %381 = vmatmul.bf16.gmra.mxu0 %v371
        %v382 = vpop.f32.mrf.mxu0
        %v383 = vadd.f32 0.0, %v382
        %v384 = vpop.f32.mrf.mxu0
        %385 = vdwg.mxu0
        %v386 = vadd.f32 %v352, %v383
        %v387 = vld [vmem:[#allocation2 + $0x30] sm:$0xf]
        %v388 = vld [vmem:[#allocation2 + $0x34] sm:$0xf]
        %v389 = vld [vmem:[#allocation2 + $0x38] sm:$0xf]
        %v390 = vld [vmem:[#allocation2 + $0x3c] sm:$0xf]
        %v391 = vrot.slane %v322, 1
        %v396 = vunpack.c.l.b16 %v387
        %v397 = vunpack.c.l.b16 %v388
        %v398 = vunpack.c.l.b16 %v389
        %v399 = vunpack.c.l.b16 %v390
        %v400 = vpack.c.b16 %v397, %v396
        %v401 = vpack.c.b16 %v399, %v398
        %v405 = vsel %vm239, %v391, 0
        %407 = vmatpush.bf16.msra.mxu0 0
        %408 = vmatpush.bf16.msra.mxu0 0
        %409 = vmatpush.bf16.msra.mxu0 0
        %410 = vmatpush.bf16.msra.mxu0 0
        %411 = vmatpush.bf16.msra.mxu0 0
        %412 = vmatpush.bf16.msra.mxu0 0
        %413 = vmatpush.bf16.msra.mxu0 %v401
        %414 = vmatpush.bf16.msra.mxu0 %v400
        %415 = vmatmul.bf16.gmra.mxu0 %v405
        %v416 = vpop.f32.mrf.mxu0
        %v417 = vadd.f32 0.0, %v416
        %v418 = vpop.f32.mrf.mxu0
        %419 = vdwg.mxu0
        %v420 = vadd.f32 %v386, %v417
        %v421 = vld [vmem:[#allocation2 + $0x40] sm:$0xf]
        %v422 = vld [vmem:[#allocation2 + $0x44] sm:$0xf]
        %v423 = vld [vmem:[#allocation2 + $0x48] sm:$0xf]
        %v424 = vld [vmem:[#allocation2 + $0x4c] sm:$0xf]
        %v425 = vrot.slane %v320, 2
        %v430 = vunpack.c.l.b16 %v421
        %v431 = vunpack.c.l.b16 %v422
        %v432 = vunpack.c.l.b16 %v423
        %v433 = vunpack.c.l.b16 %v424
        %v434 = vpack.c.b16 %v431, %v430
        %v435 = vpack.c.b16 %v433, %v432
        %v439 = vsel %vm239, %v425, 0
        %441 = vmatpush.bf16.msra.mxu0 0
        %442 = vmatpush.bf16.msra.mxu0 0
        %443 = vmatpush.bf16.msra.mxu0 0
        %444 = vmatpush.bf16.msra.mxu0 0
        %445 = vmatpush.bf16.msra.mxu0 0
        %446 = vmatpush.bf16.msra.mxu0 0
        %447 = vmatpush.bf16.msra.mxu0 %v435
        %448 = vmatpush.bf16.msra.mxu0 %v434
        %449 = vmatmul.bf16.gmra.mxu0 %v439
        %v450 = vpop.f32.mrf.mxu0
        %v451 = vadd.f32 0.0, %v450
        %v452 = vpop.f32.mrf.mxu0
        %453 = vdwg.mxu0
        %v454 = vadd.f32 %v420, %v451
        %v455 = vld [vmem:[#allocation2 + $0x50] sm:$0xf]
        %v456 = vld [vmem:[#allocation2 + $0x54] sm:$0xf]
        %v457 = vld [vmem:[#allocation2 + $0x58] sm:$0xf]
        %v458 = vld [vmem:[#allocation2 + $0x5c] sm:$0xf]
        %v459 = vrot.slane %v322, 2
        %v464 = vunpack.c.l.b16 %v455
        %v465 = vunpack.c.l.b16 %v456
        %v466 = vunpack.c.l.b16 %v457
        %v467 = vunpack.c.l.b16 %v458
        %v468 = vpack.c.b16 %v465, %v464
        %v469 = vpack.c.b16 %v467, %v466
        %v473 = vsel %vm239, %v459, 0
        %475 = vmatpush.bf16.msra.mxu0 0
        %476 = vmatpush.bf16.msra.mxu0 0
        %477 = vmatpush.bf16.msra.mxu0 0
        %478 = vmatpush.bf16.msra.mxu0 0
        %479 = vmatpush.bf16.msra.mxu0 0
        %480 = vmatpush.bf16.msra.mxu0 0
        %481 = vmatpush.bf16.msra.mxu0 %v469
        %482 = vmatpush.bf16.msra.mxu0 %v468
        %483 = vmatmul.bf16.gmra.mxu0 %v473
        %v484 = vpop.f32.mrf.mxu0
        %v485 = vadd.f32 0.0, %v484
        %v486 = vpop.f32.mrf.mxu0
        %487 = vdwg.mxu0
        %v488 = vadd.f32 %v454, %v485
        %v489 = vld [vmem:[#allocation2 + $0x60] sm:$0xf]
        %v490 = vld [vmem:[#allocation2 + $0x64] sm:$0xf]
        %v491 = vld [vmem:[#allocation2 + $0x68] sm:$0xf]
        %v492 = vld [vmem:[#allocation2 + $0x6c] sm:$0xf]
        %v493 = vrot.slane %v320, 3
        %v498 = vunpack.c.l.b16 %v489
        %v499 = vunpack.c.l.b16 %v490
        %v500 = vunpack.c.l.b16 %v491
        %v501 = vunpack.c.l.b16 %v492
        %v502 = vpack.c.b16 %v499, %v498
        %v503 = vpack.c.b16 %v501, %v500
        %v507 = vsel %vm239, %v493, 0
        %509 = vmatpush.bf16.msra.mxu0 0
        %510 = vmatpush.bf16.msra.mxu0 0
        %511 = vmatpush.bf16.msra.mxu0 0
        %512 = vmatpush.bf16.msra.mxu0 0
        %513 = vmatpush.bf16.msra.mxu0 0
        %514 = vmatpush.bf16.msra.mxu0 0
        %515 = vmatpush.bf16.msra.mxu0 %v503
        %516 = vmatpush.bf16.msra.mxu0 %v502
        %517 = vmatmul.bf16.gmra.mxu0 %v507
        %v518 = vpop.f32.mrf.mxu0
        %v519 = vadd.f32 0.0, %v518
        %v520 = vpop.f32.mrf.mxu0
        %521 = vdwg.mxu0
        %v522 = vadd.f32 %v488, %v519
        %v523 = vld [vmem:[#allocation2 + $0x70] sm:$0xf]
        %v524 = vld [vmem:[#allocation2 + $0x74] sm:$0xf]
        %v525 = vld [vmem:[#allocation2 + $0x78] sm:$0xf]
        %v526 = vld [vmem:[#allocation2 + $0x7c] sm:$0xf]
        %v527 = vrot.slane %v322, 3
        %v532 = vunpack.c.l.b16 %v523
        %v533 = vunpack.c.l.b16 %v524
        %v534 = vunpack.c.l.b16 %v525
        %v535 = vunpack.c.l.b16 %v526
        %v536 = vpack.c.b16 %v533, %v532
        %v537 = vpack.c.b16 %v535, %v534
        %v541 = vsel %vm239, %v527, 0
        %543 = vmatpush.bf16.msra.mxu0 0
        %544 = vmatpush.bf16.msra.mxu0 0
        %545 = vmatpush.bf16.msra.mxu0 0
        %546 = vmatpush.bf16.msra.mxu0 0
        %547 = vmatpush.bf16.msra.mxu0 0
        %548 = vmatpush.bf16.msra.mxu0 0
        %549 = vmatpush.bf16.msra.mxu0 %v537
        %550 = vmatpush.bf16.msra.mxu0 %v536
        %551 = vmatmul.bf16.gmra.mxu0 %v541
        %v552 = vpop.f32.mrf.mxu0
        %v553 = vadd.f32 0.0, %v552
        %v554 = vpop.f32.mrf.mxu0
        %555 = vdwg.mxu0
        %v556 = vadd.f32 %v522, %v553
        %v557 = vxor.u32 %v556, 2147483648
        %v558 = vmul.f32 %v557, 1.442695
        %v559 = vpow.pop %v558
        %v560 = vadd.f32 %v559, 1.0
        %v561 = vrcp.pop %v560
        %v562 = vmul.f32 %v560, %v561
        %v563 = vsub.f32 1.0, %v562
        %v564 = vmul.f32 %v561, %v563
        %v565 = vadd.f32 %v561, %v564
        %vm566 = vweird.f32 %v560
        %vm567 = vweird.f32 %v561
        %vm568 = vmor %vm566, %vm567
        %v569 = vsel %vm568, %v561, %v565
        %v570 = vand.u32 2147483647, %v560
        %vm571 = vcmp.eq.f32.partialorder %v570, 8.507059e+37
        %v572 = vand.u32 %v560, 2147483648
        %v573 = vor.u32 1.1754944e-38, %v572
        %v574 = vsel %vm571, %v573, %v569
        %v575 = vmul.f32 1.0, %v574
        %576 = vst [vmem:[%s231] sm:$0x1] %v575
        %s577 = sand.u32 %s138, 1
        %s578 = scalar_lea.sflag [#allocation4], %s577
        %s579 = sand.u32 %s138, 1
        %s580 = scalar_lea.vmem [#allocation5], %s579
        // Predicated region
        $region45: #{xlstm_forward.15} parent=39 // pred_check
          %p581 = pneg %p148
        $region46: #{xlstm_forward.15} parent=39 // pred_check_branch
          %583 = sbr.rel (%p581) target = $region48
        $region47: #{xlstm_forward.15} parent=39 // pred_region
          %585 = vsyncadd %s578, 0
          %s586 = scalar_lea.hbm %s5, %s20
          %s588 = sshll.u32 %s580, 4
          %s589 = int_to_ptr.vmem [resolvable:$true] %s588
          %s590 = sshll.u32 %s586, 4
          %s591 = int_to_ptr.hbm [resolvable:$true] %s590
          %593 = dma.vmem_to_hbm [thread:$0]  %s589, 16, %s591, %s578
        $region48: #{xlstm_forward.15} parent=39 // pred_fallthru
          _
      $region40: #{xlstm_forward.15} parent=5 // pred_fallthru
        _
      %p594 = scmp.le.s32.totalorder 2, %s15
      // Predicated region
      $region49: #{xlstm_forward.15} parent=5 // pred_check
        %p595 = pneg %p594
      $region50: #{xlstm_forward.15} parent=5 // pred_check_branch
        %597 = sbr.rel (%p595) target = $region52
      $region51: #{xlstm_forward.15} parent=5 // pred_region
        %s598 = ssub.s32 %s15, 2
        // Predicated region
        $region53: #{xlstm_forward.15} parent=51 // pred_check
          %p599 = pneg %p154
        $region54: #{xlstm_forward.15} parent=51 // pred_check_branch
          %601 = sbr.rel (%p599) target = $region56
        $region55: #{xlstm_forward.15} parent=51 // pred_region
          %s602 = sand.u32 %s139, 1
          %s603 = scalar_lea.sflag [#allocation4], %s602
          %s604 = sand.u32 %s139, 1
          %s605 = scalar_lea.vmem [#allocation5], %s604
          %607 = dma.done %s603, 16
        $region56: #{xlstm_forward.15} parent=51 // pred_fallthru
          _
      $region52: #{xlstm_forward.15} parent=5 // pred_fallthru
        _
    $region6: #{xlstm_forward.15} parent=1 // loop_footer
      %s19 = sadd.s32 1, %s15
    $region7: #{xlstm_forward.15} parent=1 // loop_footer_branch
      %14 = sbr.rel target = $region3
    $region8: #{xlstm_forward.15} parent=1 // loop_exit
      _
    %608 = vsyncpa [#allocation3], 1
    %s609 = scalar_lea.sflag [#allocation3], 1
    %610 = vsyncpa %s609, 1
    %611 = vsyncpa [#allocation4], 1
    %s612 = scalar_lea.sflag [#allocation4], 1
    %613 = vsyncpa %s612, 1

// kernel: xlstm_forward.13
$region0: #{xlstm_forward.13}
  #allocation0 [shape = 'u32[]', space=smem, size = 0x4, offset = 0x4, fixed_abs, tag = 'smem constant byte address 0x4 - core index']
  #allocation1 [shape = 'u32[72,128]{1,0:T(1,128)}', space=vmem, size = 0x9000, scoped, tag = 'internal scratch']
  %s0 = inlined_call_operand.vmem [shape: bf16[2,8,512], index: 0, kind: input, shape index: {}]
  %s1 = inlined_call_operand.vmem [shape: f32[4,64], index: 1, kind: input, shape index: {}]
  %s2 = inlined_call_operand.hbm [shape: f32[1,64], index: 2, kind: input, shape index: {}]
  %s3 = inlined_call_operand.hbm [shape: bf16[64,384], index: 3, kind: input, shape index: {}]
  %s4 = inlined_call_operand.vmem [shape: f32[1,384], index: 4, kind: input, shape index: {}]
  %s5 = inlined_call_operand.vmem [shape: f32[4,16], index: 5, kind: input, shape index: {}]
  %s6 = inlined_call_operand.hbm [shape: f32[1,64], index: 6, kind: input, shape index: {}]
  %s7 = inlined_call_operand.vmem [shape: bf16[2,8,64], index: 7, kind: output, shape index: {}]
  %s8 = sld [smem:[#allocation0]]
  $region73: #{xlstm_forward.13} parent=0
    _
  %s10 = ssub.s32 1, %s8
  %s11 = scalar_select 0, %s10, %s8
  $region1: #{xlstm_forward.13} parent=0
    #allocation2 [shape = 'u8[512]{0}', space=vmem, size = 0x400, scoped, tag = 'input window, operand 2, single buffered']
    #allocation3 [shape = 's32[2]{0}', space=sflag, size = 0x8, scoped, tag = 'scoped memory for xlstm_forward.13']
    #allocation4 [shape = 'u8[49152]{0}', space=vmem, size = 0xc000, scoped, tag = 'input window, operand 3, single buffered']
    #allocation5 [shape = 's32[1]{0}', space=sflag, size = 0x4, scoped, tag = 'scoped memory for xlstm_forward.13']
    #allocation6 [shape = 'u8[512]{0}', space=vmem, size = 0x400, scoped, tag = 'input window, operand 6, single buffered']
    %12 = vsyncpa [#allocation3], 0
    %13 = vsyncpa [#allocation5], 0
    loop: start=0, step=1, limit=4
    $region2: #{xlstm_forward.13} parent=1 // loop_pre_header
      _
    $region3: #{xlstm_forward.13} parent=1 // loop_header
      %s15 = sphi 0, %s19
      %p16 = scmp.ge.s32.totalorder %s15, 4
      %s25 = sphi 0, %s27
      %s28 = sphi 0, %s25
      %s29 = sphi 0, %s28
      %s45 = sphi 0, %s29
      %s49 = sphi 0, %s49
      %s51 = sphi 0, %s49
      %s52 = sphi 0, %s51
      %s66 = sphi 0, %s52
      %s70 = sphi 0, %s70
      %s72 = sphi 0, %s70
      %s73 = sphi 0, %s72
      %s87 = sphi 0, %s73
      %s91 = sphi 0, %s91
      %s93 = sphi 0, %s91
      %s94 = sphi 0, %s93
      %s108 = sphi 0, %s94
      %s112 = sphi 0, %s112
      %s114 = sphi 0, %s112
      %s115 = sphi 0, %s114
      %s129 = sphi 0, %s115
      %s133 = sphi 0, %s133
      %s135 = sphi 0, %s133
      %s136 = sphi 0, %s135
      %s150 = sphi 0, %s136
      %s154 = sphi 0, %s154
      %s156 = sphi 0, %s154
      %s157 = sphi 0, %s156
      %s171 = sphi 0, %s157
      %s177 = sphi 0, %s179
      %s180 = sphi 0, %s177
      %s181 = sphi 0, %s180
      %s197 = sphi 0, %s181
    $region4: #{xlstm_forward.13} parent=1 // loop_header_branch
      %18 = sbr.rel (%p16) target = $region8
    $region5: #{xlstm_forward.13} parent=1 // loop_body
      %s20 = ssub.s32 %s15, 1
      %s21 = ssub.s32 %s15, 2
      %s22 = sadd.s32 %s15, 1
      %s23 = ssub.s32 %s15, %s22
      %p24 = scmp.eq.s32.totalorder %s23, 0
      %s26 = sadd.s32 %s25, 1
      %s27 = scalar_select %p24, %s25, %s26
      %p30 = pneg %p24
      %p31 = scmp.eq.s32.totalorder %s15, 1
      %p32 = por %p30, %p31
      %p33 = scmp.ne.s32.totalorder %s25, %s28
      %p34 = scmp.eq.s32.totalorder %s15, 0
      %p35 = por %p33, %p34
      %p36 = scmp.ne.s32.totalorder %s25, %s28
      %p37 = scmp.eq.s32.totalorder %s20, 1
      %p38 = por %p36, %p37
      %p39 = scmp.ne.s32.totalorder %s28, %s29
      %p40 = scmp.eq.s32.totalorder %s20, 0
      %p41 = por %p39, %p40
      %p42 = scmp.ne.s32.totalorder %s28, %s29
      %p43 = scmp.eq.s32.totalorder %s21, 1
      %p44 = por %p42, %p43
      %p46 = scmp.ne.s32.totalorder %s29, %s45
      %p47 = scmp.eq.s32.totalorder %s21, 0
      %p48 = por %p46, %p47
      %s50 = sadd.s32 %s49, 1
      %p53 = scmp.eq.s32.totalorder %s15, 1
      %p54 = scmp.ne.s32.totalorder %s49, %s51
      %p55 = scmp.eq.s32.totalorder %s15, 0
      %p56 = por %p54, %p55
      %p57 = scmp.ne.s32.totalorder %s49, %s51
      %p58 = scmp.eq.s32.totalorder %s20, 1
      %p59 = por %p57, %p58
      %p60 = scmp.ne.s32.totalorder %s51, %s52
      %p61 = scmp.eq.s32.totalorder %s20, 0
      %p62 = por %p60, %p61
      %p63 = scmp.ne.s32.totalorder %s51, %s52
      %p64 = scmp.eq.s32.totalorder %s21, 1
      %p65 = por %p63, %p64
      %p67 = scmp.ne.s32.totalorder %s52, %s66
      %p68 = scmp.eq.s32.totalorder %s21, 0
      %p69 = por %p67, %p68
      %s71 = sadd.s32 %s70, 1
      %p74 = scmp.eq.s32.totalorder %s15, 1
      %p75 = scmp.ne.s32.totalorder %s70, %s72
      %p76 = scmp.eq.s32.totalorder %s15, 0
      %p77 = por %p75, %p76
      %p78 = scmp.ne.s32.totalorder %s70, %s72
      %p79 = scmp.eq.s32.totalorder %s20, 1
      %p80 = por %p78, %p79
      %p81 = scmp.ne.s32.totalorder %s72, %s73
      %p82 = scmp.eq.s32.totalorder %s20, 0
      %p83 = por %p81, %p82
      %p84 = scmp.ne.s32.totalorder %s72, %s73
      %p85 = scmp.eq.s32.totalorder %s21, 1
      %p86 = por %p84, %p85
      %p88 = scmp.ne.s32.totalorder %s73, %s87
      %p89 = scmp.eq.s32.totalorder %s21, 0
      %p90 = por %p88, %p89
      %s92 = sadd.s32 %s91, 1
      %p95 = scmp.eq.s32.totalorder %s15, 1
      %p96 = scmp.ne.s32.totalorder %s91, %s93
      %p97 = scmp.eq.s32.totalorder %s15, 0
      %p98 = por %p96, %p97
      %p99 = scmp.ne.s32.totalorder %s91, %s93
      %p100 = scmp.eq.s32.totalorder %s20, 1
      %p101 = por %p99, %p100
      %p102 = scmp.ne.s32.totalorder %s93, %s94
      %p103 = scmp.eq.s32.totalorder %s20, 0
      %p104 = por %p102, %p103
      %p105 = scmp.ne.s32.totalorder %s93, %s94
      %p106 = scmp.eq.s32.totalorder %s21, 1
      %p107 = por %p105, %p106
      %p109 = scmp.ne.s32.totalorder %s94, %s108
      %p110 = scmp.eq.s32.totalorder %s21, 0
      %p111 = por %p109, %p110
      %s113 = sadd.s32 %s112, 1
      %p116 = scmp.eq.s32.totalorder %s15, 1
      %p117 = scmp.ne.s32.totalorder %s112, %s114
      %p118 = scmp.eq.s32.totalorder %s15, 0
      %p119 = por %p117, %p118
      %p120 = scmp.ne.s32.totalorder %s112, %s114
      %p121 = scmp.eq.s32.totalorder %s20, 1
      %p122 = por %p120, %p121
      %p123 = scmp.ne.s32.totalorder %s114, %s115
      %p124 = scmp.eq.s32.totalorder %s20, 0
      %p125 = por %p123, %p124
      %p126 = scmp.ne.s32.totalorder %s114, %s115
      %p127 = scmp.eq.s32.totalorder %s21, 1
      %p128 = por %p126, %p127
      %p130 = scmp.ne.s32.totalorder %s115, %s129
      %p131 = scmp.eq.s32.totalorder %s21, 0
      %p132 = por %p130, %p131
      %s134 = sadd.s32 %s133, 1
      %p137 = scmp.eq.s32.totalorder %s15, 1
      %p138 = scmp.ne.s32.totalorder %s133, %s135
      %p139 = scmp.eq.s32.totalorder %s15, 0
      %p140 = por %p138, %p139
      %p141 = scmp.ne.s32.totalorder %s133, %s135
      %p142 = scmp.eq.s32.totalorder %s20, 1
      %p143 = por %p141, %p142
      %p144 = scmp.ne.s32.totalorder %s135, %s136
      %p145 = scmp.eq.s32.totalorder %s20, 0
      %p146 = por %p144, %p145
      %p147 = scmp.ne.s32.totalorder %s135, %s136
      %p148 = scmp.eq.s32.totalorder %s21, 1
      %p149 = por %p147, %p148
      %p151 = scmp.ne.s32.totalorder %s136, %s150
      %p152 = scmp.eq.s32.totalorder %s21, 0
      %p153 = por %p151, %p152
      %s155 = sadd.s32 %s154, 1
      %p158 = scmp.eq.s32.totalorder %s15, 1
      %p159 = scmp.ne.s32.totalorder %s154, %s156
      %p160 = scmp.eq.s32.totalorder %s15, 0
      %p161 = por %p159, %p160
      %p162 = scmp.ne.s32.totalorder %s154, %s156
      %p163 = scmp.eq.s32.totalorder %s20, 1
      %p164 = por %p162, %p163
      %p165 = scmp.ne.s32.totalorder %s156, %s157
      %p166 = scmp.eq.s32.totalorder %s20, 0
      %p167 = por %p165, %p166
      %p168 = scmp.ne.s32.totalorder %s156, %s157
      %p169 = scmp.eq.s32.totalorder %s21, 1
      %p170 = por %p168, %p169
      %p172 = scmp.ne.s32.totalorder %s157, %s171
      %p173 = scmp.eq.s32.totalorder %s21, 0
      %p174 = por %p172, %p173
      %s175 = ssub.s32 %s15, %s22
      %p176 = scmp.eq.s32.totalorder %s175, 0
      %s178 = sadd.s32 %s177, 1
      %s179 = scalar_select %p176, %s177, %s178
      %p182 = pneg %p176
      %p183 = scmp.eq.s32.totalorder %s15, 1
      %p184 = por %p182, %p183
      %p185 = scmp.ne.s32.totalorder %s177, %s180
      %p186 = scmp.eq.s32.totalorder %s15, 0
      %p187 = por %p185, %p186
      %p188 = scmp.ne.s32.totalorder %s177, %s180
      %p189 = scmp.eq.s32.totalorder %s20, 1
      %p190 = por %p188, %p189
      %p191 = scmp.ne.s32.totalorder %s180, %s181
      %p192 = scmp.eq.s32.totalorder %s20, 0
      %p193 = por %p191, %p192
      %p194 = scmp.ne.s32.totalorder %s180, %s181
      %p195 = scmp.eq.s32.totalorder %s21, 1
      %p196 = por %p194, %p195
      %p198 = scmp.ne.s32.totalorder %s181, %s197
      %p199 = scmp.eq.s32.totalorder %s21, 0
      %p200 = por %p198, %p199
      %p201 = scmp.le.s32.totalorder 1, %s15
      %p202 = scmp.lt.s32.totalorder %s15, 3
      %p203 = pnand %p201, %p202
      %p204 = pneg %p203
      // Predicated region
      $region9: #{xlstm_forward.13} parent=5 // pred_check
        _
      $region10: #{xlstm_forward.13} parent=5 // pred_check_branch
        %206 = sbr.rel (%p203) target = $region12
      $region11: #{xlstm_forward.13} parent=5 // pred_region
        %s207 = ssub.s32 %s15, 1
        // Predicated region
        $region13: #{xlstm_forward.13} parent=11 // pred_check
          %p208 = pneg %p62
        $region14: #{xlstm_forward.13} parent=11 // pred_check_branch
          %210 = sbr.rel (%p208) target = $region16
        $region15: #{xlstm_forward.13} parent=11 // pred_region
          _
        $region16: #{xlstm_forward.13} parent=11 // pred_fallthru
          _
        // Predicated region
        $region17: #{xlstm_forward.13} parent=11 // pred_check
          %p211 = pneg %p83
        $region18: #{xlstm_forward.13} parent=11 // pred_check_branch
          %213 = sbr.rel (%p211) target = $region20
        $region19: #{xlstm_forward.13} parent=11 // pred_region
          %215 = vsyncadd [#allocation3], 0
          %s217 = sshll.u32 %s2, 4
          %s218 = int_to_ptr.hbm [resolvable:$true] %s217
          %s219 = sshll.u32 [#allocation2], 4
          %s220 = int_to_ptr.vmem [resolvable:$true] %s219
          %222 = dma.hbm_to_vmem [thread:$0]  %s218, 16, %s220, [#allocation3]
        $region20: #{xlstm_forward.13} parent=11 // pred_fallthru
          _
        // Predicated region
        $region21: #{xlstm_forward.13} parent=11 // pred_check
          %p223 = pneg %p104
        $region22: #{xlstm_forward.13} parent=11 // pred_check_branch
          %225 = sbr.rel (%p223) target = $region24
        $region23: #{xlstm_forward.13} parent=11 // pred_region
          %227 = vsyncadd [#allocation5], 0
          %s228 = sshll.u32 %s3, 4
          %s229 = int_to_ptr.hbm [resolvable:$true] %s228
          %s230 = sshll.u32 [#allocation4], 4
          %s231 = int_to_ptr.vmem [resolvable:$true] %s230
          %236 = dma.hbm_to_vmem [thread:$0]  %s229, 1536, %s231, [#allocation5], 192, 192, 12
        $region24: #{xlstm_forward.13} parent=11 // pred_fallthru
          _
        // Predicated region
        $region25: #{xlstm_forward.13} parent=11 // pred_check
          %p237 = pneg %p125
        $region26: #{xlstm_forward.13} parent=11 // pred_check_branch
          %239 = sbr.rel (%p237) target = $region28
        $region27: #{xlstm_forward.13} parent=11 // pred_region
          _
        $region28: #{xlstm_forward.13} parent=11 // pred_fallthru
          _
        // Predicated region
        $region29: #{xlstm_forward.13} parent=11 // pred_check
          %p240 = pneg %p146
        $region30: #{xlstm_forward.13} parent=11 // pred_check_branch
          %242 = sbr.rel (%p240) target = $region32
        $region31: #{xlstm_forward.13} parent=11 // pred_region
          _
        $region32: #{xlstm_forward.13} parent=11 // pred_fallthru
          _
        // Predicated region
        $region33: #{xlstm_forward.13} parent=11 // pred_check
          %p243 = pneg %p167
        $region34: #{xlstm_forward.13} parent=11 // pred_check_branch
          %245 = sbr.rel (%p243) target = $region36
        $region35: #{xlstm_forward.13} parent=11 // pred_region
          %247 = vsyncadd [#allocation5], 0
          %s249 = sshll.u32 %s6, 4
          %s250 = int_to_ptr.hbm [resolvable:$true] %s249
          %s251 = sshll.u32 [#allocation6], 4
          %s252 = int_to_ptr.vmem [resolvable:$true] %s251
          %254 = dma.hbm_to_vmem [thread:$0]  %s250, 16, %s252, [#allocation5]
        $region36: #{xlstm_forward.13} parent=11 // pred_fallthru
          _
      $region12: #{xlstm_forward.13} parent=5 // pred_fallthru
        _
      %p255 = scmp.lt.s32.totalorder %s15, 2
      // Predicated region
      $region37: #{xlstm_forward.13} parent=5 // pred_check
        %p256 = pneg %p255
      $region38: #{xlstm_forward.13} parent=5 // pred_check_branch
        %258 = sbr.rel (%p256) target = $region40
      $region39: #{xlstm_forward.13} parent=5 // pred_region
        // Predicated region
        $region41: #{xlstm_forward.13} parent=39 // pred_check
          %p259 = pneg %p35
        $region42: #{xlstm_forward.13} parent=39 // pred_check_branch
          %261 = sbr.rel (%p259) target = $region44
        $region43: #{xlstm_forward.13} parent=39 // pred_region
          %p262 = scmp.lt.s32.totalorder %s15, 1
          %s263 = scalar_select %p262, %s15, 1
          %s264 = smul.addr %s263, 4
          %s265 = smul.addr %s264, 4
          %s266 = scalar_lea.vmem %s0, %s265
        $region44: #{xlstm_forward.13} parent=39 // pred_fallthru
          _
      $region40: #{xlstm_forward.13} parent=5 // pred_fallthru
        _
      %p267 = scmp.le.s32.totalorder 1, %s15
      %p268 = scmp.lt.s32.totalorder %s15, 3
      %p269 = pnand %p267, %p268
      %p270 = pneg %p269
      // Predicated region
      $region45: #{xlstm_forward.13} parent=5 // pred_check
        _
      $region46: #{xlstm_forward.13} parent=5 // pred_check_branch
        %272 = sbr.rel (%p269) target = $region48
      $region47: #{xlstm_forward.13} parent=5 // pred_region
        %s273 = ssub.s32 %s15, 1
        // Predicated region
        $region49: #{xlstm_forward.13} parent=47 // pred_check
          %p274 = pneg %p83
        $region50: #{xlstm_forward.13} parent=47 // pred_check_branch
          %276 = sbr.rel (%p274) target = $region52
        $region51: #{xlstm_forward.13} parent=47 // pred_region
          %278 = dma.done [#allocation3], 16
        $region52: #{xlstm_forward.13} parent=47 // pred_fallthru
          _
        // Predicated region
        $region53: #{xlstm_forward.13} parent=47 // pred_check
          %p279 = pneg %p104
        $region54: #{xlstm_forward.13} parent=47 // pred_check_branch
          %281 = sbr.rel (%p279) target = $region56
        $region55: #{xlstm_forward.13} parent=47 // pred_region
          %283 = dma.done [#allocation5], 1536
        $region56: #{xlstm_forward.13} parent=47 // pred_fallthru
          _
        // Predicated region
        $region57: #{xlstm_forward.13} parent=47 // pred_check
          %p284 = pneg %p167
        $region58: #{xlstm_forward.13} parent=47 // pred_check_branch
          %286 = sbr.rel (%p284) target = $region60
        $region59: #{xlstm_forward.13} parent=47 // pred_region
          %288 = dma.done [#allocation5], 16
        $region60: #{xlstm_forward.13} parent=47 // pred_fallthru
          _
        %p289 = scmp.lt.s32.totalorder %s20, 1
        %s290 = scalar_select %p289, %s20, 1
        %s291 = smul.addr %s290, 4
        %s292 = smul.addr %s291, 4
        %s293 = scalar_lea.vmem %s0, %s292
        %p294 = pneg %p41
        %p295 = pneg %p38
        %p296 = pneg %p62
        %p297 = pneg %p59
        %p298 = pneg %p83
        %p299 = pneg %p80
        %p300 = pneg %p104
        %p301 = pneg %p101
        %p302 = pneg %p125
        %p303 = pneg %p122
        %p304 = pneg %p146
        %p305 = pneg %p143
        %p306 = pneg %p167
        %p307 = pneg %p164
        %p308 = pneg %p193
        %p309 = pneg %p190
        %p310 = scmp.lt.s32.totalorder %s20, 1
        %s311 = scalar_select %p310, %s20, 1
        %s312 = smul.addr %s311, 4
        %s313 = scalar_lea.vmem %s7, %s312
        %p314 = scmp.lt.s32.totalorder %s20, 1
        %s315 = scalar_select %p314, %s20, 1
        %s316 = smul.addr %s315, 4
        %s317 = smul.addr %s316, 4
        %s318 = scalar_lea.vmem %s0, %s317
        %p319 = scmp.lt.s32.totalorder %s20, 1
        %s320 = scalar_select %p319, %s20, 1
        %s321 = smul.addr %s320, 4
        %s322 = scalar_lea.vmem %s7, %s321
        %v324 = vld [vmem:[%s318] sm:$0xff]
        %v325 = vld [vmem:[%s318 + $0x8] sm:$0xff]
        %v326 = vunpack.c.l.bf16 %v324
        %v328 = vrot.slane %v324, 4
        %v330 = vunpack.c.l.bf16 %v328
        %v332 = vrot.slane %v325, 4
        %v334 = vunpack.c.l.bf16 %v332
        %v335 = vlaneseq
        %v336 = vshrl.u32 %v335, 7
        %v337 = vld [vmem:[%s1] sm:$0xf]
        %v338 = vperm.slane %v337, 3
        %v339 = vmul.f32 %v326, %v338
        %v340 = vrot.slane %v326, 7
        %vm341 = vcmp.ge.s32.totalorder %v336, 1
        %v342 = vsel %vm341, 1, 0
        %vm343 = vcmp.eq.s32.totalorder %v342, 1
        %v344 = vsel %vm343, %v340, 0.0
        %v345 = vperm.slane %v337, 2
        %v346 = vmul.f32 %v344, %v345
        %v347 = vadd.f32 %v339, %v346
        %v348 = vrot.slane %v326, 6
        %vm349 = vcmp.ge.s32.totalorder %v336, 2
        %v350 = vsel %vm349, 1, 0
        %vm351 = vcmp.eq.s32.totalorder %v350, 1
        %v352 = vsel %vm351, %v348, 0.0
        %v353 = vperm.slane %v337, 1
        %v354 = vmul.f32 %v352, %v353
        %v355 = vadd.f32 %v347, %v354
        %v356 = vrot.slane %v326, 5
        %vm357 = vcmp.ge.s32.totalorder %v336, 3
        %v358 = vsel %vm357, 1, 0
        %vm359 = vcmp.eq.s32.totalorder %v358, 1
        %v360 = vsel %vm359, %v356, 0.0
        %v361 = vperm.slane %v337, 0
        %v362 = vmul.f32 %v360, %v361
        %v363 = vadd.f32 %v355, %v362
        %v364 = vld [vmem:[#allocation2] sm:$0x1]
        %v366 = vperm.slane %v364, 0
        %v368 = vadd.f32 %v363, %v366
        %v369 = vxor.u32 %v368, 2147483648
        %v370 = vmul.f32 %v369, 1.442695
        %v371 = vpow.pop %v370
        %v372 = vadd.f32 %v371, 1.0
        %v373 = vrcp.pop %v372
        %v374 = vmul.f32 %v372, %v373
        %v375 = vsub.f32 1.0, %v374
        %v376 = vmul.f32 %v373, %v375
        %v377 = vadd.f32 %v373, %v376
        %vm378 = vweird.f32 %v372
        %vm379 = vweird.f32 %v373
        %vm380 = vmor %vm378, %vm379
        %v381 = vsel %vm380, %v373, %v377
        %v382 = vand.u32 2147483647, %v372
        %vm383 = vcmp.eq.f32.partialorder %v382, 8.507059e+37
        %v384 = vand.u32 %v372, 2147483648
        %v385 = vor.u32 1.1754944e-38, %v384
        %v386 = vsel %vm383, %v385, %v381
        %v387 = vmul.f32 1.0, %v386
        %v388 = vmul.f32 %v368, %v387
        %v389 = vpack.c.bf16 %v388, %v388
        %v390 = vld [vmem:[#allocation4] sm:$0xff]
        %v391 = vld [vmem:[#allocation4 + $0x8] sm:$0xf]
        %v392 = vld [vmem:[#allocation4 + $0xc] sm:$0xff]
        %v393 = vld [vmem:[#allocation4 + $0x14] sm:$0xf]
        %v394 = vld [vmem:[#allocation4 + $0x18] sm:$0xff]
        %v395 = vld [vmem:[#allocation4 + $0x20] sm:$0xf]
        %v396 = vld [vmem:[#allocation4 + $0x24] sm:$0xff]
        %v397 = vld [vmem:[#allocation4 + $0x2c] sm:$0xf]
        %v398 = vld [vmem:[#allocation4 + $0x30] sm:$0xff]
        %v399 = vld [vmem:[#allocation4 + $0x38] sm:$0xf]
        %v400 = vld [vmem:[#allocation4 + $0x3c] sm:$0xff]
        %v401 = vld [vmem:[#allocation4 + $0x44] sm:$0xf]
        %v402 = vld [vmem:[#allocation4 + $0x48] sm:$0xff]
        %v403 = vld [vmem:[#allocation4 + $0x50] sm:$0xf]
        %v404 = vld [vmem:[#allocation4 + $0x54] sm:$0xff]
        %v405 = vld [vmem:[#allocation4 + $0x5c] sm:$0xf]
        %v406 = vld [vmem:[%s4] sm:$0x7]
        %v408 = vperm.slane %v406, 0
        %v409 = vperm.slane %v406, 1
        %v410 = vperm.slane %v406, 2
        %v430 = vunpack.c.l.b16 %v390
        %v431 = vunpack.c.h.b16 %v390
        %v432 = vunpack.c.l.b16 %v391
        %v433 = vunpack.c.l.b16 %v392
        %v434 = vunpack.c.h.b16 %v392
        %v435 = vunpack.c.l.b16 %v393
        %v436 = vunpack.c.l.b16 %v394
        %v437 = vunpack.c.h.b16 %v394
        %v438 = vunpack.c.l.b16 %v395
        %v439 = vunpack.c.l.b16 %v396
        %v440 = vunpack.c.h.b16 %v396
        %v441 = vunpack.c.l.b16 %v397
        %v442 = vunpack.c.l.b16 %v398
        %v443 = vunpack.c.h.b16 %v398
        %v444 = vunpack.c.l.b16 %v399
        %v445 = vunpack.c.l.b16 %v400
        %v446 = vunpack.c.h.b16 %v400
        %v447 = vunpack.c.l.b16 %v401
        %v448 = vunpack.c.l.b16 %v402
        %v449 = vunpack.c.h.b16 %v402
        %v450 = vunpack.c.l.b16 %v403
        %v451 = vunpack.c.l.b16 %v404
        %v452 = vunpack.c.h.b16 %v404
        %v453 = vunpack.c.l.b16 %v405
        %v454 = vpack.c.b16 %v433, %v430
        %v455 = vpack.c.b16 %v434, %v431
        %v456 = vpack.c.b16 %v435, %v432
        %v457 = vpack.c.b16 %v439, %v436
        %v458 = vpack.c.b16 %v440, %v437
        %v459 = vpack.c.b16 %v441, %v438
        %v460 = vpack.c.b16 %v445, %v442
        %v461 = vpack.c.b16 %v446, %v443
        %v462 = vpack.c.b16 %v447, %v444
        %v463 = vpack.c.b16 %v451, %v448
        %v464 = vpack.c.b16 %v452, %v449
        %v465 = vpack.c.b16 %v453, %v450
        %vm478 = vcmask 523264
        %v480 = vsel %vm478, %v389, 0
        %482 = vmatpush.bf16.msra.mxu0 0
        %483 = vmatpush.bf16.msra.mxu0 0
        %484 = vmatpush.bf16.msra.mxu0 0
        %485 = vmatpush.bf16.msra.mxu0 0
        %486 = vmatpush.bf16.msra.mxu0 %v463
        %487 = vmatpush.bf16.msra.mxu0 %v460
        %488 = vmatpush.bf16.msra.mxu0 %v457
        %489 = vmatpush.bf16.msra.mxu0 %v454
        %490 = vmatmul.bf16.gmra.mxu0 %v480
        %v491 = vpop.f32.mrf.mxu0
        %v492 = vadd.f32 %v408, %v491
        %v493 = vpop.f32.mrf.mxu0
        %494 = vdwg.mxu0
        %495 = vmatpush.bf16.msra.mxu0 0
        %496 = vmatpush.bf16.msra.mxu0 0
        %497 = vmatpush.bf16.msra.mxu0 0
        %498 = vmatpush.bf16.msra.mxu0 0
        %499 = vmatpush.bf16.msra.mxu0 %v464
        %500 = vmatpush.bf16.msra.mxu0 %v461
        %501 = vmatpush.bf16.msra.mxu0 %v458
        %502 = vmatpush.bf16.msra.mxu0 %v455
        %503 = vmatmul.bf16.gmra.mxu0 %v480
        %v504 = vpop.f32.mrf.mxu0
        %v505 = vadd.f32 %v409, %v504
        %v506 = vpop.f32.mrf.mxu0
        %507 = vdwg.mxu0
        %508 = vmatpush.bf16.msra.mxu0 0
        %509 = vmatpush.bf16.msra.mxu0 0
        %510 = vmatpush.bf16.msra.mxu0 0
        %511 = vmatpush.bf16.msra.mxu0 0
        %512 = vmatpush.bf16.msra.mxu0 %v465
        %513 = vmatpush.bf16.msra.mxu0 %v462
        %514 = vmatpush.bf16.msra.mxu0 %v459
        %515 = vmatpush.bf16.msra.mxu0 %v456
        %516 = vmatmul.bf16.gmra.mxu0 %v480
        %v517 = vpop.f32.mrf.mxu0
        %v518 = vadd.f32 %v410, %v517
        %v519 = vpop.f32.mrf.mxu0
        %520 = vdwg.mxu0
        %v521 = vadd.f32 %v518, %v334
        %v522 = vmin.f32 %v521, 0.0
        %v523 = vand.u32 2147483647, %v521
        %v524 = vsub.f32 0.0, %v523
        %v525 = vmul.f32 %v524, 1.442695
        %v526 = vpow.pop %v525
        %v527 = vadd.f32 %v526, 1.0
        %v528 = vlog2.pop %v527
        %v529 = vmul.f32 %v528, 0.6931472
        %v530 = vmul.f32 -0.5, %v526
        %v531 = vadd.f32 %v530, 1.0
        %v532 = vmul.f32 %v531, %v526
        %v533 = vand.u32 2147483647, %v526
        %vm534 = vcmp.lt.f32.partialorder %v533, 0.0004427343
        %v535 = vsel %vm534, %v532, %v529
        %v536 = vsub.f32 %v522, %v535
        %v537 = vrot.slane %v536, 7
        %v538 = vsel %vm343, %v537, 0.0
        %v539 = vadd.f32 %v536, %v538
        %v540 = vrot.slane %v539, 6
        %v541 = vsel %vm351, %v540, 0.0
        %v542 = vadd.f32 %v539, %v541
        %vm543 = vcmp.ge.s32.totalorder %v336, 4
        %v544 = vrot.slane %v542, 4
        %v545 = vsel %vm543, 1, 0
        %vm546 = vcmp.eq.s32.totalorder %v545, 1
        %v547 = vsel %vm546, %v544, 0.0
        %v548 = vadd.f32 %v542, %v547
        %v549 = vlaneseq
        %v550 = vand.u32 %v549, 127
        %vm551 = vcmp.le.s32.totalorder %v550, %v336
        %v552 = vld [vmem:[%s5] sm:$0xf]
        %v553 = vld [vmem:[#allocation6] sm:$0x1]
        %v554 = vxor.u32 %v330, 2147483648
        %v555 = vmul.f32 %v554, 1.442695
        %v556 = vpow.pop %v555
        %v557 = vadd.f32 %v556, 1.0
        %v558 = vrcp.pop %v557
        %v559 = vmul.f32 %v557, %v558
        %v560 = vsub.f32 1.0, %v559
        %v561 = vmul.f32 %v558, %v560
        %v562 = vadd.f32 %v558, %v561
        %vm563 = vweird.f32 %v557
        %vm564 = vweird.f32 %v558
        %vm565 = vmor %vm563, %vm564
        %v566 = vsel %vm565, %v558, %v562
        %v567 = vand.u32 2147483647, %v557
        %vm568 = vcmp.eq.f32.partialorder %v567, 8.507059e+37
        %v569 = vand.u32 %v557, 2147483648
        %v570 = vor.u32 1.1754944e-38, %v569
        %v571 = vsel %vm568, %v570, %v566
        %v572 = vmul.f32 1.0, %v571
        %v573 = vmul.f32 %v330, %v572
        %575 = vrot.lane.b32.xlu0 %v548, 124
        %v576 = vpop.permute.xlu0 %575
        %v578 = vsub.f32 %v521, %v576
        %vm579 = vcmask 7168
        %v581 = vsel %vm579, 1.0, 0
        %v584 = vsel %vm579, %v578, 0
        %586 = vmatpush.xpose.msra.mxu0 0.0
        %587 = vmatpush.xpose.msra.mxu0 0.0
        %588 = vmatpush.xpose.msra.mxu0 0.0
        %589 = vmatpush.xpose.msra.mxu0 0.0
        %590 = vmatpush.xpose.msra.mxu0 0.0
        %591 = vmatpush.xpose.msra.mxu0 0.0
        %592 = vmatpush.xpose.msra.mxu0 0.0
        %593 = vmatpush.xpose.msra.mxu0 0.0
        %594 = vmatpush.xpose.msra.mxu0 0.0
        %595 = vmatpush.xpose.msra.mxu0 0.0
        %596 = vmatpush.xpose.msra.mxu0 0.0
        %597 = vmatpush.xpose.msra.mxu0 0.0
        %598 = vmatpush.xpose.msra.mxu0 0.0
        %599 = vmatpush.xpose.msra.mxu0 0.0
        %600 = vmatpush.xpose.msra.mxu0 0.0
        %601 = vmatpush.xpose.msra.mxu0 %v584
        %602 = vmatmul.f32.gmra.mxu0 %v581
        %v603 = vpop.f32.mrf.mxu0
        %v604 = vadd.f32 0.0, %v603
        %605 = vdwg.mxu0
        %606 = vset.pattern.permute.xlu0 4
        %607 = vperm.xlu0 %606, %v548
        %v608 = vpop.permute.xlu0 %607
        %v610 = vadd.f32 %v608, %v604
        %v611 = vsel %vm551, %v610, -1e+30
        %vm612 = vcmask 64512
        %v613 = vsel %vm612, %v611, -inf
        %614 = vmax.xlane.f32.xlu0 %v613
        %v615 = vpop.xlane.xlu0 %614
        %v616 = vsub.f32 %v611, %v615
        %v617 = vmul.f32 %v616, 1.442695
        %v618 = vpow.pop %v617
        %v619 = vpack.c.bf16 %v492, %v492
        %v620 = vpack.c.bf16 %v505, %v505
        %vm621 = vcmask 130048
        %v623 = vsel %vm621, %v619, 0
        %v626 = vsel %vm621, %v620, 0
        %628 = vmatpush.bf16.xpose.msra.mxu0 0
        %629 = vmatpush.bf16.xpose.msra.mxu0 0
        %630 = vmatpush.bf16.xpose.msra.mxu0 0
        %631 = vmatpush.bf16.xpose.msra.mxu0 0
        %632 = vmatpush.bf16.xpose.msra.mxu0 0
        %633 = vmatpush.bf16.xpose.msra.mxu0 0
        %634 = vmatpush.bf16.xpose.msra.mxu0 0
        %635 = vmatpush.bf16.xpose.msra.mxu0 %v626
        %636 = vmatmul.bf16.gmra.mxu0 %v623
        %v637 = vpop.f32.mrf.mxu0
        %v638 = vadd.f32 0.0, %v637
        %v639 = vpop.f32.mrf.mxu0
        %640 = vdwg.mxu0
        %v641 = vmul.f32 %v638, 0.25
        %v642 = vmul.f32 %v641, %v618
        %v643 = vsub.f32 0.0, %v615
        %v644 = vmin.f32 %v643, 80.0
        %v645 = vmul.f32 %v644, 1.442695
        %v646 = vpow.pop %v645
        %v647 = vsel %vm612, %v642, 0.0
        %648 = vadd.xlane.f32.xlu0 %v647
        %v649 = vpop.xlane.xlu0 %648
        %v650 = vand.u32 2147483647, %v649
        %v651 = vmax.f32 %v650, %v646
        %v652 = vadd.f32 %v651, 1e-06
        %v653 = vrcp.pop %v652
        %v654 = vmul.f32 %v642, %v653
        %v655 = vpack.c.bf16 %v654, %v654
        %v657 = vsel %vm612, %v655, 0
        %vm659 = vcmask 1043456
        %v661 = vsel %vm659, %v325, 0
        %663 = vmatpush.bf16.msra.mxu0 0
        %664 = vmatpush.bf16.msra.mxu0 0
        %665 = vmatpush.bf16.msra.mxu0 0
        %666 = vmatpush.bf16.msra.mxu0 0
        %667 = vmatpush.bf16.msra.mxu0 0
        %668 = vmatpush.bf16.msra.mxu0 0
        %669 = vmatpush.bf16.msra.mxu0 0
        %670 = vmatpush.bf16.msra.mxu0 %v661
        %671 = vmatmul.bf16.gmra.mxu0 %v657
        %v672 = vpop.f32.mrf.mxu0
        %v673 = vadd.f32 0.0, %v672
        %v674 = vpop.f32.mrf.mxu0
        %675 = vdwg.mxu0
        %v676 = vsel %vm621, %v673, 0.0
        %677 = vadd.xlane.f32.xlu0 %v676
        %v678 = vpop.xlane.xlu0 %677
        %v679 = vrcp.pop 16.0
        %v680 = vmul.f32 16.0, %v679
        %v681 = vsub.f32 1.0, %v680
        %v682 = vmul.f32 %v679, %v681
        %v683 = vadd.f32 %v679, %v682
        %vm684 = vweird.f32 %v679
        %v685 = vsel %vm684, %v679, %v683
        %v686 = vmul.f32 %v678, %v685
        %v687 = vsub.f32 %v673, %v686
        %v688 = vmul.f32 %v687, %v687
        %v689 = vsel %vm621, %v688, 0.0
        %690 = vadd.xlane.f32.xlu0 %v689
        %v691 = vpop.xlane.xlu0 %690
        %v692 = vmul.f32 %v691, %v685
        %v693 = vadd.f32 %v692, 1e-05
        %v694 = vrsqrt.pop %v693
        %v695 = vmul.f32 %v694, %v693
        %v696 = vmul.f32 %v695, %v694
        %v697 = vmul.f32 0.5, %v696
        %v698 = vsub.f32 1.5, %v697
        %v699 = vmul.f32 %v694, %v698
        %vm700 = vweird.f32 %v693
        %vm701 = vweird.f32 %v694
        %vm702 = vmor %vm700, %vm701
        %v703 = vsel %vm702, %v694, %v699
        %v704 = vmul.f32 %v687, %v703
        %v705 = vperm.slane %v552, 0
        %v706 = vmul.f32 %v704, %v705
        %v708 = vperm.slane %v553, 0
        %v710 = vmul.f32 %v708, %v388
        %v711 = vadd.f32 %v706, %v710
        %v712 = vmul.f32 %v711, %v573
        %v713 = vpack.c.bf16 %v712, %v712
        %vm714 = vcmask 125952
        %715 = vst.msk [vmem:[%s322] sm:$0xf] %vm714, %v713
        %716 = vrot.lane.b32.xlu0 %v578, 127
        %v717 = vpop.permute.xlu0 %716
        %v718 = vsel %vm579, %v717, 0
        %720 = vmatpush.xpose.msra.mxu0 0.0
        %721 = vmatpush.xpose.msra.mxu0 0.0
        %722 = vmatpush.xpose.msra.mxu0 0.0
        %723 = vmatpush.xpose.msra.mxu0 0.0
        %724 = vmatpush.xpose.msra.mxu0 0.0
        %725 = vmatpush.xpose.msra.mxu0 0.0
        %726 = vmatpush.xpose.msra.mxu0 0.0
        %727 = vmatpush.xpose.msra.mxu0 0.0
        %728 = vmatpush.xpose.msra.mxu0 0.0
        %729 = vmatpush.xpose.msra.mxu0 0.0
        %730 = vmatpush.xpose.msra.mxu0 0.0
        %731 = vmatpush.xpose.msra.mxu0 0.0
        %732 = vmatpush.xpose.msra.mxu0 0.0
        %733 = vmatpush.xpose.msra.mxu0 0.0
        %734 = vmatpush.xpose.msra.mxu0 0.0
        %735 = vmatpush.xpose.msra.mxu0 %v718
        %736 = vmatmul.f32.gmra.mxu0 %v581
        %v737 = vpop.f32.mrf.mxu0
        %v738 = vadd.f32 0.0, %v737
        %739 = vdwg.mxu0
        %740 = vset.pattern.permute.xlu0 5
        %741 = vperm.xlu0 %740, %v548
        %v742 = vpop.permute.xlu0 %741
        %v744 = vadd.f32 %v742, %v738
        %v745 = vsel %vm551, %v744, -1e+30
        %v746 = vsel %vm612, %v745, -inf
        %747 = vmax.xlane.f32.xlu0 %v746
        %v748 = vpop.xlane.xlu0 %747
        %v749 = vsub.f32 %v745, %v748
        %v750 = vmul.f32 %v749, 1.442695
        %v751 = vpow.pop %v750
        %753 = vrot.lane.b32.xlu0 %v619, 112
        %v754 = vpop.permute.xlu0 %753
        %756 = vrot.lane.b32.xlu0 %v620, 112
        %v757 = vpop.permute.xlu0 %756
        %v759 = vsel %vm621, %v754, 0
        %v762 = vsel %vm621, %v757, 0
        %764 = vmatpush.bf16.xpose.msra.mxu0 0
        %765 = vmatpush.bf16.xpose.msra.mxu0 0
        %766 = vmatpush.bf16.xpose.msra.mxu0 0
        %767 = vmatpush.bf16.xpose.msra.mxu0 0
        %768 = vmatpush.bf16.xpose.msra.mxu0 0
        %769 = vmatpush.bf16.xpose.msra.mxu0 0
        %770 = vmatpush.bf16.xpose.msra.mxu0 0
        %771 = vmatpush.bf16.xpose.msra.mxu0 %v762
        %772 = vmatmul.bf16.gmra.mxu0 %v759
        %v773 = vpop.f32.mrf.mxu0
        %v774 = vadd.f32 0.0, %v773
        %v775 = vpop.f32.mrf.mxu0
        %776 = vdwg.mxu0
        %v777 = vmul.f32 %v774, 0.25
        %v778 = vmul.f32 %v777, %v751
        %v779 = vsub.f32 0.0, %v748
        %v780 = vmin.f32 %v779, 80.0
        %v781 = vmul.f32 %v780, 1.442695
        %v782 = vpow.pop %v781
        %v783 = vsel %vm612, %v778, 0.0
        %784 = vadd.xlane.f32.xlu0 %v783
        %v785 = vpop.xlane.xlu0 %784
        %v786 = vand.u32 2147483647, %v785
        %v787 = vmax.f32 %v786, %v782
        %v788 = vadd.f32 %v787, 1e-06
        %v789 = vrcp.pop %v788
        %v790 = vmul.f32 %v778, %v789
        %v791 = vpack.c.bf16 %v790, %v790
        %v792 = vunpack.c.l.b16 %v325
        %v793 = vpack.c.b16 %v792, %v792
        %794 = vrot.lane.b32.xlu0 %v793, 112
        %v795 = vpop.permute.xlu0 %794
        %v797 = vsel %vm612, %v791, 0
        %v800 = vsel %vm659, %v795, 0
        %802 = vmatpush.bf16.msra.mxu0 0
        %803 = vmatpush.bf16.msra.mxu0 0
        %804 = vmatpush.bf16.msra.mxu0 0
        %805 = vmatpush.bf16.msra.mxu0 0
        %806 = vmatpush.bf16.msra.mxu0 0
        %807 = vmatpush.bf16.msra.mxu0 0
        %808 = vmatpush.bf16.msra.mxu0 0
        %809 = vmatpush.bf16.msra.mxu0 %v800
        %810 = vmatmul.bf16.gmra.mxu0 %v797
        %v811 = vpop.f32.mrf.mxu0
        %v812 = vadd.f32 0.0, %v811
        %v813 = vpop.f32.mrf.mxu0
        %814 = vdwg.mxu0
        %v815 = vsel %vm621, %v812, 0.0
        %816 = vadd.xlane.f32.xlu0 %v815
        %v817 = vpop.xlane.xlu0 %816
        %v818 = vmul.f32 %v817, %v685
        %v819 = vsub.f32 %v812, %v818
        %v820 = vmul.f32 %v819, %v819
        %v821 = vsel %vm621, %v820, 0.0
        %822 = vadd.xlane.f32.xlu0 %v821
        %v823 = vpop.xlane.xlu0 %822
        %v824 = vmul.f32 %v823, %v685
        %v825 = vadd.f32 %v824, 1e-05
        %v826 = vrsqrt.pop %v825
        %v827 = vmul.f32 %v826, %v825
        %v828 = vmul.f32 %v827, %v826
        %v829 = vmul.f32 0.5, %v828
        %v830 = vsub.f32 1.5, %v829
        %v831 = vmul.f32 %v826, %v830
        %vm832 = vweird.f32 %v825
        %vm833 = vweird.f32 %v826
        %vm834 = vmor %vm832, %vm833
        %v835 = vsel %vm834, %v826, %v831
        %v836 = vmul.f32 %v819, %v835
        %v837 = vperm.slane %v552, 1
        %v838 = vmul.f32 %v836, %v837
        %840 = vrot.lane.b32.xlu0 %v710, 112
        %v841 = vpop.permute.xlu0 %840
        %v843 = vadd.f32 %v838, %v841
        %845 = vrot.lane.b32.xlu0 %v573, 112
        %v846 = vpop.permute.xlu0 %845
        %v848 = vmul.f32 %v843, %v846
        %v849 = vpack.c.bf16 %v848, %v848
        %851 = vrot.lane.b32.xlu0 %v849, 16
        %v852 = vpop.permute.xlu0 %851
        %vm854 = vcmask 257152
        %855 = vst.msk [vmem:[%s322] sm:$0xf] %vm854, %v852
        %856 = vrot.lane.b32.xlu0 %v578, 126
        %v857 = vpop.permute.xlu0 %856
        %v858 = vsel %vm579, %v857, 0
        %860 = vmatpush.xpose.msra.mxu0 0.0
        %861 = vmatpush.xpose.msra.mxu0 0.0
        %862 = vmatpush.xpose.msra.mxu0 0.0
        %863 = vmatpush.xpose.msra.mxu0 0.0
        %864 = vmatpush.xpose.msra.mxu0 0.0
        %865 = vmatpush.xpose.msra.mxu0 0.0
        %866 = vmatpush.xpose.msra.mxu0 0.0
        %867 = vmatpush.xpose.msra.mxu0 0.0
        %868 = vmatpush.xpose.msra.mxu0 0.0
        %869 = vmatpush.xpose.msra.mxu0 0.0
        %870 = vmatpush.xpose.msra.mxu0 0.0
        %871 = vmatpush.xpose.msra.mxu0 0.0
        %872 = vmatpush.xpose.msra.mxu0 0.0
        %873 = vmatpush.xpose.msra.mxu0 0.0
        %874 = vmatpush.xpose.msra.mxu0 0.0
        %875 = vmatpush.xpose.msra.mxu0 %v858
        %876 = vmatmul.f32.gmra.mxu0 %v581
        %v877 = vpop.f32.mrf.mxu0
        %v878 = vadd.f32 0.0, %v877
        %879 = vdwg.mxu0
        %880 = vset.pattern.permute.xlu0 6
        %881 = vperm.xlu0 %880, %v548
        %v882 = vpop.permute.xlu0 %881
        %v884 = vadd.f32 %v882, %v878
        %v885 = vsel %vm551, %v884, -1e+30
        %v886 = vsel %vm612, %v885, -inf
        %887 = vmax.xlane.f32.xlu0 %v886
        %v888 = vpop.xlane.xlu0 %887
        %v889 = vsub.f32 %v885, %v888
        %v890 = vmul.f32 %v889, 1.442695
        %v891 = vpow.pop %v890
        %892 = vrot.lane.b32.xlu0 %v619, 96
        %v893 = vpop.permute.xlu0 %892
        %894 = vrot.lane.b32.xlu0 %v620, 96
        %v895 = vpop.permute.xlu0 %894
        %v897 = vsel %vm621, %v893, 0
        %v900 = vsel %vm621, %v895, 0
        %902 = vmatpush.bf16.xpose.msra.mxu0 0
        %903 = vmatpush.bf16.xpose.msra.mxu0 0
        %904 = vmatpush.bf16.xpose.msra.mxu0 0
        %905 = vmatpush.bf16.xpose.msra.mxu0 0
        %906 = vmatpush.bf16.xpose.msra.mxu0 0
        %907 = vmatpush.bf16.xpose.msra.mxu0 0
        %908 = vmatpush.bf16.xpose.msra.mxu0 0
        %909 = vmatpush.bf16.xpose.msra.mxu0 %v900
        %910 = vmatmul.bf16.gmra.mxu0 %v897
        %v911 = vpop.f32.mrf.mxu0
        %v912 = vadd.f32 0.0, %v911
        %v913 = vpop.f32.mrf.mxu0
        %914 = vdwg.mxu0
        %v915 = vmul.f32 %v912, 0.25
        %v916 = vmul.f32 %v915, %v891
        %v917 = vsub.f32 0.0, %v888
        %v918 = vmin.f32 %v917, 80.0
        %v919 = vmul.f32 %v918, 1.442695
        %v920 = vpow.pop %v919
        %v921 = vsel %vm612, %v916, 0.0
        %922 = vadd.xlane.f32.xlu0 %v921
        %v923 = vpop.xlane.xlu0 %922
        %v924 = vand.u32 2147483647, %v923
        %v925 = vmax.f32 %v924, %v920
        %v926 = vadd.f32 %v925, 1e-06
        %v927 = vrcp.pop %v926
        %v928 = vmul.f32 %v916, %v927
        %v929 = vpack.c.bf16 %v928, %v928
        %930 = vrot.lane.b32.xlu0 %v793, 96
        %v931 = vpop.permute.xlu0 %930
        %v933 = vsel %vm612, %v929, 0
        %v936 = vsel %vm659, %v931, 0
        %938 = vmatpush.bf16.msra.mxu0 0
        %939 = vmatpush.bf16.msra.mxu0 0
        %940 = vmatpush.bf16.msra.mxu0 0
        %941 = vmatpush.bf16.msra.mxu0 0
        %942 = vmatpush.bf16.msra.mxu0 0
        %943 = vmatpush.bf16.msra.mxu0 0
        %944 = vmatpush.bf16.msra.mxu0 0
        %945 = vmatpush.bf16.msra.mxu0 %v936
        %946 = vmatmul.bf16.gmra.mxu0 %v933
        %v947 = vpop.f32.mrf.mxu0
        %v948 = vadd.f32 0.0, %v947
        %v949 = vpop.f32.mrf.mxu0
        %950 = vdwg.mxu0
        %v951 = vsel %vm621, %v948, 0.0
        %952 = vadd.xlane.f32.xlu0 %v951
        %v953 = vpop.xlane.xlu0 %952
        %v954 = vmul.f32 %v953, %v685
        %v955 = vsub.f32 %v948, %v954
        %v956 = vmul.f32 %v955, %v955
        %v957 = vsel %vm621, %v956, 0.0
        %958 = vadd.xlane.f32.xlu0 %v957
        %v959 = vpop.xlane.xlu0 %958
        %v960 = vmul.f32 %v959, %v685
        %v961 = vadd.f32 %v960, 1e-05
        %v962 = vrsqrt.pop %v961
        %v963 = vmul.f32 %v962, %v961
        %v964 = vmul.f32 %v963, %v962
        %v965 = vmul.f32 0.5, %v964
        %v966 = vsub.f32 1.5, %v965
        %v967 = vmul.f32 %v962, %v966
        %vm968 = vweird.f32 %v961
        %vm969 = vweird.f32 %v962
        %vm970 = vmor %vm968, %vm969
        %v971 = vsel %vm970, %v962, %v967
        %v972 = vmul.f32 %v955, %v971
        %v973 = vperm.slane %v552, 2
        %v974 = vmul.f32 %v972, %v973
        %975 = vrot.lane.b32.xlu0 %v710, 96
        %v976 = vpop.permute.xlu0 %975
        %v978 = vadd.f32 %v974, %v976
        %979 = vrot.lane.b32.xlu0 %v573, 96
        %v980 = vpop.permute.xlu0 %979
        %v982 = vmul.f32 %v978, %v980
        %v983 = vpack.c.bf16 %v982, %v982
        %985 = vrot.lane.b32.xlu0 %v983, 32
        %v986 = vpop.permute.xlu0 %985
        %vm988 = vcmask 388352
        %989 = vst.msk [vmem:[%s322] sm:$0xf] %vm988, %v986
        %990 = vrot.lane.b32.xlu0 %v578, 125
        %v991 = vpop.permute.xlu0 %990
        %v992 = vsel %vm579, %v991, 0
        %994 = vmatpush.xpose.msra.mxu0 0.0
        %995 = vmatpush.xpose.msra.mxu0 0.0
        %996 = vmatpush.xpose.msra.mxu0 0.0
        %997 = vmatpush.xpose.msra.mxu0 0.0
        %998 = vmatpush.xpose.msra.mxu0 0.0
        %999 = vmatpush.xpose.msra.mxu0 0.0
        %1000 = vmatpush.xpose.msra.mxu0 0.0
        %1001 = vmatpush.xpose.msra.mxu0 0.0
        %1002 = vmatpush.xpose.msra.mxu0 0.0
        %1003 = vmatpush.xpose.msra.mxu0 0.0
        %1004 = vmatpush.xpose.msra.mxu0 0.0
        %1005 = vmatpush.xpose.msra.mxu0 0.0
        %1006 = vmatpush.xpose.msra.mxu0 0.0
        %1007 = vmatpush.xpose.msra.mxu0 0.0
        %1008 = vmatpush.xpose.msra.mxu0 0.0
        %1009 = vmatpush.xpose.msra.mxu0 %v992
        %1010 = vmatmul.f32.gmra.mxu0 %v581
        %v1011 = vpop.f32.mrf.mxu0
        %v1012 = vadd.f32 0.0, %v1011
        %1013 = vdwg.mxu0
        %1014 = vset.pattern.permute.xlu0 7
        %1015 = vperm.xlu0 %1014, %v548
        %v1016 = vpop.permute.xlu0 %1015
        %v1018 = vadd.f32 %v1016, %v1012
        %v1019 = vsel %vm551, %v1018, -1e+30
        %v1020 = vsel %vm612, %v1019, -inf
        %1021 = vmax.xlane.f32.xlu0 %v1020
        %v1022 = vpop.xlane.xlu0 %1021
        %v1023 = vsub.f32 %v1019, %v1022
        %v1024 = vmul.f32 %v1023, 1.442695
        %v1025 = vpow.pop %v1024
        %1026 = vrot.lane.b32.xlu0 %v619, 80
        %v1027 = vpop.permute.xlu0 %1026
        %1028 = vrot.lane.b32.xlu0 %v620, 80
        %v1029 = vpop.permute.xlu0 %1028
        %v1031 = vsel %vm621, %v1027, 0
        %v1034 = vsel %vm621, %v1029, 0
        %1036 = vmatpush.bf16.xpose.msra.mxu0 0
        %1037 = vmatpush.bf16.xpose.msra.mxu0 0
        %1038 = vmatpush.bf16.xpose.msra.mxu0 0
        %1039 = vmatpush.bf16.xpose.msra.mxu0 0
        %1040 = vmatpush.bf16.xpose.msra.mxu0 0
        %1041 = vmatpush.bf16.xpose.msra.mxu0 0
        %1042 = vmatpush.bf16.xpose.msra.mxu0 0
        %1043 = vmatpush.bf16.xpose.msra.mxu0 %v1034
        %1044 = vmatmul.bf16.gmra.mxu0 %v1031
        %v1045 = vpop.f32.mrf.mxu0
        %v1046 = vadd.f32 0.0, %v1045
        %v1047 = vpop.f32.mrf.mxu0
        %1048 = vdwg.mxu0
        %v1049 = vmul.f32 %v1046, 0.25
        %v1050 = vmul.f32 %v1049, %v1025
        %v1051 = vsub.f32 0.0, %v1022
        %v1052 = vmin.f32 %v1051, 80.0
        %v1053 = vmul.f32 %v1052, 1.442695
        %v1054 = vpow.pop %v1053
        %v1055 = vsel %vm612, %v1050, 0.0
        %1056 = vadd.xlane.f32.xlu0 %v1055
        %v1057 = vpop.xlane.xlu0 %1056
        %v1058 = vand.u32 2147483647, %v1057
        %v1059 = vmax.f32 %v1058, %v1054
        %v1060 = vadd.f32 %v1059, 1e-06
        %v1061 = vrcp.pop %v1060
        %v1062 = vmul.f32 %v1050, %v1061
        %v1063 = vpack.c.bf16 %v1062, %v1062
        %1064 = vrot.lane.b32.xlu0 %v793, 80
        %v1065 = vpop.permute.xlu0 %1064
        %v1067 = vsel %vm612, %v1063, 0
        %v1070 = vsel %vm659, %v1065, 0
        %1072 = vmatpush.bf16.msra.mxu0 0
        %1073 = vmatpush.bf16.msra.mxu0 0
        %1074 = vmatpush.bf16.msra.mxu0 0
        %1075 = vmatpush.bf16.msra.mxu0 0
        %1076 = vmatpush.bf16.msra.mxu0 0
        %1077 = vmatpush.bf16.msra.mxu0 0
        %1078 = vmatpush.bf16.msra.mxu0 0
        %1079 = vmatpush.bf16.msra.mxu0 %v1070
        %1080 = vmatmul.bf16.gmra.mxu0 %v1067
        %v1081 = vpop.f32.mrf.mxu0
        %v1082 = vadd.f32 0.0, %v1081
        %v1083 = vpop.f32.mrf.mxu0
        %1084 = vdwg.mxu0
        %v1085 = vsel %vm621, %v1082, 0.0
        %1086 = vadd.xlane.f32.xlu0 %v1085
        %v1087 = vpop.xlane.xlu0 %1086
        %v1088 = vmul.f32 %v1087, %v685
        %v1089 = vsub.f32 %v1082, %v1088
        %v1090 = vmul.f32 %v1089, %v1089
        %v1091 = vsel %vm621, %v1090, 0.0
        %1092 = vadd.xlane.f32.xlu0 %v1091
        %v1093 = vpop.xlane.xlu0 %1092
        %v1094 = vmul.f32 %v1093, %v685
        %v1095 = vadd.f32 %v1094, 1e-05
        %v1096 = vrsqrt.pop %v1095
        %v1097 = vmul.f32 %v1096, %v1095
        %v1098 = vmul.f32 %v1097, %v1096
        %v1099 = vmul.f32 0.5, %v1098
        %v1100 = vsub.f32 1.5, %v1099
        %v1101 = vmul.f32 %v1096, %v1100
        %vm1102 = vweird.f32 %v1095
        %vm1103 = vweird.f32 %v1096
        %vm1104 = vmor %vm1102, %vm1103
        %v1105 = vsel %vm1104, %v1096, %v1101
        %v1106 = vmul.f32 %v1089, %v1105
        %v1107 = vperm.slane %v552, 3
        %v1108 = vmul.f32 %v1106, %v1107
        %1109 = vrot.lane.b32.xlu0 %v710, 80
        %v1110 = vpop.permute.xlu0 %1109
        %v1112 = vadd.f32 %v1108, %v1110
        %1113 = vrot.lane.b32.xlu0 %v573, 80
        %v1114 = vpop.permute.xlu0 %1113
        %v1116 = vmul.f32 %v1112, %v1114
        %v1117 = vpack.c.bf16 %v1116, %v1116
        %1119 = vrot.lane.b32.xlu0 %v1117, 48
        %v1120 = vpop.permute.xlu0 %1119
        %vm1122 = vcmask 519552
        %1123 = vst.msk [vmem:[%s322] sm:$0xf] %vm1122, %v1120
        %p1124 = scmp.lt.s32.totalorder %s20, 1
        %s1125 = scalar_select %p1124, %s20, 1
        %s1126 = smul.addr %s1125, 4
        %s1127 = scalar_lea.vmem %s7, %s1126
        // Predicated region
        $region61: #{xlstm_forward.13} parent=47 // pred_check
          %p1128 = pneg %p190
        $region62: #{xlstm_forward.13} parent=47 // pred_check_branch
          %1130 = sbr.rel (%p1128) target = $region64
        $region63: #{xlstm_forward.13} parent=47 // pred_region
          _
        $region64: #{xlstm_forward.13} parent=47 // pred_fallthru
          _
      $region48: #{xlstm_forward.13} parent=5 // pred_fallthru
        _
      %p1131 = scmp.le.s32.totalorder 2, %s15
      // Predicated region
      $region65: #{xlstm_forward.13} parent=5 // pred_check
        %p1132 = pneg %p1131
      $region66: #{xlstm_forward.13} parent=5 // pred_check_branch
        %1134 = sbr.rel (%p1132) target = $region68
      $region67: #{xlstm_forward.13} parent=5 // pred_region
        %s1135 = ssub.s32 %s15, 2
        // Predicated region
        $region69: #{xlstm_forward.13} parent=67 // pred_check
          %p1136 = pneg %p196
        $region70: #{xlstm_forward.13} parent=67 // pred_check_branch
          %1138 = sbr.rel (%p1136) target = $region72
        $region71: #{xlstm_forward.13} parent=67 // pred_region
          %p1139 = scmp.lt.s32.totalorder %s21, 1
          %s1140 = scalar_select %p1139, %s21, 1
          %s1141 = smul.addr %s1140, 4
          %s1142 = scalar_lea.vmem %s7, %s1141
        $region72: #{xlstm_forward.13} parent=67 // pred_fallthru
          _
      $region68: #{xlstm_forward.13} parent=5 // pred_fallthru
        _
    $region6: #{xlstm_forward.13} parent=1 // loop_footer
      %s19 = sadd.s32 1, %s15
    $region7: #{xlstm_forward.13} parent=1 // loop_footer_branch
      %14 = sbr.rel target = $region3
    $region8: #{xlstm_forward.13} parent=1 // loop_exit
      _
    %1143 = vsyncpa [#allocation3], 1
    %s1144 = scalar_lea.sflag [#allocation3], 1
    %1145 = vsyncpa %s1144, 1
    %1146 = vsyncpa [#allocation5], 1

</llo_original>
